<compile_context>
chip_gen: v6e
topology: v6e:2x2x1
jax: 0.10.0
libtpu: 0.0.40
codegen_flags: <defaults>
</compile_context>

<pallas_src>
import functools

import jax
import jax.numpy as jnp
import numpy as np
from jax.experimental import pallas as pl
from jax.experimental.pallas import tpu as pltpu


def _mha_kernel(x_ref, wqkv_ref, wp_ref, bp_ref, o_ref, heads_ref, *,
                n_heads, head_size):
    # x_ref:     (Bb, T, C)  f32  -- Bb batch rows per grid step
    # wqkv_ref:  (C, 3C)     bf16 -- fused [Q|K|V] weights; Q pre-scaled by 1/sqrt(hs)
    # wp_ref:    (C, C)      bf16 -- output projection weight (already transposed)
    # bp_ref:    (1, C)      f32  -- output projection bias
    # o_ref:     (Bb, T, C)  bf16
    # heads_ref: (Bb, T, C)  bf16 VMEM scratch holding the concatenated head outputs
    Bb, T, C = x_ref.shape
    hs = head_size
    neg = jnp.float32(-1e30)                         # finite "-inf": no inf-inf NaN

    # Fused QKV projection: one wide MXU matmul with M = Bb*T rows.  The bf16
    # cast happens in-kernel on the VPU (hidden under the MXU), so the wrapper
    # never round-trips a bf16 copy of x through HBM.
    x2 = x_ref[...].reshape(Bb * T, C).astype(jnp.bfloat16)
    qkv = jnp.dot(x2, wqkv_ref[...], preferred_element_type=jnp.float32)  # (Bb*T, 3C)
    qkv = qkv.reshape(Bb, T, 3 * C)

    # Shared causal mask: row i attends to cols <= i (broadcast over the Bb block).
    row = jax.lax.broadcasted_iota(jnp.int32, (T, T), 0)
    col = jax.lax.broadcasted_iota(jnp.int32, (T, T), 1)
    causal = (row >= col)[None]                                           # (1, T, T)

    for h in range(n_heads):                         # static, small -> unrolled
        lo = h * hs
        # 1/sqrt(hs) is already folded into the Q weights.
        q = qkv[:, :, lo:lo + hs].astype(jnp.bfloat16)                    # (Bb, T, hs)
        k = qkv[:, :, C + lo:C + lo + hs].astype(jnp.bfloat16)            # (Bb, T, hs)
        v = qkv[:, :, 2 * C + lo:2 * C + lo + hs].astype(jnp.bfloat16)    # (Bb, T, hs)

        # Scores: contract the last dims directly -- no materialized k.T.
        s = jnp.einsum('bqd,bkd->bqk', q, k,
                       preferred_element_type=jnp.float32)                # (Bb, T, T)
        s = jnp.where(causal, s, neg)

        # Numerically stable softmax; all elementwise math stays f32 (v5e-safe).
        m = jnp.max(s, axis=-1, keepdims=True)
        p = jnp.exp(s - m)
        p = p * pl.reciprocal(jnp.sum(p, axis=-1, keepdims=True), approx=True)

        head = jnp.einsum('bqk,bkd->bqd', p.astype(jnp.bfloat16), v,
                          preferred_element_type=jnp.float32)             # (Bb, T, hs)
        # Write the head output at its lane offset: replaces H thin (K=hs)
        # projection matmuls with ONE K=C matmul after the loop.
        heads_ref[:, :, lo:lo + hs] = head.astype(jnp.bfloat16)

    # Single output projection over all heads and all Bb*T rows.
    heads = heads_ref[...].reshape(Bb * T, C)
    out = jnp.dot(heads, wp_ref[...], preferred_element_type=jnp.float32)  # (Bb*T, C)
    out = out + bp_ref[...]
    o_ref[...] = out.reshape(Bb, T, C).astype(o_ref.dtype)


def prepare_mha_weights(wq, wk, wv, w_proj_t, b_proj):
    """One-time weight fusion; cache the result across forward calls.

    wq/wk/wv: (H, C, hs) with y = x @ w[h]; w_proj_t: (C, C) = W_proj.T; b_proj: (C,).
    Returns (wqkv bf16 (C, 3C) with 1/sqrt(hs) folded into the Q third,
             wp bf16 (C, C), bias f32 (1, C)).
    """
    H, C, hs = wq.shape
    scale = jnp.float32(1.0 / (hs ** 0.5))

    def fuse(w):
        return jnp.transpose(w, (1, 0, 2)).reshape(C, H * hs)

    wqkv = jnp.concatenate([fuse(wq) * scale, fuse(wk), fuse(wv)], axis=1)
    return (wqkv.astype(jnp.bfloat16),
            w_proj_t.astype(jnp.bfloat16),
            b_proj.reshape(1, C).astype(jnp.float32))


def multi_head_attention(x, wqkv, wp, bp, *, n_heads, block_batch=None):
    """x: (B, T, C) f32; wqkv/wp/bp: outputs of prepare_mha_weights."""
    B, T, C = x.shape
    assert wqkv.shape == (C, 3 * C)
    assert C % n_heads == 0
    hs = C // n_heads

    # Bb batch rows per grid step: wider MXU matmuls (M = Bb*T), while keeping
    # grid = B/Bb >= 2 parallel steps so v7x's two TensorCores both get work.
    if block_batch is None:
        block_batch = B // 2 if (B >= 2 and B % 2 == 0) else B
    Bb = block_batch
    assert B % Bb == 0

    kernel = functools.partial(_mha_kernel, n_heads=n_heads, head_size=hs)

    return pl.pallas_call(
        kernel,
        out_shape=jax.ShapeDtypeStruct((B, T, C), jnp.bfloat16),
        grid_spec=pltpu.PrefetchScalarGridSpec(
            num_scalar_prefetch=0,
            grid=(B // Bb,),
            in_specs=[
                pl.BlockSpec((Bb, T, C), lambda b: (b, 0, 0)),   # activations (f32)
                pl.BlockSpec((C, 3 * C), lambda b: (0, 0)),      # fused qkv weight (resident)
                pl.BlockSpec((C, C), lambda b: (0, 0)),          # proj weight^T (resident)
                pl.BlockSpec((1, C), lambda b: (0, 0)),          # proj bias (resident)
            ],
            out_specs=pl.BlockSpec((Bb, T, C), lambda b: (b, 0, 0)),
            scratch_shapes=[pltpu.VMEM((Bb, T, C), jnp.bfloat16)],
        ),
        compiler_params=pltpu.CompilerParams(
            dimension_semantics=("parallel",),    # batch-block axis shards across TCs
        ),
    )(x, wqkv, wp, bp)


def _reference(x, wq, wk, wv, w_proj_t, b_proj):
    """Pure-JAX f32 reference mirroring the PyTorch module (dropout = 0)."""
    B, T, C = x.shape
    H, _, hs = wq.shape
    scale = 1.0 / (hs ** 0.5)
    outs = []
    for h in range(H):
        q = x @ wq[h]
        k = x @ wk[h]
        v = x @ wv[h]
        wei = (q @ jnp.swapaxes(k, -2, -1)) * scale
        mask = jnp.tril(jnp.ones((T, T), dtype=bool))
        wei = jnp.where(mask, wei, -jnp.inf)
        wei = jax.nn.softmax(wei, axis=-1)
        outs.append(wei @ v)
    cat = jnp.concatenate(outs, axis=-1)
    return cat @ w_proj_t + b_proj


if __name__ == "__main__":
    # nanoGPT-ish toy config: n_embd=128, n_heads=4 -> head_size=32, T=16.
    # B=8 gives grid=(2,) with Bb=4 batch rows per step -> M = Bb*T = 64 rows per
    # MXU matmul and two parallel steps for v7x's TensorCores.
    B, T, C, H = 8, 16, 128, 4
    hs = C // H

    key = jax.random.PRNGKey(0)
    kx, kq, kk, kv, kp, kb = jax.random.split(key, 6)

    x = jax.random.normal(kx, (B, T, C), dtype=jnp.float32)
    # Stacked per-head weights, already transposed to (H, C, hs) so y = x @ W.
    wq = jax.random.normal(kq, (H, C, hs), dtype=jnp.float32) * 0.05
    wk = jax.random.normal(kk, (H, C, hs), dtype=jnp.float32) * 0.05
    wv = jax.random.normal(kv, (H, C, hs), dtype=jnp.float32) * 0.05
    w_proj_t = jax.random.normal(kp, (C, C), dtype=jnp.float32) * 0.05
    b_proj = jax.random.normal(kb, (C,), dtype=jnp.float32) * 0.05

    # One-time weight fusion (cached across forward calls in a real model).
    wqkv, wp, bp = prepare_mha_weights(wq, wk, wv, w_proj_t, b_proj)

    out = multi_head_attention(x, wqkv, wp, bp, n_heads=H)
    out = jax.block_until_ready(out)

    ref = _reference(x, wq, wk, wv, w_proj_t, b_proj)
    # Tolerance accounts for bf16 MXU operands / bf16 output (f32 accumulation)
    # + approx reciprocal in the softmax.
    np.testing.assert_allclose(np.asarray(out.astype(jnp.float32)),
                               np.asarray(ref), rtol=2e-2, atol=2e-2)

    print("KERNEL_OK")
</pallas_src>

<mosaic_0001>
module attributes {stable_mosaic.version = 11 : i64} {
  func.func @_mha_kernel(%arg0: i32, %arg1: memref<4x16x128xf32, #tpu.memory_space<vmem>>, %arg2: memref<128x384xbf16, #tpu.memory_space<vmem>>, %arg3: memref<128x128xbf16, #tpu.memory_space<vmem>>, %arg4: memref<1x128xf32, #tpu.memory_space<vmem>>, %arg5: memref<4x16x128xbf16, #tpu.memory_space<vmem>>, %arg6: memref<4x16x128xbf16, #tpu.memory_space<vmem>>) attributes {dimension_semantics = [#tpu.dimension_semantics<parallel>], iteration_bounds = array<i64: 2>, scalar_prefetch = 0 : i64, scratch_operands = 1 : i64, tpu.core_type = #tpu.core_type<tc>, window_params = [{transform_indices = @transform_0, window_bounds = array<i64: 4, 16, 128>}, {pipeline_mode = #tpu.pipeline_mode<synchronous>, transform_indices = @transform_1, window_bounds = array<i64: 128, 384>}, {pipeline_mode = #tpu.pipeline_mode<synchronous>, transform_indices = @transform_2, window_bounds = array<i64: 128, 128>}, {pipeline_mode = #tpu.pipeline_mode<synchronous>, transform_indices = @transform_3, window_bounds = array<i64: 1, 128>}, {transform_indices = @transform_4, window_bounds = array<i64: 4, 16, 128>}]} {
    %c0 = arith.constant 0 : index
    %c0_0 = arith.constant 0 : index
    %c0_1 = arith.constant 0 : index
    %0 = vector.load %arg1[%c0, %c0_0, %c0_1] : memref<4x16x128xf32, #tpu.memory_space<vmem>>, vector<4x16x128xf32>
    %1 = vector.shape_cast %0 : vector<4x16x128xf32> to vector<64x128xf32>
    %2 = arith.truncf %1 : vector<64x128xf32> to vector<64x128xbf16>
    %c0_2 = arith.constant 0 : index
    %c0_3 = arith.constant 0 : index
    %3 = vector.load %arg2[%c0_2, %c0_3] : memref<128x384xbf16, #tpu.memory_space<vmem>>, vector<128x384xbf16>
    %cst = arith.constant dense<0.000000e+00> : vector<64x384xf32>
    %4 = tpu.matmul %2, %3, %cst {dimension_numbers = #tpu.dot_dimension_numbers<[1], [0], [0], [1], [0, 0, 1, 1], [], []>} : vector<64x128xbf16>, vector<128x384xbf16>, vector<64x384xf32> -> vector<64x384xf32>
    %5 = vector.shape_cast %4 : vector<64x384xf32> to vector<4x16x384xf32>
    %6 = tpu.iota {dimensions = array<i32: 0>} : vector<16x16xi32>
    %7 = tpu.iota {dimensions = array<i32: 1>} : vector<16x16xi32>
    %8 = arith.cmpi sge, %6, %7 : vector<16x16xi32>
    %9 = vector.shape_cast %8 : vector<16x16xi1> to vector<1x16x16xi1>
    %10 = vector.extract_strided_slice %5 {offsets = [0, 0, 0], sizes = [4, 16, 32], strides = [1, 1, 1]} : vector<4x16x384xf32> to vector<4x16x32xf32>
    %11 = arith.truncf %10 : vector<4x16x32xf32> to vector<4x16x32xbf16>
    %12 = vector.extract_strided_slice %5 {offsets = [0, 0, 128], sizes = [4, 16, 32], strides = [1, 1, 1]} : vector<4x16x384xf32> to vector<4x16x32xf32>
    %13 = arith.truncf %12 : vector<4x16x32xf32> to vector<4x16x32xbf16>
    %14 = vector.extract_strided_slice %5 {offsets = [0, 0, 256], sizes = [4, 16, 32], strides = [1, 1, 1]} : vector<4x16x384xf32> to vector<4x16x32xf32>
    %15 = arith.truncf %14 : vector<4x16x32xf32> to vector<4x16x32xbf16>
    "tpu.trace_start"() <{level = 10 : i32, message = "bqd,bkd->bqk"}> : () -> ()
    %cst_4 = arith.constant dense<0.000000e+00> : vector<4x16x16xf32>
    %16 = tpu.matmul %11, %13, %cst_4 {dimension_numbers = #tpu.dot_dimension_numbers<[2], [2], [1], [1], [0, 0, 0, 1, 1, 1], [0], [0]>} : vector<4x16x32xbf16>, vector<4x16x32xbf16>, vector<4x16x16xf32> -> vector<4x16x16xf32>
    %cst_5 = arith.constant -1.000000e+30 : f32
    "tpu.trace_stop"() : () -> ()
    %17 = vector.shape_cast %9 : vector<1x16x16xi1> to vector<1x16x16xi1>
    %18 = vector.broadcast %17 : vector<1x16x16xi1> to vector<4x16x16xi1>
    %19 = vector.broadcast %cst_5 : f32 to vector<4x16x16xf32>
    %20 = arith.select %18, %16, %19 : vector<4x16x16xi1>, vector<4x16x16xf32>
    %cst_6 = arith.constant dense<0xFF800000> : vector<4x16xf32>
    %21 = vector.multi_reduction <maximumf>, %20, %cst_6 [2] : vector<4x16x16xf32> to vector<4x16xf32>
    %22 = vector.shape_cast %21 : vector<4x16xf32> to vector<4x16x1xf32>
    %23 = vector.broadcast %22 : vector<4x16x1xf32> to vector<4x16x16xf32>
    %24 = arith.subf %20, %23 : vector<4x16x16xf32>
    %25 = math.exp %24 : vector<4x16x16xf32>
    %cst_7 = arith.constant dense<0.000000e+00> : vector<4x16xf32>
    %26 = vector.multi_reduction <add>, %25, %cst_7 [2] : vector<4x16x16xf32> to vector<4x16xf32>
    %27 = vector.shape_cast %26 : vector<4x16xf32> to vector<4x16x1xf32>
    %28 = tpu.reciprocal %27 {approx = true} : vector<4x16x1xf32> -> vector<4x16x1xf32>
    %29 = vector.broadcast %28 : vector<4x16x1xf32> to vector<4x16x16xf32>
    %30 = arith.mulf %25, %29 : vector<4x16x16xf32>
    %31 = arith.truncf %30 : vector<4x16x16xf32> to vector<4x16x16xbf16>
    "tpu.trace_start"() <{level = 10 : i32, message = "bqk,bkd->bqd"}> : () -> ()
    %cst_8 = arith.constant dense<0.000000e+00> : vector<4x16x32xf32>
    %32 = tpu.matmul %31, %15, %cst_8 {dimension_numbers = #tpu.dot_dimension_numbers<[2], [1], [1], [2], [0, 0, 0, 1, 1, 2], [0], [0]>} : vector<4x16x16xbf16>, vector<4x16x32xbf16>, vector<4x16x32xf32> -> vector<4x16x32xf32>
    "tpu.trace_stop"() : () -> ()
    %33 = arith.truncf %32 : vector<4x16x32xf32> to vector<4x16x32xbf16>
    %c0_9 = arith.constant 0 : index
    %c0_10 = arith.constant 0 : index
    %c0_11 = arith.constant 0 : index
    %34 = vector.load %arg6[%c0_9, %c0_10, %c0_11] : memref<4x16x128xbf16, #tpu.memory_space<vmem>>, vector<4x16x32xbf16>
    tpu.vector_store %arg6[%c0_9, %c0_10, %c0_11], %33 {strides = array<i32>} : memref<4x16x128xbf16, #tpu.memory_space<vmem>>, vector<4x16x32xbf16>,
    %35 = vector.extract_strided_slice %5 {offsets = [0, 0, 32], sizes = [4, 16, 32], strides = [1, 1, 1]} : vector<4x16x384xf32> to vector<4x16x32xf32>
    %36 = arith.truncf %35 : vector<4x16x32xf32> to vector<4x16x32xbf16>
    %37 = vector.extract_strided_slice %5 {offsets = [0, 0, 160], sizes = [4, 16, 32], strides = [1, 1, 1]} : vector<4x16x384xf32> to vector<4x16x32xf32>
    %38 = arith.truncf %37 : vector<4x16x32xf32> to vector<4x16x32xbf16>
    %39 = vector.extract_strided_slice %5 {offsets = [0, 0, 288], sizes = [4, 16, 32], strides = [1, 1, 1]} : vector<4x16x384xf32> to vector<4x16x32xf32>
    %40 = arith.truncf %39 : vector<4x16x32xf32> to vector<4x16x32xbf16>
    "tpu.trace_start"() <{level = 10 : i32, message = "bqd,bkd->bqk"}> : () -> ()
    %cst_12 = arith.constant dense<0.000000e+00> : vector<4x16x16xf32>
    %41 = tpu.matmul %36, %38, %cst_12 {dimension_numbers = #tpu.dot_dimension_numbers<[2], [2], [1], [1], [0, 0, 0, 1, 1, 1], [0], [0]>} : vector<4x16x32xbf16>, vector<4x16x32xbf16>, vector<4x16x16xf32> -> vector<4x16x16xf32>
    %cst_13 = arith.constant -1.000000e+30 : f32
    "tpu.trace_stop"() : () -> ()
    %42 = vector.shape_cast %9 : vector<1x16x16xi1> to vector<1x16x16xi1>
    %43 = vector.broadcast %42 : vector<1x16x16xi1> to vector<4x16x16xi1>
    %44 = vector.broadcast %cst_13 : f32 to vector<4x16x16xf32>
    %45 = arith.select %43, %41, %44 : vector<4x16x16xi1>, vector<4x16x16xf32>
    %cst_14 = arith.constant dense<0xFF800000> : vector<4x16xf32>
    %46 = vector.multi_reduction <maximumf>, %45, %cst_14 [2] : vector<4x16x16xf32> to vector<4x16xf32>
    %47 = vector.shape_cast %46 : vector<4x16xf32> to vector<4x16x1xf32>
    %48 = vector.broadcast %47 : vector<4x16x1xf32> to vector<4x16x16xf32>
    %49 = arith.subf %45, %48 : vector<4x16x16xf32>
    %50 = math.exp %49 : vector<4x16x16xf32>
    %cst_15 = arith.constant dense<0.000000e+00> : vector<4x16xf32>
    %51 = vector.multi_reduction <add>, %50, %cst_15 [2] : vector<4x16x16xf32> to vector<4x16xf32>
    %52 = vector.shape_cast %51 : vector<4x16xf32> to vector<4x16x1xf32>
    %53 = tpu.reciprocal %52 {approx = true} : vector<4x16x1xf32> -> vector<4x16x1xf32>
    %54 = vector.broadcast %53 : vector<4x16x1xf32> to vector<4x16x16xf32>
    %55 = arith.mulf %50, %54 : vector<4x16x16xf32>
    %56 = arith.truncf %55 : vector<4x16x16xf32> to vector<4x16x16xbf16>
    "tpu.trace_start"() <{level = 10 : i32, message = "bqk,bkd->bqd"}> : () -> ()
    %cst_16 = arith.constant dense<0.000000e+00> : vector<4x16x32xf32>
    %57 = tpu.matmul %56, %40, %cst_16 {dimension_numbers = #tpu.dot_dimension_numbers<[2], [1], [1], [2], [0, 0, 0, 1, 1, 2], [0], [0]>} : vector<4x16x16xbf16>, vector<4x16x32xbf16>, vector<4x16x32xf32> -> vector<4x16x32xf32>
    "tpu.trace_stop"() : () -> ()
    %58 = arith.truncf %57 : vector<4x16x32xf32> to vector<4x16x32xbf16>
    %c0_17 = arith.constant 0 : index
    %c0_18 = arith.constant 0 : index
    %c32 = arith.constant 32 : index
    %59 = vector.load %arg6[%c0_17, %c0_18, %c32] : memref<4x16x128xbf16, #tpu.memory_space<vmem>>, vector<4x16x32xbf16>
    tpu.vector_store %arg6[%c0_17, %c0_18, %c32], %58 {strides = array<i32>} : memref<4x16x128xbf16, #tpu.memory_space<vmem>>, vector<4x16x32xbf16>,
    %60 = vector.extract_strided_slice %5 {offsets = [0, 0, 64], sizes = [4, 16, 32], strides = [1, 1, 1]} : vector<4x16x384xf32> to vector<4x16x32xf32>
    %61 = arith.truncf %60 : vector<4x16x32xf32> to vector<4x16x32xbf16>
    %62 = vector.extract_strided_slice %5 {offsets = [0, 0, 192], sizes = [4, 16, 32], strides = [1, 1, 1]} : vector<4x16x384xf32> to vector<4x16x32xf32>
    %63 = arith.truncf %62 : vector<4x16x32xf32> to vector<4x16x32xbf16>
    %64 = vector.extract_strided_slice %5 {offsets = [0, 0, 320], sizes = [4, 16, 32], strides = [1, 1, 1]} : vector<4x16x384xf32> to vector<4x16x32xf32>
    %65 = arith.truncf %64 : vector<4x16x32xf32> to vector<4x16x32xbf16>
    "tpu.trace_start"() <{level = 10 : i32, message = "bqd,bkd->bqk"}> : () -> ()
    %cst_19 = arith.constant dense<0.000000e+00> : vector<4x16x16xf32>
    %66 = tpu.matmul %61, %63, %cst_19 {dimension_numbers = #tpu.dot_dimension_numbers<[2], [2], [1], [1], [0, 0, 0, 1, 1, 1], [0], [0]>} : vector<4x16x32xbf16>, vector<4x16x32xbf16>, vector<4x16x16xf32> -> vector<4x16x16xf32>
    %cst_20 = arith.constant -1.000000e+30 : f32
    "tpu.trace_stop"() : () -> ()
    %67 = vector.shape_cast %9 : vector<1x16x16xi1> to vector<1x16x16xi1>
    %68 = vector.broadcast %67 : vector<1x16x16xi1> to vector<4x16x16xi1>
    %69 = vector.broadcast %cst_20 : f32 to vector<4x16x16xf32>
    %70 = arith.select %68, %66, %69 : vector<4x16x16xi1>, vector<4x16x16xf32>
    %cst_21 = arith.constant dense<0xFF800000> : vector<4x16xf32>
    %71 = vector.multi_reduction <maximumf>, %70, %cst_21 [2] : vector<4x16x16xf32> to vector<4x16xf32>
    %72 = vector.shape_cast %71 : vector<4x16xf32> to vector<4x16x1xf32>
    %73 = vector.broadcast %72 : vector<4x16x1xf32> to vector<4x16x16xf32>
    %74 = arith.subf %70, %73 : vector<4x16x16xf32>
    %75 = math.exp %74 : vector<4x16x16xf32>
    %cst_22 = arith.constant dense<0.000000e+00> : vector<4x16xf32>
    %76 = vector.multi_reduction <add>, %75, %cst_22 [2] : vector<4x16x16xf32> to vector<4x16xf32>
    %77 = vector.shape_cast %76 : vector<4x16xf32> to vector<4x16x1xf32>
    %78 = tpu.reciprocal %77 {approx = true} : vector<4x16x1xf32> -> vector<4x16x1xf32>
    %79 = vector.broadcast %78 : vector<4x16x1xf32> to vector<4x16x16xf32>
    %80 = arith.mulf %75, %79 : vector<4x16x16xf32>
    %81 = arith.truncf %80 : vector<4x16x16xf32> to vector<4x16x16xbf16>
    "tpu.trace_start"() <{level = 10 : i32, message = "bqk,bkd->bqd"}> : () -> ()
    %cst_23 = arith.constant dense<0.000000e+00> : vector<4x16x32xf32>
    %82 = tpu.matmul %81, %65, %cst_23 {dimension_numbers = #tpu.dot_dimension_numbers<[2], [1], [1], [2], [0, 0, 0, 1, 1, 2], [0], [0]>} : vector<4x16x16xbf16>, vector<4x16x32xbf16>, vector<4x16x32xf32> -> vector<4x16x32xf32>
    "tpu.trace_stop"() : () -> ()
    %83 = arith.truncf %82 : vector<4x16x32xf32> to vector<4x16x32xbf16>
    %c0_24 = arith.constant 0 : index
    %c0_25 = arith.constant 0 : index
    %c64 = arith.constant 64 : index
    %84 = vector.load %arg6[%c0_24, %c0_25, %c64] : memref<4x16x128xbf16, #tpu.memory_space<vmem>>, vector<4x16x32xbf16>
    tpu.vector_store %arg6[%c0_24, %c0_25, %c64], %83 {strides = array<i32>} : memref<4x16x128xbf16, #tpu.memory_space<vmem>>, vector<4x16x32xbf16>,
    %85 = vector.extract_strided_slice %5 {offsets = [0, 0, 96], sizes = [4, 16, 32], strides = [1, 1, 1]} : vector<4x16x384xf32> to vector<4x16x32xf32>
    %86 = arith.truncf %85 : vector<4x16x32xf32> to vector<4x16x32xbf16>
    %87 = vector.extract_strided_slice %5 {offsets = [0, 0, 224], sizes = [4, 16, 32], strides = [1, 1, 1]} : vector<4x16x384xf32> to vector<4x16x32xf32>
    %88 = arith.truncf %87 : vector<4x16x32xf32> to vector<4x16x32xbf16>
    %89 = vector.extract_strided_slice %5 {offsets = [0, 0, 352], sizes = [4, 16, 32], strides = [1, 1, 1]} : vector<4x16x384xf32> to vector<4x16x32xf32>
    %90 = arith.truncf %89 : vector<4x16x32xf32> to vector<4x16x32xbf16>
    "tpu.trace_start"() <{level = 10 : i32, message = "bqd,bkd->bqk"}> : () -> ()
    %cst_26 = arith.constant dense<0.000000e+00> : vector<4x16x16xf32>
    %91 = tpu.matmul %86, %88, %cst_26 {dimension_numbers = #tpu.dot_dimension_numbers<[2], [2], [1], [1], [0, 0, 0, 1, 1, 1], [0], [0]>} : vector<4x16x32xbf16>, vector<4x16x32xbf16>, vector<4x16x16xf32> -> vector<4x16x16xf32>
    %cst_27 = arith.constant -1.000000e+30 : f32
    "tpu.trace_stop"() : () -> ()
    %92 = vector.shape_cast %9 : vector<1x16x16xi1> to vector<1x16x16xi1>
    %93 = vector.broadcast %92 : vector<1x16x16xi1> to vector<4x16x16xi1>
    %94 = vector.broadcast %cst_27 : f32 to vector<4x16x16xf32>
    %95 = arith.select %93, %91, %94 : vector<4x16x16xi1>, vector<4x16x16xf32>
    %cst_28 = arith.constant dense<0xFF800000> : vector<4x16xf32>
    %96 = vector.multi_reduction <maximumf>, %95, %cst_28 [2] : vector<4x16x16xf32> to vector<4x16xf32>
    %97 = vector.shape_cast %96 : vector<4x16xf32> to vector<4x16x1xf32>
    %98 = vector.broadcast %97 : vector<4x16x1xf32> to vector<4x16x16xf32>
    %99 = arith.subf %95, %98 : vector<4x16x16xf32>
    %100 = math.exp %99 : vector<4x16x16xf32>
    %cst_29 = arith.constant dense<0.000000e+00> : vector<4x16xf32>
    %101 = vector.multi_reduction <add>, %100, %cst_29 [2] : vector<4x16x16xf32> to vector<4x16xf32>
    %102 = vector.shape_cast %101 : vector<4x16xf32> to vector<4x16x1xf32>
    %103 = tpu.reciprocal %102 {approx = true} : vector<4x16x1xf32> -> vector<4x16x1xf32>
    %104 = vector.broadcast %103 : vector<4x16x1xf32> to vector<4x16x16xf32>
    %105 = arith.mulf %100, %104 : vector<4x16x16xf32>
    %106 = arith.truncf %105 : vector<4x16x16xf32> to vector<4x16x16xbf16>
    "tpu.trace_start"() <{level = 10 : i32, message = "bqk,bkd->bqd"}> : () -> ()
    %cst_30 = arith.constant dense<0.000000e+00> : vector<4x16x32xf32>
    %107 = tpu.matmul %106, %90, %cst_30 {dimension_numbers = #tpu.dot_dimension_numbers<[2], [1], [1], [2], [0, 0, 0, 1, 1, 2], [0], [0]>} : vector<4x16x16xbf16>, vector<4x16x32xbf16>, vector<4x16x32xf32> -> vector<4x16x32xf32>
    "tpu.trace_stop"() : () -> ()
    %108 = arith.truncf %107 : vector<4x16x32xf32> to vector<4x16x32xbf16>
    %c0_31 = arith.constant 0 : index
    %c0_32 = arith.constant 0 : index
    %c96 = arith.constant 96 : index
    %109 = vector.load %arg6[%c0_31, %c0_32, %c96] : memref<4x16x128xbf16, #tpu.memory_space<vmem>>, vector<4x16x32xbf16>
    tpu.vector_store %arg6[%c0_31, %c0_32, %c96], %108 {strides = array<i32>} : memref<4x16x128xbf16, #tpu.memory_space<vmem>>, vector<4x16x32xbf16>,
    %c0_33 = arith.constant 0 : index
    %c0_34 = arith.constant 0 : index
    %c0_35 = arith.constant 0 : index
    %110 = vector.load %arg6[%c0_33, %c0_34, %c0_35] : memref<4x16x128xbf16, #tpu.memory_space<vmem>>, vector<4x16x128xbf16>
    %111 = vector.shape_cast %110 : vector<4x16x128xbf16> to vector<64x128xbf16>
    %c0_36 = arith.constant 0 : index
    %c0_37 = arith.constant 0 : index
    %112 = vector.load %arg3[%c0_36, %c0_37] : memref<128x128xbf16, #tpu.memory_space<vmem>>, vector<128x128xbf16>
    %cst_38 = arith.constant dense<0.000000e+00> : vector<64x128xf32>
    %113 = tpu.matmul %111, %112, %cst_38 {dimension_numbers = #tpu.dot_dimension_numbers<[1], [0], [0], [1], [0, 0, 1, 1], [], []>} : vector<64x128xbf16>, vector<128x128xbf16>, vector<64x128xf32> -> vector<64x128xf32>
    %c0_39 = arith.constant 0 : index
    %c0_40 = arith.constant 0 : index
    %114 = vector.load %arg4[%c0_39, %c0_40] : memref<1x128xf32, #tpu.memory_space<vmem>>, vector<1x128xf32>
    %115 = vector.broadcast %114 : vector<1x128xf32> to vector<64x128xf32>
    %116 = arith.addf %113, %115 : vector<64x128xf32>
    %117 = vector.shape_cast %116 : vector<64x128xf32> to vector<4x16x128xf32>
    %118 = arith.truncf %117 : vector<4x16x128xf32> to vector<4x16x128xbf16>
    %c0_41 = arith.constant 0 : index
    %c0_42 = arith.constant 0 : index
    %c0_43 = arith.constant 0 : index
    %119 = vector.load %arg5[%c0_41, %c0_42, %c0_43] : memref<4x16x128xbf16, #tpu.memory_space<vmem>>, vector<4x16x128xbf16>
    tpu.vector_store %arg5[%c0_41, %c0_42, %c0_43], %118 {strides = array<i32>} : memref<4x16x128xbf16, #tpu.memory_space<vmem>>, vector<4x16x128xbf16>,
    return
  }
  func.func @transform_0(%arg0: i32) -> (i32, i32, i32) {
    %c0_i32 = arith.constant 0 : i32
    %c0_i32_0 = arith.constant 0 : i32
    %c0_i32_1 = arith.constant 0 : i32
    return %arg0, %c0_i32, %c0_i32_0 : i32, i32, i32
  }
  func.func @transform_1(%arg0: i32) -> (i32, i32) {
    %c0_i32 = arith.constant 0 : i32
    %c0_i32_0 = arith.constant 0 : i32
    %c0_i32_1 = arith.constant 0 : i32
    return %c0_i32, %c0_i32_0 : i32, i32
  }
  func.func @transform_2(%arg0: i32) -> (i32, i32) {
    %c0_i32 = arith.constant 0 : i32
    %c0_i32_0 = arith.constant 0 : i32
    %c0_i32_1 = arith.constant 0 : i32
    return %c0_i32, %c0_i32_0 : i32, i32
  }
  func.func @transform_3(%arg0: i32) -> (i32, i32) {
    %c0_i32 = arith.constant 0 : i32
    %c0_i32_0 = arith.constant 0 : i32
    %c0_i32_1 = arith.constant 0 : i32
    return %c0_i32, %c0_i32_0 : i32, i32
  }
  func.func @transform_4(%arg0: i32) -> (i32, i32, i32) {
    %c0_i32 = arith.constant 0 : i32
    %c0_i32_0 = arith.constant 0 : i32
    %c0_i32_1 = arith.constant 0 : i32
    return %arg0, %c0_i32, %c0_i32_0 : i32, i32, i32
  }
}

</mosaic_0001>

<llo_original>
// kernel: tpu_custom_call.1
$region0: #{tpu_custom_call.1}
  #allocation0 [shape = 'u32[]', space=smem, size = 0x4, offset = 0x4, fixed_abs, tag = 'smem constant byte address 0x4 - core index']
  #allocation1 [shape = 'u32[144,128]{1,0:T(1,128)}', space=vmem, size = 0x12000, scoped, tag = 'internal scratch']
  #allocation2 [shape = 'bf16[4,16,128]{2,1,0:T(8,128)(2,1)}', space=vmem, size = 0x4000, scoped, tag = 'scratch operand']
  %s0 = inlined_call_operand.hbm [shape: f32[8,16,128], index: 0, kind: input, shape index: {}]
  %s1 = inlined_call_operand.hbm [shape: bf16[128,384], index: 1, kind: input, shape index: {}]
  %s2 = inlined_call_operand.hbm [shape: bf16[128,128], index: 2, kind: input, shape index: {}]
  %s3 = inlined_call_operand.vmem [shape: f32[1,128], index: 3, kind: input, shape index: {}]
  %s4 = inlined_call_operand.hbm [shape: bf16[8,16,128], index: 4, kind: output, shape index: {}]
  %s5 = sld [smem:[#allocation0]]
  $region61: #{tpu_custom_call.1} parent=0
    _
  %s7 = ssub.s32 1, %s5
  %s8 = scalar_select 0, %s7, %s5
  $region1: #{tpu_custom_call.1} parent=0
    #allocation3 [shape = 'u8[65536]{0}', space=vmem, size = 0x10000, scoped, tag = 'input window, operand 0']
    #allocation4 [shape = 's32[2]{0}', space=sflag, size = 0x8, scoped, tag = 'scoped memory for tpu_custom_call.1']
    #allocation5 [shape = 's32[2]{0}', space=sflag, size = 0x8, scoped, tag = 'scoped memory for tpu_custom_call.1']
    #allocation6 [shape = 'u8[98304]{0}', space=vmem, size = 0x18000, scoped, tag = 'input window, operand 1, single buffered']
    #allocation7 [shape = 's32[1]{0}', space=sflag, size = 0x4, scoped, tag = 'scoped memory for tpu_custom_call.1']
    #allocation8 [shape = 'u8[32768]{0}', space=vmem, size = 0x8000, scoped, tag = 'input window, operand 2, single buffered']
    #allocation9 [shape = 'u8[32768]{0}', space=vmem, size = 0x8000, scoped, tag = 'output window, operand 0']
    %9 = vsyncpa [#allocation4], 0
    %s10 = scalar_lea.sflag [#allocation4], 1
    %11 = vsyncpa %s10, 0
    %12 = vsyncpa [#allocation7], 0
    %13 = vsyncpa [#allocation5], 0
    %s14 = scalar_lea.sflag [#allocation5], 1
    %15 = vsyncpa %s14, 0
    loop: start=0, step=1, limit=4
    $region2: #{tpu_custom_call.1} parent=1 // loop_pre_header
      _
    $region3: #{tpu_custom_call.1} parent=1 // loop_header
      %s17 = sphi 0, %s21
      %p18 = scmp.ge.s32.totalorder %s17, 4
      %s27 = sphi 0, %s29
      %s30 = sphi 0, %s27
      %s31 = sphi 0, %s30
      %s47 = sphi 0, %s31
      %s51 = sphi 0, %s51
      %s53 = sphi 0, %s51
      %s54 = sphi 0, %s53
      %s68 = sphi 0, %s54
      %s72 = sphi 0, %s72
      %s74 = sphi 0, %s72
      %s75 = sphi 0, %s74
      %s89 = sphi 0, %s75
      %s93 = sphi 0, %s93
      %s95 = sphi 0, %s93
      %s96 = sphi 0, %s95
      %s110 = sphi 0, %s96
      %s116 = sphi 0, %s118
      %s119 = sphi 0, %s116
      %s120 = sphi 0, %s119
      %s136 = sphi 0, %s120
    $region4: #{tpu_custom_call.1} parent=1 // loop_header_branch
      %20 = sbr.rel (%p18) target = $region8
    $region5: #{tpu_custom_call.1} parent=1 // loop_body
      %s22 = ssub.s32 %s17, 1
      %s23 = ssub.s32 %s17, 2
      %s24 = sadd.s32 %s17, 1
      %s25 = ssub.s32 %s17, %s24
      %p26 = scmp.eq.s32.totalorder %s25, 0
      %s28 = sadd.s32 %s27, 1
      %s29 = scalar_select %p26, %s27, %s28
      %p32 = pneg %p26
      %p33 = scmp.eq.s32.totalorder %s17, 1
      %p34 = por %p32, %p33
      %p35 = scmp.ne.s32.totalorder %s27, %s30
      %p36 = scmp.eq.s32.totalorder %s17, 0
      %p37 = por %p35, %p36
      %p38 = scmp.ne.s32.totalorder %s27, %s30
      %p39 = scmp.eq.s32.totalorder %s22, 1
      %p40 = por %p38, %p39
      %p41 = scmp.ne.s32.totalorder %s30, %s31
      %p42 = scmp.eq.s32.totalorder %s22, 0
      %p43 = por %p41, %p42
      %p44 = scmp.ne.s32.totalorder %s30, %s31
      %p45 = scmp.eq.s32.totalorder %s23, 1
      %p46 = por %p44, %p45
      %p48 = scmp.ne.s32.totalorder %s31, %s47
      %p49 = scmp.eq.s32.totalorder %s23, 0
      %p50 = por %p48, %p49
      %s52 = sadd.s32 %s51, 1
      %p55 = scmp.eq.s32.totalorder %s17, 1
      %p56 = scmp.ne.s32.totalorder %s51, %s53
      %p57 = scmp.eq.s32.totalorder %s17, 0
      %p58 = por %p56, %p57
      %p59 = scmp.ne.s32.totalorder %s51, %s53
      %p60 = scmp.eq.s32.totalorder %s22, 1
      %p61 = por %p59, %p60
      %p62 = scmp.ne.s32.totalorder %s53, %s54
      %p63 = scmp.eq.s32.totalorder %s22, 0
      %p64 = por %p62, %p63
      %p65 = scmp.ne.s32.totalorder %s53, %s54
      %p66 = scmp.eq.s32.totalorder %s23, 1
      %p67 = por %p65, %p66
      %p69 = scmp.ne.s32.totalorder %s54, %s68
      %p70 = scmp.eq.s32.totalorder %s23, 0
      %p71 = por %p69, %p70
      %s73 = sadd.s32 %s72, 1
      %p76 = scmp.eq.s32.totalorder %s17, 1
      %p77 = scmp.ne.s32.totalorder %s72, %s74
      %p78 = scmp.eq.s32.totalorder %s17, 0
      %p79 = por %p77, %p78
      %p80 = scmp.ne.s32.totalorder %s72, %s74
      %p81 = scmp.eq.s32.totalorder %s22, 1
      %p82 = por %p80, %p81
      %p83 = scmp.ne.s32.totalorder %s74, %s75
      %p84 = scmp.eq.s32.totalorder %s22, 0
      %p85 = por %p83, %p84
      %p86 = scmp.ne.s32.totalorder %s74, %s75
      %p87 = scmp.eq.s32.totalorder %s23, 1
      %p88 = por %p86, %p87
      %p90 = scmp.ne.s32.totalorder %s75, %s89
      %p91 = scmp.eq.s32.totalorder %s23, 0
      %p92 = por %p90, %p91
      %s94 = sadd.s32 %s93, 1
      %p97 = scmp.eq.s32.totalorder %s17, 1
      %p98 = scmp.ne.s32.totalorder %s93, %s95
      %p99 = scmp.eq.s32.totalorder %s17, 0
      %p100 = por %p98, %p99
      %p101 = scmp.ne.s32.totalorder %s93, %s95
      %p102 = scmp.eq.s32.totalorder %s22, 1
      %p103 = por %p101, %p102
      %p104 = scmp.ne.s32.totalorder %s95, %s96
      %p105 = scmp.eq.s32.totalorder %s22, 0
      %p106 = por %p104, %p105
      %p107 = scmp.ne.s32.totalorder %s95, %s96
      %p108 = scmp.eq.s32.totalorder %s23, 1
      %p109 = por %p107, %p108
      %p111 = scmp.ne.s32.totalorder %s96, %s110
      %p112 = scmp.eq.s32.totalorder %s23, 0
      %p113 = por %p111, %p112
      %s114 = ssub.s32 %s17, %s24
      %p115 = scmp.eq.s32.totalorder %s114, 0
      %s117 = sadd.s32 %s116, 1
      %s118 = scalar_select %p115, %s116, %s117
      %p121 = pneg %p115
      %p122 = scmp.eq.s32.totalorder %s17, 1
      %p123 = por %p121, %p122
      %p124 = scmp.ne.s32.totalorder %s116, %s119
      %p125 = scmp.eq.s32.totalorder %s17, 0
      %p126 = por %p124, %p125
      %p127 = scmp.ne.s32.totalorder %s116, %s119
      %p128 = scmp.eq.s32.totalorder %s22, 1
      %p129 = por %p127, %p128
      %p130 = scmp.ne.s32.totalorder %s119, %s120
      %p131 = scmp.eq.s32.totalorder %s22, 0
      %p132 = por %p130, %p131
      %p133 = scmp.ne.s32.totalorder %s119, %s120
      %p134 = scmp.eq.s32.totalorder %s23, 1
      %p135 = por %p133, %p134
      %p137 = scmp.ne.s32.totalorder %s120, %s136
      %p138 = scmp.eq.s32.totalorder %s23, 0
      %p139 = por %p137, %p138
      %p140 = scmp.le.s32.totalorder 1, %s17
      %p141 = scmp.lt.s32.totalorder %s17, 3
      %p142 = pnand %p140, %p141
      %p143 = pneg %p142
      // Predicated region
      $region9: #{tpu_custom_call.1} parent=5 // pred_check
        _
      $region10: #{tpu_custom_call.1} parent=5 // pred_check_branch
        %145 = sbr.rel (%p142) target = $region12
      $region11: #{tpu_custom_call.1} parent=5 // pred_region
        %s146 = ssub.s32 %s17, 1
        // Predicated region
        $region13: #{tpu_custom_call.1} parent=11 // pred_check
          %p147 = pneg %p64
        $region14: #{tpu_custom_call.1} parent=11 // pred_check_branch
          %149 = sbr.rel (%p147) target = $region16
        $region15: #{tpu_custom_call.1} parent=11 // pred_region
          %s151 = ssub.s32 3072, 3072
          %152 = vsyncadd [#allocation7], %s151
          %s153 = sshll.u32 [#allocation6], 4
          %s154 = int_to_ptr.vmem [resolvable:$true] %s153
          %159 = dma.hbm_to_vmem [thread:$0]  %s1, 3072, %s154, [#allocation7], 192, 192, 12
        $region16: #{tpu_custom_call.1} parent=11 // pred_fallthru
          _
        // Predicated region
        $region17: #{tpu_custom_call.1} parent=11 // pred_check
          %p160 = pneg %p85
        $region18: #{tpu_custom_call.1} parent=11 // pred_check_branch
          %162 = sbr.rel (%p160) target = $region20
        $region19: #{tpu_custom_call.1} parent=11 // pred_region
          %s164 = ssub.s32 1024, 1024
          %165 = vsyncadd [#allocation7], %s164
          %s166 = sshll.u32 [#allocation8], 4
          %s167 = int_to_ptr.vmem [resolvable:$true] %s166
          %172 = dma.hbm_to_vmem [thread:$0]  %s2, 1024, %s167, [#allocation7], 64, 64, 4
        $region20: #{tpu_custom_call.1} parent=11 // pred_fallthru
          _
        // Predicated region
        $region21: #{tpu_custom_call.1} parent=11 // pred_check
          %p173 = pneg %p106
        $region22: #{tpu_custom_call.1} parent=11 // pred_check_branch
          %175 = sbr.rel (%p173) target = $region24
        $region23: #{tpu_custom_call.1} parent=11 // pred_region
          _
        $region24: #{tpu_custom_call.1} parent=11 // pred_fallthru
          _
      $region12: #{tpu_custom_call.1} parent=5 // pred_fallthru
        _
      %p176 = scmp.lt.s32.totalorder %s17, 2
      // Predicated region
      $region25: #{tpu_custom_call.1} parent=5 // pred_check
        %p177 = pneg %p176
      $region26: #{tpu_custom_call.1} parent=5 // pred_check_branch
        %179 = sbr.rel (%p177) target = $region28
      $region27: #{tpu_custom_call.1} parent=5 // pred_region
        // Predicated region
        $region29: #{tpu_custom_call.1} parent=27 // pred_check
          %p180 = pneg %p37
        $region30: #{tpu_custom_call.1} parent=27 // pred_check_branch
          %182 = sbr.rel (%p180) target = $region32
        $region31: #{tpu_custom_call.1} parent=27 // pred_region
          %s183 = sand.u32 %s27, 1
          %s184 = scalar_lea.sflag [#allocation4], %s183
          %s185 = sand.u32 %s27, 1
          %s186 = smul.addr %s185, 64
          %s187 = scalar_lea.vmem [#allocation3], %s186
          %s188 = smul.u32 4, %s17
          %s190 = ssub.s32 1024, 1024
          %191 = vsyncadd %s184, %s190
          %s192 = smul.addr %s188, 2
          %s193 = smul.addr %s192, 128
          %s194 = scalar_lea.hbm %s0, %s193
          %s195 = sshll.u32 %s187, 4
          %s196 = int_to_ptr.vmem [resolvable:$true] %s195
          %201 = dma.hbm_to_vmem [thread:$0]  %s194, 1024, %s196, %s184, 128, 128, 8
        $region32: #{tpu_custom_call.1} parent=27 // pred_fallthru
          _
      $region28: #{tpu_custom_call.1} parent=5 // pred_fallthru
        _
      %p202 = scmp.le.s32.totalorder 1, %s17
      %p203 = scmp.lt.s32.totalorder %s17, 3
      %p204 = pnand %p202, %p203
      %p205 = pneg %p204
      // Predicated region
      $region33: #{tpu_custom_call.1} parent=5 // pred_check
        _
      $region34: #{tpu_custom_call.1} parent=5 // pred_check_branch
        %207 = sbr.rel (%p204) target = $region36
      $region35: #{tpu_custom_call.1} parent=5 // pred_region
        %s208 = ssub.s32 %s17, 1
        %s209 = sand.u32 %s30, 1
        %s210 = scalar_lea.sflag [#allocation4], %s209
        %s211 = sand.u32 %s30, 1
        %s212 = smul.addr %s211, 64
        %s213 = scalar_lea.vmem [#allocation3], %s212
        // Predicated region
        $region37: #{tpu_custom_call.1} parent=35 // pred_check
          %p214 = pneg %p43
        $region38: #{tpu_custom_call.1} parent=35 // pred_check_branch
          %216 = sbr.rel (%p214) target = $region40
        $region39: #{tpu_custom_call.1} parent=35 // pred_region
          %217 = dma.done %s210, 1024
        $region40: #{tpu_custom_call.1} parent=35 // pred_fallthru
          _
        // Predicated region
        $region41: #{tpu_custom_call.1} parent=35 // pred_check
          %p218 = pneg %p64
        $region42: #{tpu_custom_call.1} parent=35 // pred_check_branch
          %220 = sbr.rel (%p218) target = $region44
        $region43: #{tpu_custom_call.1} parent=35 // pred_region
          %221 = dma.done [#allocation7], 3072
        $region44: #{tpu_custom_call.1} parent=35 // pred_fallthru
          _
        // Predicated region
        $region45: #{tpu_custom_call.1} parent=35 // pred_check
          %p222 = pneg %p85
        $region46: #{tpu_custom_call.1} parent=35 // pred_check_branch
          %224 = sbr.rel (%p222) target = $region48
        $region47: #{tpu_custom_call.1} parent=35 // pred_region
          %225 = dma.done [#allocation7], 1024
        $region48: #{tpu_custom_call.1} parent=35 // pred_fallthru
          _
        %s226 = sand.u32 %s30, 1
        %s227 = scalar_lea.sflag [#allocation4], %s226
        %s228 = sand.u32 %s30, 1
        %s229 = smul.addr %s228, 64
        %s230 = scalar_lea.vmem [#allocation3], %s229
        %p231 = pneg %p43
        %p232 = pneg %p40
        %p233 = pneg %p64
        %p234 = pneg %p61
        %p235 = pneg %p85
        %p236 = pneg %p82
        %p237 = pneg %p106
        %p238 = pneg %p103
        %p239 = pneg %p132
        %p240 = pneg %p129
        %s241 = sand.u32 %s119, 1
        %s242 = scalar_lea.sflag [#allocation5], %s241
        %s243 = sand.u32 %s119, 1
        %s244 = smul.addr %s243, 32
        %s245 = scalar_lea.vmem [#allocation9], %s244
        %s246 = smul.u32 4, %s22
        %s247 = smul.u32 4, %s22
        %v249 = vld [vmem:[%s213] sm:$0xff]
        %v250 = vld [vmem:[%s213 + $0x8] sm:$0xff]
        %v251 = vld [vmem:[%s213 + $0x10] sm:$0xff]
        %v252 = vld [vmem:[%s213 + $0x18] sm:$0xff]
        %v253 = vld [vmem:[%s213 + $0x20] sm:$0xff]
        %v254 = vld [vmem:[%s213 + $0x28] sm:$0xff]
        %v255 = vld [vmem:[%s213 + $0x30] sm:$0xff]
        %v256 = vld [vmem:[%s213 + $0x38] sm:$0xff]
        %v257 = vpack.c.bf16 %v250, %v249
        %v258 = vpack.c.bf16 %v252, %v251
        %v259 = vpack.c.bf16 %v254, %v253
        %v260 = vpack.c.bf16 %v256, %v255
        %v261 = vld [vmem:[#allocation6] sm:$0xff]
        %v262 = vld [vmem:[#allocation6 + $0x8] sm:$0xf]
        %v263 = vld [vmem:[#allocation6 + $0xc] sm:$0xff]
        %v264 = vld [vmem:[#allocation6 + $0x14] sm:$0xf]
        %v265 = vld [vmem:[#allocation6 + $0x18] sm:$0xff]
        %v266 = vld [vmem:[#allocation6 + $0x20] sm:$0xf]
        %v267 = vld [vmem:[#allocation6 + $0x24] sm:$0xff]
        %v268 = vld [vmem:[#allocation6 + $0x2c] sm:$0xf]
        %v269 = vld [vmem:[#allocation6 + $0x30] sm:$0xff]
        %v270 = vld [vmem:[#allocation6 + $0x38] sm:$0xf]
        %v271 = vld [vmem:[#allocation6 + $0x3c] sm:$0xff]
        %v272 = vld [vmem:[#allocation6 + $0x44] sm:$0xf]
        %v273 = vld [vmem:[#allocation6 + $0x48] sm:$0xff]
        %v274 = vld [vmem:[#allocation6 + $0x50] sm:$0xf]
        %v275 = vld [vmem:[#allocation6 + $0x54] sm:$0xff]
        %v276 = vld [vmem:[#allocation6 + $0x5c] sm:$0xf]
        %v277 = vld [vmem:[#allocation6 + $0x60] sm:$0xff]
        %v278 = vld [vmem:[#allocation6 + $0x68] sm:$0xf]
        %v279 = vld [vmem:[#allocation6 + $0x6c] sm:$0xff]
        %v280 = vld [vmem:[#allocation6 + $0x74] sm:$0xf]
        %v281 = vld [vmem:[#allocation6 + $0x78] sm:$0xff]
        %v282 = vld [vmem:[#allocation6 + $0x80] sm:$0xf]
        %v283 = vld [vmem:[#allocation6 + $0x84] sm:$0xff]
        %v284 = vld [vmem:[#allocation6 + $0x8c] sm:$0xf]
        %v285 = vld [vmem:[#allocation6 + $0x90] sm:$0xff]
        %v286 = vld [vmem:[#allocation6 + $0x98] sm:$0xf]
        %v287 = vld [vmem:[#allocation6 + $0x9c] sm:$0xff]
        %v288 = vld [vmem:[#allocation6 + $0xa4] sm:$0xf]
        %v289 = vld [vmem:[#allocation6 + $0xa8] sm:$0xff]
        %v290 = vld [vmem:[#allocation6 + $0xb0] sm:$0xf]
        %v291 = vld [vmem:[#allocation6 + $0xb4] sm:$0xff]
        %v292 = vld [vmem:[#allocation6 + $0xbc] sm:$0xf]
        %v325 = vunpack.c.l.b16 %v261
        %v326 = vunpack.c.h.b16 %v261
        %v327 = vunpack.c.l.b16 %v262
        %v328 = vunpack.c.l.b16 %v263
        %v329 = vunpack.c.h.b16 %v263
        %v330 = vunpack.c.l.b16 %v264
        %v331 = vunpack.c.l.b16 %v265
        %v332 = vunpack.c.h.b16 %v265
        %v333 = vunpack.c.l.b16 %v266
        %v334 = vunpack.c.l.b16 %v267
        %v335 = vunpack.c.h.b16 %v267
        %v336 = vunpack.c.l.b16 %v268
        %v337 = vunpack.c.l.b16 %v269
        %v338 = vunpack.c.h.b16 %v269
        %v339 = vunpack.c.l.b16 %v270
        %v340 = vunpack.c.l.b16 %v271
        %v341 = vunpack.c.h.b16 %v271
        %v342 = vunpack.c.l.b16 %v272
        %v343 = vunpack.c.l.b16 %v273
        %v344 = vunpack.c.h.b16 %v273
        %v345 = vunpack.c.l.b16 %v274
        %v346 = vunpack.c.l.b16 %v275
        %v347 = vunpack.c.h.b16 %v275
        %v348 = vunpack.c.l.b16 %v276
        %v349 = vunpack.c.l.b16 %v277
        %v350 = vunpack.c.h.b16 %v277
        %v351 = vunpack.c.l.b16 %v278
        %v352 = vunpack.c.l.b16 %v279
        %v353 = vunpack.c.h.b16 %v279
        %v354 = vunpack.c.l.b16 %v280
        %v355 = vunpack.c.l.b16 %v281
        %v356 = vunpack.c.h.b16 %v281
        %v357 = vunpack.c.l.b16 %v282
        %v358 = vunpack.c.l.b16 %v283
        %v359 = vunpack.c.h.b16 %v283
        %v360 = vunpack.c.l.b16 %v284
        %v361 = vunpack.c.l.b16 %v285
        %v362 = vunpack.c.h.b16 %v285
        %v363 = vunpack.c.l.b16 %v286
        %v364 = vunpack.c.l.b16 %v287
        %v365 = vunpack.c.h.b16 %v287
        %v366 = vunpack.c.l.b16 %v288
        %v367 = vunpack.c.l.b16 %v289
        %v368 = vunpack.c.h.b16 %v289
        %v369 = vunpack.c.l.b16 %v290
        %v370 = vunpack.c.l.b16 %v291
        %v371 = vunpack.c.h.b16 %v291
        %v372 = vunpack.c.l.b16 %v292
        %v373 = vpack.c.b16 %v328, %v325
        %v374 = vpack.c.b16 %v329, %v326
        %v375 = vpack.c.b16 %v330, %v327
        %v376 = vpack.c.b16 %v334, %v331
        %v377 = vpack.c.b16 %v335, %v332
        %v378 = vpack.c.b16 %v336, %v333
        %v379 = vpack.c.b16 %v340, %v337
        %v380 = vpack.c.b16 %v341, %v338
        %v381 = vpack.c.b16 %v342, %v339
        %v382 = vpack.c.b16 %v346, %v343
        %v383 = vpack.c.b16 %v347, %v344
        %v384 = vpack.c.b16 %v348, %v345
        %v385 = vpack.c.b16 %v352, %v349
        %v386 = vpack.c.b16 %v353, %v350
        %v387 = vpack.c.b16 %v354, %v351
        %v388 = vpack.c.b16 %v358, %v355
        %v389 = vpack.c.b16 %v359, %v356
        %v390 = vpack.c.b16 %v360, %v357
        %v391 = vpack.c.b16 %v364, %v361
        %v392 = vpack.c.b16 %v365, %v362
        %v393 = vpack.c.b16 %v366, %v363
        %v394 = vpack.c.b16 %v370, %v367
        %v395 = vpack.c.b16 %v371, %v368
        %v396 = vpack.c.b16 %v372, %v369
        %421 = vmatprep.subr.bf16.mxu0 %v395
        %422 = vmatpush1.bf16.msra.mxu0 %v394
        %423 = vmatprep.subr.bf16.mxu0 %v392
        %424 = vmatpush1.bf16.msra.mxu0 %v391
        %425 = vmatprep.subr.bf16.mxu0 %v389
        %426 = vmatpush1.bf16.msra.mxu0 %v388
        %427 = vmatprep.subr.bf16.mxu0 %v386
        %428 = vmatpush1.bf16.msra.mxu0 %v385
        %429 = vmatprep.subr.bf16.mxu0 %v383
        %430 = vmatpush1.bf16.msra.mxu0 %v382
        %431 = vmatprep.subr.bf16.mxu0 %v380
        %432 = vmatpush1.bf16.msra.mxu0 %v379
        %433 = vmatprep.subr.bf16.mxu0 %v377
        %434 = vmatpush1.bf16.msra.mxu0 %v376
        %435 = vmatprep.subr.bf16.mxu0 %v374
        %436 = vmatpush1.bf16.msra.mxu0 %v373
        %437 = vmatprep.subr.bf16.mxu0 0
        %438 = vmatpush2.bf16.msra.mxu0 0
        %439 = vmatprep.subr.bf16.mxu0 0
        %440 = vmatpush2.bf16.msra.mxu0 0
        %441 = vmatprep.subr.bf16.mxu0 0
        %442 = vmatpush2.bf16.msra.mxu0 0
        %443 = vmatprep.subr.bf16.mxu0 0
        %444 = vmatpush2.bf16.msra.mxu0 0
        %445 = vmatprep.subr.bf16.mxu0 0
        %446 = vmatpush2.bf16.msra.mxu0 0
        %447 = vmatprep.subr.bf16.mxu0 0
        %448 = vmatpush2.bf16.msra.mxu0 0
        %449 = vmatprep.subr.bf16.mxu0 0
        %450 = vmatpush2.bf16.msra.mxu0 0
        %451 = vmatprep.subr.bf16.mxu0 0
        %452 = vmatpush2.bf16.msra.mxu0 0
        %453 = vmatprep.mubr.bf16.mxu0 0
        %454 = vmatmul.mubr.bf16.gmra.mxu0 %v257
        %v455 = vpop.f32.mrf.mxu0
        %v456 = vadd.f32 0.0, %v455
        %v457 = vpop.f32.mrf.mxu0
        %v458 = vadd.f32 0.0, %v457
        %v459 = vpop.f32.mrf.mxu0
        %v460 = vadd.f32 0.0, %v459
        %v461 = vpop.f32.mrf.mxu0
        %v462 = vadd.f32 0.0, %v461
        %463 = vmatprep.mubr.bf16.mxu0 0
        %464 = vmatmul.mubr.bf16.gmra.mxu0 %v258
        %v465 = vpop.f32.mrf.mxu0
        %v466 = vadd.f32 0.0, %v465
        %v467 = vpop.f32.mrf.mxu0
        %v468 = vadd.f32 0.0, %v467
        %v469 = vpop.f32.mrf.mxu0
        %v470 = vadd.f32 0.0, %v469
        %v471 = vpop.f32.mrf.mxu0
        %v472 = vadd.f32 0.0, %v471
        %473 = vmatprep.mubr.bf16.mxu0 0
        %474 = vmatmul.mubr.bf16.gmra.mxu0 %v259
        %v475 = vpop.f32.mrf.mxu0
        %v476 = vadd.f32 0.0, %v475
        %v477 = vpop.f32.mrf.mxu0
        %v478 = vadd.f32 0.0, %v477
        %v479 = vpop.f32.mrf.mxu0
        %v480 = vadd.f32 0.0, %v479
        %v481 = vpop.f32.mrf.mxu0
        %v482 = vadd.f32 0.0, %v481
        %483 = vmatprep.mubr.bf16.mxu0 0
        %484 = vmatmul.mubr.bf16.gmra.mxu0 %v260
        %v485 = vpop.f32.mrf.mxu0
        %v486 = vadd.f32 0.0, %v485
        %v487 = vpop.f32.mrf.mxu0
        %v488 = vadd.f32 0.0, %v487
        %v489 = vpop.f32.mrf.mxu0
        %v490 = vadd.f32 0.0, %v489
        %v491 = vpop.f32.mrf.mxu0
        %v492 = vadd.f32 0.0, %v491
        %493 = vdwg.mxu0
        %494 = vmatprep.subr.bf16.mxu0 0
        %495 = vmatpush1.bf16.msra.mxu0 %v396
        %496 = vmatprep.subr.bf16.mxu0 0
        %497 = vmatpush1.bf16.msra.mxu0 %v393
        %498 = vmatprep.subr.bf16.mxu0 0
        %499 = vmatpush1.bf16.msra.mxu0 %v390
        %500 = vmatprep.subr.bf16.mxu0 0
        %501 = vmatpush1.bf16.msra.mxu0 %v387
        %502 = vmatprep.subr.bf16.mxu0 0
        %503 = vmatpush1.bf16.msra.mxu0 %v384
        %504 = vmatprep.subr.bf16.mxu0 0
        %505 = vmatpush1.bf16.msra.mxu0 %v381
        %506 = vmatprep.subr.bf16.mxu0 0
        %507 = vmatpush1.bf16.msra.mxu0 %v378
        %508 = vmatprep.subr.bf16.mxu0 0
        %509 = vmatpush1.bf16.msra.mxu0 %v375
        %510 = vmatprep.subr.bf16.mxu0 0
        %511 = vmatpush2.bf16.msra.mxu0 0
        %512 = vmatprep.subr.bf16.mxu0 0
        %513 = vmatpush2.bf16.msra.mxu0 0
        %514 = vmatprep.subr.bf16.mxu0 0
        %515 = vmatpush2.bf16.msra.mxu0 0
        %516 = vmatprep.subr.bf16.mxu0 0
        %517 = vmatpush2.bf16.msra.mxu0 0
        %518 = vmatprep.subr.bf16.mxu0 0
        %519 = vmatpush2.bf16.msra.mxu0 0
        %520 = vmatprep.subr.bf16.mxu0 0
        %521 = vmatpush2.bf16.msra.mxu0 0
        %522 = vmatprep.subr.bf16.mxu0 0
        %523 = vmatpush2.bf16.msra.mxu0 0
        %524 = vmatprep.subr.bf16.mxu0 0
        %525 = vmatpush2.bf16.msra.mxu0 0
        %526 = vmatprep.mubr.bf16.mxu0 0
        %527 = vmatmul.mubr.bf16.gmra.mxu0 %v257
        %v528 = vpop.f32.mrf.mxu0
        %v529 = vadd.f32 0.0, %v528
        %v530 = vpop.f32.mrf.mxu0
        %v531 = vpop.f32.mrf.mxu0
        %v532 = vadd.f32 0.0, %v531
        %v533 = vpop.f32.mrf.mxu0
        %534 = vmatprep.mubr.bf16.mxu0 0
        %535 = vmatmul.mubr.bf16.gmra.mxu0 %v258
        %v536 = vpop.f32.mrf.mxu0
        %v537 = vadd.f32 0.0, %v536
        %v538 = vpop.f32.mrf.mxu0
        %v539 = vpop.f32.mrf.mxu0
        %v540 = vadd.f32 0.0, %v539
        %v541 = vpop.f32.mrf.mxu0
        %542 = vmatprep.mubr.bf16.mxu0 0
        %543 = vmatmul.mubr.bf16.gmra.mxu0 %v259
        %v544 = vpop.f32.mrf.mxu0
        %v545 = vadd.f32 0.0, %v544
        %v546 = vpop.f32.mrf.mxu0
        %v547 = vpop.f32.mrf.mxu0
        %v548 = vadd.f32 0.0, %v547
        %v549 = vpop.f32.mrf.mxu0
        %550 = vmatprep.mubr.bf16.mxu0 0
        %551 = vmatmul.mubr.bf16.gmra.mxu0 %v260
        %v552 = vpop.f32.mrf.mxu0
        %v553 = vadd.f32 0.0, %v552
        %v554 = vpop.f32.mrf.mxu0
        %v555 = vpop.f32.mrf.mxu0
        %v556 = vadd.f32 0.0, %v555
        %v557 = vpop.f32.mrf.mxu0
        %558 = vdwg.mxu0
        %v559 = vlaneseq
        %v560 = vshrl.u32 %v559, 7
        %v561 = vadd.s32 %v560, 8
        %v562 = vlaneseq
        %v563 = vand.u32 %v562, 127
        %vm564 = vcmp.ge.s32.totalorder %v560, %v563
        %vm565 = vcmp.ge.s32.totalorder %v561, %v563
        %v566 = vpack.c.bf16 %v460, %v456
        %v567 = vpack.c.bf16 %v470, %v466
        %v568 = vpack.c.bf16 %v480, %v476
        %v569 = vpack.c.bf16 %v490, %v486
        %v570 = vpack.c.bf16 %v462, %v458
        %v571 = vpack.c.bf16 %v472, %v468
        %v572 = vpack.c.bf16 %v482, %v478
        %v573 = vpack.c.bf16 %v492, %v488
        %v574 = vpack.c.bf16 %v532, %v529
        %v575 = vpack.c.bf16 %v540, %v537
        %v576 = vpack.c.bf16 %v548, %v545
        %v577 = vpack.c.bf16 %v556, %v553
        %vm578 = vcmask 261120
        %v580 = vsel %vm578, %v566, 0
        %v583 = vsel %vm578, %v570, 0
        %585 = vmatprep.subr.bf16.mxu0 0
        %586 = vmatpush1.bf16.xpose.msra.mxu0 0
        %587 = vmatprep.subr.bf16.mxu0 0
        %588 = vmatpush1.bf16.xpose.msra.mxu0 0
        %589 = vmatprep.subr.bf16.mxu0 0
        %590 = vmatpush1.bf16.xpose.msra.mxu0 0
        %591 = vmatprep.subr.bf16.mxu0 0
        %592 = vmatpush1.bf16.xpose.msra.mxu0 0
        %593 = vmatprep.subr.bf16.mxu0 0
        %594 = vmatpush1.bf16.xpose.msra.mxu0 0
        %595 = vmatprep.subr.bf16.mxu0 0
        %596 = vmatpush1.bf16.xpose.msra.mxu0 0
        %597 = vmatprep.subr.bf16.mxu0 0
        %598 = vmatpush1.bf16.xpose.msra.mxu0 0
        %599 = vmatprep.subr.bf16.mxu0 0
        %600 = vmatpush1.bf16.xpose.msra.mxu0 %v583
        %601 = vmatprep.subr.bf16.mxu0 0
        %602 = vmatpush2.bf16.xpose.msra.mxu0 0
        %603 = vmatprep.subr.bf16.mxu0 0
        %604 = vmatpush2.bf16.xpose.msra.mxu0 0
        %605 = vmatprep.subr.bf16.mxu0 0
        %606 = vmatpush2.bf16.xpose.msra.mxu0 0
        %607 = vmatprep.subr.bf16.mxu0 0
        %608 = vmatpush2.bf16.xpose.msra.mxu0 0
        %609 = vmatprep.subr.bf16.mxu0 0
        %610 = vmatpush2.bf16.xpose.msra.mxu0 0
        %611 = vmatprep.subr.bf16.mxu0 0
        %612 = vmatpush2.bf16.xpose.msra.mxu0 0
        %613 = vmatprep.subr.bf16.mxu0 0
        %614 = vmatpush2.bf16.xpose.msra.mxu0 0
        %615 = vmatprep.subr.bf16.mxu0 0
        %616 = vmatpush2.bf16.xpose.msra.mxu0 0
        %617 = vmatprep.mubr.bf16.mxu0 0
        %618 = vmatmul.mubr.bf16.gmra.mxu0 %v580
        %v619 = vpop.f32.mrf.mxu0
        %v620 = vadd.f32 0.0, %v619
        %v621 = vpop.f32.mrf.mxu0
        %v622 = vpop.f32.mrf.mxu0
        %v623 = vadd.f32 0.0, %v622
        %v624 = vpop.f32.mrf.mxu0
        %625 = vdwg.mxu0
        %v627 = vsel %vm578, %v567, 0
        %v630 = vsel %vm578, %v571, 0
        %632 = vmatprep.subr.bf16.mxu0 0
        %633 = vmatpush1.bf16.xpose.msra.mxu0 0
        %634 = vmatprep.subr.bf16.mxu0 0
        %635 = vmatpush1.bf16.xpose.msra.mxu0 0
        %636 = vmatprep.subr.bf16.mxu0 0
        %637 = vmatpush1.bf16.xpose.msra.mxu0 0
        %638 = vmatprep.subr.bf16.mxu0 0
        %639 = vmatpush1.bf16.xpose.msra.mxu0 0
        %640 = vmatprep.subr.bf16.mxu0 0
        %641 = vmatpush1.bf16.xpose.msra.mxu0 0
        %642 = vmatprep.subr.bf16.mxu0 0
        %643 = vmatpush1.bf16.xpose.msra.mxu0 0
        %644 = vmatprep.subr.bf16.mxu0 0
        %645 = vmatpush1.bf16.xpose.msra.mxu0 0
        %646 = vmatprep.subr.bf16.mxu0 0
        %647 = vmatpush1.bf16.xpose.msra.mxu0 %v630
        %648 = vmatprep.subr.bf16.mxu0 0
        %649 = vmatpush2.bf16.xpose.msra.mxu0 0
        %650 = vmatprep.subr.bf16.mxu0 0
        %651 = vmatpush2.bf16.xpose.msra.mxu0 0
        %652 = vmatprep.subr.bf16.mxu0 0
        %653 = vmatpush2.bf16.xpose.msra.mxu0 0
        %654 = vmatprep.subr.bf16.mxu0 0
        %655 = vmatpush2.bf16.xpose.msra.mxu0 0
        %656 = vmatprep.subr.bf16.mxu0 0
        %657 = vmatpush2.bf16.xpose.msra.mxu0 0
        %658 = vmatprep.subr.bf16.mxu0 0
        %659 = vmatpush2.bf16.xpose.msra.mxu0 0
        %660 = vmatprep.subr.bf16.mxu0 0
        %661 = vmatpush2.bf16.xpose.msra.mxu0 0
        %662 = vmatprep.subr.bf16.mxu0 0
        %663 = vmatpush2.bf16.xpose.msra.mxu0 0
        %664 = vmatprep.mubr.bf16.mxu0 0
        %665 = vmatmul.mubr.bf16.gmra.mxu0 %v627
        %v666 = vpop.f32.mrf.mxu0
        %v667 = vadd.f32 0.0, %v666
        %v668 = vpop.f32.mrf.mxu0
        %v669 = vpop.f32.mrf.mxu0
        %v670 = vadd.f32 0.0, %v669
        %v671 = vpop.f32.mrf.mxu0
        %672 = vdwg.mxu0
        %v674 = vsel %vm578, %v568, 0
        %v677 = vsel %vm578, %v572, 0
        %679 = vmatprep.subr.bf16.mxu0 0
        %680 = vmatpush1.bf16.xpose.msra.mxu0 0
        %681 = vmatprep.subr.bf16.mxu0 0
        %682 = vmatpush1.bf16.xpose.msra.mxu0 0
        %683 = vmatprep.subr.bf16.mxu0 0
        %684 = vmatpush1.bf16.xpose.msra.mxu0 0
        %685 = vmatprep.subr.bf16.mxu0 0
        %686 = vmatpush1.bf16.xpose.msra.mxu0 0
        %687 = vmatprep.subr.bf16.mxu0 0
        %688 = vmatpush1.bf16.xpose.msra.mxu0 0
        %689 = vmatprep.subr.bf16.mxu0 0
        %690 = vmatpush1.bf16.xpose.msra.mxu0 0
        %691 = vmatprep.subr.bf16.mxu0 0
        %692 = vmatpush1.bf16.xpose.msra.mxu0 0
        %693 = vmatprep.subr.bf16.mxu0 0
        %694 = vmatpush1.bf16.xpose.msra.mxu0 %v677
        %695 = vmatprep.subr.bf16.mxu0 0
        %696 = vmatpush2.bf16.xpose.msra.mxu0 0
        %697 = vmatprep.subr.bf16.mxu0 0
        %698 = vmatpush2.bf16.xpose.msra.mxu0 0
        %699 = vmatprep.subr.bf16.mxu0 0
        %700 = vmatpush2.bf16.xpose.msra.mxu0 0
        %701 = vmatprep.subr.bf16.mxu0 0
        %702 = vmatpush2.bf16.xpose.msra.mxu0 0
        %703 = vmatprep.subr.bf16.mxu0 0
        %704 = vmatpush2.bf16.xpose.msra.mxu0 0
        %705 = vmatprep.subr.bf16.mxu0 0
        %706 = vmatpush2.bf16.xpose.msra.mxu0 0
        %707 = vmatprep.subr.bf16.mxu0 0
        %708 = vmatpush2.bf16.xpose.msra.mxu0 0
        %709 = vmatprep.subr.bf16.mxu0 0
        %710 = vmatpush2.bf16.xpose.msra.mxu0 0
        %711 = vmatprep.mubr.bf16.mxu0 0
        %712 = vmatmul.mubr.bf16.gmra.mxu0 %v674
        %v713 = vpop.f32.mrf.mxu0
        %v714 = vadd.f32 0.0, %v713
        %v715 = vpop.f32.mrf.mxu0
        %v716 = vpop.f32.mrf.mxu0
        %v717 = vadd.f32 0.0, %v716
        %v718 = vpop.f32.mrf.mxu0
        %719 = vdwg.mxu0
        %v721 = vsel %vm578, %v569, 0
        %v724 = vsel %vm578, %v573, 0
        %726 = vmatprep.subr.bf16.mxu0 0
        %727 = vmatpush1.bf16.xpose.msra.mxu0 0
        %728 = vmatprep.subr.bf16.mxu0 0
        %729 = vmatpush1.bf16.xpose.msra.mxu0 0
        %730 = vmatprep.subr.bf16.mxu0 0
        %731 = vmatpush1.bf16.xpose.msra.mxu0 0
        %732 = vmatprep.subr.bf16.mxu0 0
        %733 = vmatpush1.bf16.xpose.msra.mxu0 0
        %734 = vmatprep.subr.bf16.mxu0 0
        %735 = vmatpush1.bf16.xpose.msra.mxu0 0
        %736 = vmatprep.subr.bf16.mxu0 0
        %737 = vmatpush1.bf16.xpose.msra.mxu0 0
        %738 = vmatprep.subr.bf16.mxu0 0
        %739 = vmatpush1.bf16.xpose.msra.mxu0 0
        %740 = vmatprep.subr.bf16.mxu0 0
        %741 = vmatpush1.bf16.xpose.msra.mxu0 %v724
        %742 = vmatprep.subr.bf16.mxu0 0
        %743 = vmatpush2.bf16.xpose.msra.mxu0 0
        %744 = vmatprep.subr.bf16.mxu0 0
        %745 = vmatpush2.bf16.xpose.msra.mxu0 0
        %746 = vmatprep.subr.bf16.mxu0 0
        %747 = vmatpush2.bf16.xpose.msra.mxu0 0
        %748 = vmatprep.subr.bf16.mxu0 0
        %749 = vmatpush2.bf16.xpose.msra.mxu0 0
        %750 = vmatprep.subr.bf16.mxu0 0
        %751 = vmatpush2.bf16.xpose.msra.mxu0 0
        %752 = vmatprep.subr.bf16.mxu0 0
        %753 = vmatpush2.bf16.xpose.msra.mxu0 0
        %754 = vmatprep.subr.bf16.mxu0 0
        %755 = vmatpush2.bf16.xpose.msra.mxu0 0
        %756 = vmatprep.subr.bf16.mxu0 0
        %757 = vmatpush2.bf16.xpose.msra.mxu0 0
        %758 = vmatprep.mubr.bf16.mxu0 0
        %759 = vmatmul.mubr.bf16.gmra.mxu0 %v721
        %v760 = vpop.f32.mrf.mxu0
        %v761 = vadd.f32 0.0, %v760
        %v762 = vpop.f32.mrf.mxu0
        %v763 = vpop.f32.mrf.mxu0
        %v764 = vadd.f32 0.0, %v763
        %v765 = vpop.f32.mrf.mxu0
        %766 = vdwg.mxu0
        %v767 = vsel %vm564, 1, 0
        %v768 = vsel %vm565, 1, 0
        %vm769 = vcmp.eq.s32.totalorder %v767, 1
        %vm770 = vcmp.eq.s32.totalorder %v768, 1
        %v771 = vsel %vm769, %v620, -1e+30
        %v772 = vsel %vm770, %v623, -1e+30
        %v773 = vsel %vm769, %v667, -1e+30
        %v774 = vsel %vm770, %v670, -1e+30
        %v775 = vsel %vm769, %v714, -1e+30
        %v776 = vsel %vm770, %v717, -1e+30
        %v777 = vsel %vm769, %v761, -1e+30
        %v778 = vsel %vm770, %v764, -1e+30
        %vm779 = vcmask 130048
        %v780 = vsel %vm779, %v771, -inf
        %781 = vmax.xlane.f32.xlu0 %v780
        %v782 = vpop.xlane.xlu0 %781
        %v783 = vsel %vm779, %v772, -inf
        %784 = vmax.xlane.f32.xlu0 %v783
        %v785 = vpop.xlane.xlu0 %784
        %v786 = vsel %vm779, %v773, -inf
        %787 = vmax.xlane.f32.xlu0 %v786
        %v788 = vpop.xlane.xlu0 %787
        %v789 = vsel %vm779, %v774, -inf
        %790 = vmax.xlane.f32.xlu0 %v789
        %v791 = vpop.xlane.xlu0 %790
        %v792 = vsel %vm779, %v775, -inf
        %793 = vmax.xlane.f32.xlu0 %v792
        %v794 = vpop.xlane.xlu0 %793
        %v795 = vsel %vm779, %v776, -inf
        %796 = vmax.xlane.f32.xlu0 %v795
        %v797 = vpop.xlane.xlu0 %796
        %v798 = vsel %vm779, %v777, -inf
        %799 = vmax.xlane.f32.xlu0 %v798
        %v800 = vpop.xlane.xlu0 %799
        %v801 = vsel %vm779, %v778, -inf
        %802 = vmax.xlane.f32.xlu0 %v801
        %v803 = vpop.xlane.xlu0 %802
        %v804 = vsub.f32 %v771, %v782
        %v805 = vsub.f32 %v772, %v785
        %v806 = vsub.f32 %v773, %v788
        %v807 = vsub.f32 %v774, %v791
        %v808 = vsub.f32 %v775, %v794
        %v809 = vsub.f32 %v776, %v797
        %v810 = vsub.f32 %v777, %v800
        %v811 = vsub.f32 %v778, %v803
        %v812 = vmul.f32 %v804, 1.442695
        %v813 = vpow.pop %v812
        %v814 = vmul.f32 %v805, 1.442695
        %v815 = vpow.pop %v814
        %v816 = vmul.f32 %v806, 1.442695
        %v817 = vpow.pop %v816
        %v818 = vmul.f32 %v807, 1.442695
        %v819 = vpow.pop %v818
        %v820 = vmul.f32 %v808, 1.442695
        %v821 = vpow.pop %v820
        %v822 = vmul.f32 %v809, 1.442695
        %v823 = vpow.pop %v822
        %v824 = vmul.f32 %v810, 1.442695
        %v825 = vpow.pop %v824
        %v826 = vmul.f32 %v811, 1.442695
        %v827 = vpow.pop %v826
        %v828 = vsel %vm779, %v813, 0.0
        %829 = vadd.xlane.f32.xlu0 %v828
        %v830 = vpop.xlane.xlu0 %829
        %v831 = vsel %vm779, %v815, 0.0
        %832 = vadd.xlane.f32.xlu0 %v831
        %v833 = vpop.xlane.xlu0 %832
        %v834 = vsel %vm779, %v817, 0.0
        %835 = vadd.xlane.f32.xlu0 %v834
        %v836 = vpop.xlane.xlu0 %835
        %v837 = vsel %vm779, %v819, 0.0
        %838 = vadd.xlane.f32.xlu0 %v837
        %v839 = vpop.xlane.xlu0 %838
        %v840 = vsel %vm779, %v821, 0.0
        %841 = vadd.xlane.f32.xlu0 %v840
        %v842 = vpop.xlane.xlu0 %841
        %v843 = vsel %vm779, %v823, 0.0
        %844 = vadd.xlane.f32.xlu0 %v843
        %v845 = vpop.xlane.xlu0 %844
        %v846 = vsel %vm779, %v825, 0.0
        %847 = vadd.xlane.f32.xlu0 %v846
        %v848 = vpop.xlane.xlu0 %847
        %v849 = vsel %vm779, %v827, 0.0
        %850 = vadd.xlane.f32.xlu0 %v849
        %v851 = vpop.xlane.xlu0 %850
        %v852 = vrcp.pop %v830
        %v853 = vrcp.pop %v833
        %v854 = vrcp.pop %v836
        %v855 = vrcp.pop %v839
        %v856 = vrcp.pop %v842
        %v857 = vrcp.pop %v845
        %v858 = vrcp.pop %v848
        %v859 = vrcp.pop %v851
        %v860 = vmul.f32 %v813, %v852
        %v861 = vmul.f32 %v815, %v853
        %v862 = vmul.f32 %v817, %v854
        %v863 = vmul.f32 %v819, %v855
        %v864 = vmul.f32 %v821, %v856
        %v865 = vmul.f32 %v823, %v857
        %v866 = vmul.f32 %v825, %v858
        %v867 = vmul.f32 %v827, %v859
        %v868 = vpack.c.bf16 %v861, %v860
        %v869 = vpack.c.bf16 %v863, %v862
        %v870 = vpack.c.bf16 %v865, %v864
        %v871 = vpack.c.bf16 %v867, %v866
        %v873 = vsel %vm779, %v868, 0
        %875 = vmatprep.subr.bf16.mxu0 0
        %876 = vmatpush1.bf16.msra.mxu0 0
        %877 = vmatprep.subr.bf16.mxu0 0
        %878 = vmatpush1.bf16.msra.mxu0 0
        %879 = vmatprep.subr.bf16.mxu0 0
        %880 = vmatpush1.bf16.msra.mxu0 0
        %881 = vmatprep.subr.bf16.mxu0 0
        %882 = vmatpush1.bf16.msra.mxu0 0
        %883 = vmatprep.subr.bf16.mxu0 0
        %884 = vmatpush1.bf16.msra.mxu0 0
        %885 = vmatprep.subr.bf16.mxu0 0
        %886 = vmatpush1.bf16.msra.mxu0 0
        %887 = vmatprep.subr.bf16.mxu0 0
        %888 = vmatpush1.bf16.msra.mxu0 0
        %889 = vmatprep.subr.bf16.mxu0 0
        %890 = vmatpush1.bf16.msra.mxu0 %v574
        %891 = vmatprep.subr.bf16.mxu0 0
        %892 = vmatpush2.bf16.msra.mxu0 0
        %893 = vmatprep.subr.bf16.mxu0 0
        %894 = vmatpush2.bf16.msra.mxu0 0
        %895 = vmatprep.subr.bf16.mxu0 0
        %896 = vmatpush2.bf16.msra.mxu0 0
        %897 = vmatprep.subr.bf16.mxu0 0
        %898 = vmatpush2.bf16.msra.mxu0 0
        %899 = vmatprep.subr.bf16.mxu0 0
        %900 = vmatpush2.bf16.msra.mxu0 0
        %901 = vmatprep.subr.bf16.mxu0 0
        %902 = vmatpush2.bf16.msra.mxu0 0
        %903 = vmatprep.subr.bf16.mxu0 0
        %904 = vmatpush2.bf16.msra.mxu0 0
        %905 = vmatprep.subr.bf16.mxu0 0
        %906 = vmatpush2.bf16.msra.mxu0 0
        %907 = vmatprep.mubr.bf16.mxu0 0
        %908 = vmatmul.mubr.bf16.gmra.mxu0 %v873
        %v909 = vpop.f32.mrf.mxu0
        %v910 = vadd.f32 0.0, %v909
        %v911 = vpop.f32.mrf.mxu0
        %v912 = vpop.f32.mrf.mxu0
        %v913 = vadd.f32 0.0, %v912
        %v914 = vpop.f32.mrf.mxu0
        %915 = vdwg.mxu0
        %v917 = vsel %vm779, %v869, 0
        %919 = vmatprep.subr.bf16.mxu0 0
        %920 = vmatpush1.bf16.msra.mxu0 0
        %921 = vmatprep.subr.bf16.mxu0 0
        %922 = vmatpush1.bf16.msra.mxu0 0
        %923 = vmatprep.subr.bf16.mxu0 0
        %924 = vmatpush1.bf16.msra.mxu0 0
        %925 = vmatprep.subr.bf16.mxu0 0
        %926 = vmatpush1.bf16.msra.mxu0 0
        %927 = vmatprep.subr.bf16.mxu0 0
        %928 = vmatpush1.bf16.msra.mxu0 0
        %929 = vmatprep.subr.bf16.mxu0 0
        %930 = vmatpush1.bf16.msra.mxu0 0
        %931 = vmatprep.subr.bf16.mxu0 0
        %932 = vmatpush1.bf16.msra.mxu0 0
        %933 = vmatprep.subr.bf16.mxu0 0
        %934 = vmatpush1.bf16.msra.mxu0 %v575
        %935 = vmatprep.subr.bf16.mxu0 0
        %936 = vmatpush2.bf16.msra.mxu0 0
        %937 = vmatprep.subr.bf16.mxu0 0
        %938 = vmatpush2.bf16.msra.mxu0 0
        %939 = vmatprep.subr.bf16.mxu0 0
        %940 = vmatpush2.bf16.msra.mxu0 0
        %941 = vmatprep.subr.bf16.mxu0 0
        %942 = vmatpush2.bf16.msra.mxu0 0
        %943 = vmatprep.subr.bf16.mxu0 0
        %944 = vmatpush2.bf16.msra.mxu0 0
        %945 = vmatprep.subr.bf16.mxu0 0
        %946 = vmatpush2.bf16.msra.mxu0 0
        %947 = vmatprep.subr.bf16.mxu0 0
        %948 = vmatpush2.bf16.msra.mxu0 0
        %949 = vmatprep.subr.bf16.mxu0 0
        %950 = vmatpush2.bf16.msra.mxu0 0
        %951 = vmatprep.mubr.bf16.mxu0 0
        %952 = vmatmul.mubr.bf16.gmra.mxu0 %v917
        %v953 = vpop.f32.mrf.mxu0
        %v954 = vadd.f32 0.0, %v953
        %v955 = vpop.f32.mrf.mxu0
        %v956 = vpop.f32.mrf.mxu0
        %v957 = vadd.f32 0.0, %v956
        %v958 = vpop.f32.mrf.mxu0
        %959 = vdwg.mxu0
        %v961 = vsel %vm779, %v870, 0
        %963 = vmatprep.subr.bf16.mxu0 0
        %964 = vmatpush1.bf16.msra.mxu0 0
        %965 = vmatprep.subr.bf16.mxu0 0
        %966 = vmatpush1.bf16.msra.mxu0 0
        %967 = vmatprep.subr.bf16.mxu0 0
        %968 = vmatpush1.bf16.msra.mxu0 0
        %969 = vmatprep.subr.bf16.mxu0 0
        %970 = vmatpush1.bf16.msra.mxu0 0
        %971 = vmatprep.subr.bf16.mxu0 0
        %972 = vmatpush1.bf16.msra.mxu0 0
        %973 = vmatprep.subr.bf16.mxu0 0
        %974 = vmatpush1.bf16.msra.mxu0 0
        %975 = vmatprep.subr.bf16.mxu0 0
        %976 = vmatpush1.bf16.msra.mxu0 0
        %977 = vmatprep.subr.bf16.mxu0 0
        %978 = vmatpush1.bf16.msra.mxu0 %v576
        %979 = vmatprep.subr.bf16.mxu0 0
        %980 = vmatpush2.bf16.msra.mxu0 0
        %981 = vmatprep.subr.bf16.mxu0 0
        %982 = vmatpush2.bf16.msra.mxu0 0
        %983 = vmatprep.subr.bf16.mxu0 0
        %984 = vmatpush2.bf16.msra.mxu0 0
        %985 = vmatprep.subr.bf16.mxu0 0
        %986 = vmatpush2.bf16.msra.mxu0 0
        %987 = vmatprep.subr.bf16.mxu0 0
        %988 = vmatpush2.bf16.msra.mxu0 0
        %989 = vmatprep.subr.bf16.mxu0 0
        %990 = vmatpush2.bf16.msra.mxu0 0
        %991 = vmatprep.subr.bf16.mxu0 0
        %992 = vmatpush2.bf16.msra.mxu0 0
        %993 = vmatprep.subr.bf16.mxu0 0
        %994 = vmatpush2.bf16.msra.mxu0 0
        %995 = vmatprep.mubr.bf16.mxu0 0
        %996 = vmatmul.mubr.bf16.gmra.mxu0 %v961
        %v997 = vpop.f32.mrf.mxu0
        %v998 = vadd.f32 0.0, %v997
        %v999 = vpop.f32.mrf.mxu0
        %v1000 = vpop.f32.mrf.mxu0
        %v1001 = vadd.f32 0.0, %v1000
        %v1002 = vpop.f32.mrf.mxu0
        %1003 = vdwg.mxu0
        %v1005 = vsel %vm779, %v871, 0
        %1007 = vmatprep.subr.bf16.mxu0 0
        %1008 = vmatpush1.bf16.msra.mxu0 0
        %1009 = vmatprep.subr.bf16.mxu0 0
        %1010 = vmatpush1.bf16.msra.mxu0 0
        %1011 = vmatprep.subr.bf16.mxu0 0
        %1012 = vmatpush1.bf16.msra.mxu0 0
        %1013 = vmatprep.subr.bf16.mxu0 0
        %1014 = vmatpush1.bf16.msra.mxu0 0
        %1015 = vmatprep.subr.bf16.mxu0 0
        %1016 = vmatpush1.bf16.msra.mxu0 0
        %1017 = vmatprep.subr.bf16.mxu0 0
        %1018 = vmatpush1.bf16.msra.mxu0 0
        %1019 = vmatprep.subr.bf16.mxu0 0
        %1020 = vmatpush1.bf16.msra.mxu0 0
        %1021 = vmatprep.subr.bf16.mxu0 0
        %1022 = vmatpush1.bf16.msra.mxu0 %v577
        %1023 = vmatprep.subr.bf16.mxu0 0
        %1024 = vmatpush2.bf16.msra.mxu0 0
        %1025 = vmatprep.subr.bf16.mxu0 0
        %1026 = vmatpush2.bf16.msra.mxu0 0
        %1027 = vmatprep.subr.bf16.mxu0 0
        %1028 = vmatpush2.bf16.msra.mxu0 0
        %1029 = vmatprep.subr.bf16.mxu0 0
        %1030 = vmatpush2.bf16.msra.mxu0 0
        %1031 = vmatprep.subr.bf16.mxu0 0
        %1032 = vmatpush2.bf16.msra.mxu0 0
        %1033 = vmatprep.subr.bf16.mxu0 0
        %1034 = vmatpush2.bf16.msra.mxu0 0
        %1035 = vmatprep.subr.bf16.mxu0 0
        %1036 = vmatpush2.bf16.msra.mxu0 0
        %1037 = vmatprep.subr.bf16.mxu0 0
        %1038 = vmatpush2.bf16.msra.mxu0 0
        %1039 = vmatprep.mubr.bf16.mxu0 0
        %1040 = vmatmul.mubr.bf16.gmra.mxu0 %v1005
        %v1041 = vpop.f32.mrf.mxu0
        %v1042 = vadd.f32 0.0, %v1041
        %v1043 = vpop.f32.mrf.mxu0
        %v1044 = vpop.f32.mrf.mxu0
        %v1045 = vadd.f32 0.0, %v1044
        %v1046 = vpop.f32.mrf.mxu0
        %1047 = vdwg.mxu0
        %v1048 = vpack.c.bf16 %v913, %v910
        %v1049 = vpack.c.bf16 %v957, %v954
        %v1050 = vpack.c.bf16 %v1001, %v998
        %v1051 = vpack.c.bf16 %v1045, %v1042
        %v1056 = vunpack.c.l.b16 %v1048
        %v1057 = vunpack.c.h.b16 %v1048
        %v1058 = vunpack.c.l.b16 %v1049
        %v1059 = vunpack.c.h.b16 %v1049
        %v1060 = vunpack.c.l.b16 %v1050
        %v1061 = vunpack.c.h.b16 %v1050
        %v1062 = vunpack.c.l.b16 %v1051
        %v1063 = vunpack.c.h.b16 %v1051
        %v1064 = vpack.c.b16 %v1056, %v1056
        %v1065 = vpack.c.b16 %v1057, %v1057
        %v1066 = vpack.c.b16 %v1058, %v1058
        %v1067 = vpack.c.b16 %v1059, %v1059
        %v1068 = vpack.c.b16 %v1060, %v1060
        %v1069 = vpack.c.b16 %v1061, %v1061
        %v1070 = vpack.c.b16 %v1062, %v1062
        %v1071 = vpack.c.b16 %v1063, %v1063
        %vm1080 = vcmask 257024
        %1081 = vst.msk [vmem:[#allocation2] sm:$0xf] %vm1080, %v1064
        %1082 = vst.msk [vmem:[#allocation2 + $0x4] sm:$0xf] %vm1080, %v1065
        %1083 = vst.msk [vmem:[#allocation2 + $0x8] sm:$0xf] %vm1080, %v1066
        %1084 = vst.msk [vmem:[#allocation2 + $0xc] sm:$0xf] %vm1080, %v1067
        %1085 = vst.msk [vmem:[#allocation2 + $0x10] sm:$0xf] %vm1080, %v1068
        %1086 = vst.msk [vmem:[#allocation2 + $0x14] sm:$0xf] %vm1080, %v1069
        %1087 = vst.msk [vmem:[#allocation2 + $0x18] sm:$0xf] %vm1080, %v1070
        %1088 = vst.msk [vmem:[#allocation2 + $0x1c] sm:$0xf] %vm1080, %v1071
        %1090 = vrot.lane.b32.xlu0 %v566, 96
        %v1091 = vpop.permute.xlu0 %1090
        %1093 = vrot.lane.b32.xlu0 %v570, 96
        %v1094 = vpop.permute.xlu0 %1093
        %v1096 = vsel %vm578, %v1091, 0
        %v1099 = vsel %vm578, %v1094, 0
        %1101 = vmatprep.subr.bf16.mxu0 0
        %1102 = vmatpush1.bf16.xpose.msra.mxu0 0
        %1103 = vmatprep.subr.bf16.mxu0 0
        %1104 = vmatpush1.bf16.xpose.msra.mxu0 0
        %1105 = vmatprep.subr.bf16.mxu0 0
        %1106 = vmatpush1.bf16.xpose.msra.mxu0 0
        %1107 = vmatprep.subr.bf16.mxu0 0
        %1108 = vmatpush1.bf16.xpose.msra.mxu0 0
        %1109 = vmatprep.subr.bf16.mxu0 0
        %1110 = vmatpush1.bf16.xpose.msra.mxu0 0
        %1111 = vmatprep.subr.bf16.mxu0 0
        %1112 = vmatpush1.bf16.xpose.msra.mxu0 0
        %1113 = vmatprep.subr.bf16.mxu0 0
        %1114 = vmatpush1.bf16.xpose.msra.mxu0 0
        %1115 = vmatprep.subr.bf16.mxu0 0
        %1116 = vmatpush1.bf16.xpose.msra.mxu0 %v1099
        %1117 = vmatprep.subr.bf16.mxu0 0
        %1118 = vmatpush2.bf16.xpose.msra.mxu0 0
        %1119 = vmatprep.subr.bf16.mxu0 0
        %1120 = vmatpush2.bf16.xpose.msra.mxu0 0
        %1121 = vmatprep.subr.bf16.mxu0 0
        %1122 = vmatpush2.bf16.xpose.msra.mxu0 0
        %1123 = vmatprep.subr.bf16.mxu0 0
        %1124 = vmatpush2.bf16.xpose.msra.mxu0 0
        %1125 = vmatprep.subr.bf16.mxu0 0
        %1126 = vmatpush2.bf16.xpose.msra.mxu0 0
        %1127 = vmatprep.subr.bf16.mxu0 0
        %1128 = vmatpush2.bf16.xpose.msra.mxu0 0
        %1129 = vmatprep.subr.bf16.mxu0 0
        %1130 = vmatpush2.bf16.xpose.msra.mxu0 0
        %1131 = vmatprep.subr.bf16.mxu0 0
        %1132 = vmatpush2.bf16.xpose.msra.mxu0 0
        %1133 = vmatprep.mubr.bf16.mxu0 0
        %1134 = vmatmul.mubr.bf16.gmra.mxu0 %v1096
        %v1135 = vpop.f32.mrf.mxu0
        %v1136 = vadd.f32 0.0, %v1135
        %v1137 = vpop.f32.mrf.mxu0
        %v1138 = vpop.f32.mrf.mxu0
        %v1139 = vadd.f32 0.0, %v1138
        %v1140 = vpop.f32.mrf.mxu0
        %1141 = vdwg.mxu0
        %1143 = vrot.lane.b32.xlu0 %v567, 96
        %v1144 = vpop.permute.xlu0 %1143
        %1146 = vrot.lane.b32.xlu0 %v571, 96
        %v1147 = vpop.permute.xlu0 %1146
        %v1149 = vsel %vm578, %v1144, 0
        %v1152 = vsel %vm578, %v1147, 0
        %1154 = vmatprep.subr.bf16.mxu0 0
        %1155 = vmatpush1.bf16.xpose.msra.mxu0 0
        %1156 = vmatprep.subr.bf16.mxu0 0
        %1157 = vmatpush1.bf16.xpose.msra.mxu0 0
        %1158 = vmatprep.subr.bf16.mxu0 0
        %1159 = vmatpush1.bf16.xpose.msra.mxu0 0
        %1160 = vmatprep.subr.bf16.mxu0 0
        %1161 = vmatpush1.bf16.xpose.msra.mxu0 0
        %1162 = vmatprep.subr.bf16.mxu0 0
        %1163 = vmatpush1.bf16.xpose.msra.mxu0 0
        %1164 = vmatprep.subr.bf16.mxu0 0
        %1165 = vmatpush1.bf16.xpose.msra.mxu0 0
        %1166 = vmatprep.subr.bf16.mxu0 0
        %1167 = vmatpush1.bf16.xpose.msra.mxu0 0
        %1168 = vmatprep.subr.bf16.mxu0 0
        %1169 = vmatpush1.bf16.xpose.msra.mxu0 %v1152
        %1170 = vmatprep.subr.bf16.mxu0 0
        %1171 = vmatpush2.bf16.xpose.msra.mxu0 0
        %1172 = vmatprep.subr.bf16.mxu0 0
        %1173 = vmatpush2.bf16.xpose.msra.mxu0 0
        %1174 = vmatprep.subr.bf16.mxu0 0
        %1175 = vmatpush2.bf16.xpose.msra.mxu0 0
        %1176 = vmatprep.subr.bf16.mxu0 0
        %1177 = vmatpush2.bf16.xpose.msra.mxu0 0
        %1178 = vmatprep.subr.bf16.mxu0 0
        %1179 = vmatpush2.bf16.xpose.msra.mxu0 0
        %1180 = vmatprep.subr.bf16.mxu0 0
        %1181 = vmatpush2.bf16.xpose.msra.mxu0 0
        %1182 = vmatprep.subr.bf16.mxu0 0
        %1183 = vmatpush2.bf16.xpose.msra.mxu0 0
        %1184 = vmatprep.subr.bf16.mxu0 0
        %1185 = vmatpush2.bf16.xpose.msra.mxu0 0
        %1186 = vmatprep.mubr.bf16.mxu0 0
        %1187 = vmatmul.mubr.bf16.gmra.mxu0 %v1149
        %v1188 = vpop.f32.mrf.mxu0
        %v1189 = vadd.f32 0.0, %v1188
        %v1190 = vpop.f32.mrf.mxu0
        %v1191 = vpop.f32.mrf.mxu0
        %v1192 = vadd.f32 0.0, %v1191
        %v1193 = vpop.f32.mrf.mxu0
        %1194 = vdwg.mxu0
        %1196 = vrot.lane.b32.xlu0 %v568, 96
        %v1197 = vpop.permute.xlu0 %1196
        %1199 = vrot.lane.b32.xlu0 %v572, 96
        %v1200 = vpop.permute.xlu0 %1199
        %v1202 = vsel %vm578, %v1197, 0
        %v1205 = vsel %vm578, %v1200, 0
        %1207 = vmatprep.subr.bf16.mxu0 0
        %1208 = vmatpush1.bf16.xpose.msra.mxu0 0
        %1209 = vmatprep.subr.bf16.mxu0 0
        %1210 = vmatpush1.bf16.xpose.msra.mxu0 0
        %1211 = vmatprep.subr.bf16.mxu0 0
        %1212 = vmatpush1.bf16.xpose.msra.mxu0 0
        %1213 = vmatprep.subr.bf16.mxu0 0
        %1214 = vmatpush1.bf16.xpose.msra.mxu0 0
        %1215 = vmatprep.subr.bf16.mxu0 0
        %1216 = vmatpush1.bf16.xpose.msra.mxu0 0
        %1217 = vmatprep.subr.bf16.mxu0 0
        %1218 = vmatpush1.bf16.xpose.msra.mxu0 0
        %1219 = vmatprep.subr.bf16.mxu0 0
        %1220 = vmatpush1.bf16.xpose.msra.mxu0 0
        %1221 = vmatprep.subr.bf16.mxu0 0
        %1222 = vmatpush1.bf16.xpose.msra.mxu0 %v1205
        %1223 = vmatprep.subr.bf16.mxu0 0
        %1224 = vmatpush2.bf16.xpose.msra.mxu0 0
        %1225 = vmatprep.subr.bf16.mxu0 0
        %1226 = vmatpush2.bf16.xpose.msra.mxu0 0
        %1227 = vmatprep.subr.bf16.mxu0 0
        %1228 = vmatpush2.bf16.xpose.msra.mxu0 0
        %1229 = vmatprep.subr.bf16.mxu0 0
        %1230 = vmatpush2.bf16.xpose.msra.mxu0 0
        %1231 = vmatprep.subr.bf16.mxu0 0
        %1232 = vmatpush2.bf16.xpose.msra.mxu0 0
        %1233 = vmatprep.subr.bf16.mxu0 0
        %1234 = vmatpush2.bf16.xpose.msra.mxu0 0
        %1235 = vmatprep.subr.bf16.mxu0 0
        %1236 = vmatpush2.bf16.xpose.msra.mxu0 0
        %1237 = vmatprep.subr.bf16.mxu0 0
        %1238 = vmatpush2.bf16.xpose.msra.mxu0 0
        %1239 = vmatprep.mubr.bf16.mxu0 0
        %1240 = vmatmul.mubr.bf16.gmra.mxu0 %v1202
        %v1241 = vpop.f32.mrf.mxu0
        %v1242 = vadd.f32 0.0, %v1241
        %v1243 = vpop.f32.mrf.mxu0
        %v1244 = vpop.f32.mrf.mxu0
        %v1245 = vadd.f32 0.0, %v1244
        %v1246 = vpop.f32.mrf.mxu0
        %1247 = vdwg.mxu0
        %1249 = vrot.lane.b32.xlu0 %v569, 96
        %v1250 = vpop.permute.xlu0 %1249
        %1252 = vrot.lane.b32.xlu0 %v573, 96
        %v1253 = vpop.permute.xlu0 %1252
        %v1255 = vsel %vm578, %v1250, 0
        %v1258 = vsel %vm578, %v1253, 0
        %1260 = vmatprep.subr.bf16.mxu0 0
        %1261 = vmatpush1.bf16.xpose.msra.mxu0 0
        %1262 = vmatprep.subr.bf16.mxu0 0
        %1263 = vmatpush1.bf16.xpose.msra.mxu0 0
        %1264 = vmatprep.subr.bf16.mxu0 0
        %1265 = vmatpush1.bf16.xpose.msra.mxu0 0
        %1266 = vmatprep.subr.bf16.mxu0 0
        %1267 = vmatpush1.bf16.xpose.msra.mxu0 0
        %1268 = vmatprep.subr.bf16.mxu0 0
        %1269 = vmatpush1.bf16.xpose.msra.mxu0 0
        %1270 = vmatprep.subr.bf16.mxu0 0
        %1271 = vmatpush1.bf16.xpose.msra.mxu0 0
        %1272 = vmatprep.subr.bf16.mxu0 0
        %1273 = vmatpush1.bf16.xpose.msra.mxu0 0
        %1274 = vmatprep.subr.bf16.mxu0 0
        %1275 = vmatpush1.bf16.xpose.msra.mxu0 %v1258
        %1276 = vmatprep.subr.bf16.mxu0 0
        %1277 = vmatpush2.bf16.xpose.msra.mxu0 0
        %1278 = vmatprep.subr.bf16.mxu0 0
        %1279 = vmatpush2.bf16.xpose.msra.mxu0 0
        %1280 = vmatprep.subr.bf16.mxu0 0
        %1281 = vmatpush2.bf16.xpose.msra.mxu0 0
        %1282 = vmatprep.subr.bf16.mxu0 0
        %1283 = vmatpush2.bf16.xpose.msra.mxu0 0
        %1284 = vmatprep.subr.bf16.mxu0 0
        %1285 = vmatpush2.bf16.xpose.msra.mxu0 0
        %1286 = vmatprep.subr.bf16.mxu0 0
        %1287 = vmatpush2.bf16.xpose.msra.mxu0 0
        %1288 = vmatprep.subr.bf16.mxu0 0
        %1289 = vmatpush2.bf16.xpose.msra.mxu0 0
        %1290 = vmatprep.subr.bf16.mxu0 0
        %1291 = vmatpush2.bf16.xpose.msra.mxu0 0
        %1292 = vmatprep.mubr.bf16.mxu0 0
        %1293 = vmatmul.mubr.bf16.gmra.mxu0 %v1255
        %v1294 = vpop.f32.mrf.mxu0
        %v1295 = vadd.f32 0.0, %v1294
        %v1296 = vpop.f32.mrf.mxu0
        %v1297 = vpop.f32.mrf.mxu0
        %v1298 = vadd.f32 0.0, %v1297
        %v1299 = vpop.f32.mrf.mxu0
        %1300 = vdwg.mxu0
        %v1301 = vsel %vm769, %v1136, -1e+30
        %v1302 = vsel %vm770, %v1139, -1e+30
        %v1303 = vsel %vm769, %v1189, -1e+30
        %v1304 = vsel %vm770, %v1192, -1e+30
        %v1305 = vsel %vm769, %v1242, -1e+30
        %v1306 = vsel %vm770, %v1245, -1e+30
        %v1307 = vsel %vm769, %v1295, -1e+30
        %v1308 = vsel %vm770, %v1298, -1e+30
        %v1309 = vsel %vm779, %v1301, -inf
        %1310 = vmax.xlane.f32.xlu0 %v1309
        %v1311 = vpop.xlane.xlu0 %1310
        %v1312 = vsel %vm779, %v1302, -inf
        %1313 = vmax.xlane.f32.xlu0 %v1312
        %v1314 = vpop.xlane.xlu0 %1313
        %v1315 = vsel %vm779, %v1303, -inf
        %1316 = vmax.xlane.f32.xlu0 %v1315
        %v1317 = vpop.xlane.xlu0 %1316
        %v1318 = vsel %vm779, %v1304, -inf
        %1319 = vmax.xlane.f32.xlu0 %v1318
        %v1320 = vpop.xlane.xlu0 %1319
        %v1321 = vsel %vm779, %v1305, -inf
        %1322 = vmax.xlane.f32.xlu0 %v1321
        %v1323 = vpop.xlane.xlu0 %1322
        %v1324 = vsel %vm779, %v1306, -inf
        %1325 = vmax.xlane.f32.xlu0 %v1324
        %v1326 = vpop.xlane.xlu0 %1325
        %v1327 = vsel %vm779, %v1307, -inf
        %1328 = vmax.xlane.f32.xlu0 %v1327
        %v1329 = vpop.xlane.xlu0 %1328
        %v1330 = vsel %vm779, %v1308, -inf
        %1331 = vmax.xlane.f32.xlu0 %v1330
        %v1332 = vpop.xlane.xlu0 %1331
        %v1333 = vsub.f32 %v1301, %v1311
        %v1334 = vsub.f32 %v1302, %v1314
        %v1335 = vsub.f32 %v1303, %v1317
        %v1336 = vsub.f32 %v1304, %v1320
        %v1337 = vsub.f32 %v1305, %v1323
        %v1338 = vsub.f32 %v1306, %v1326
        %v1339 = vsub.f32 %v1307, %v1329
        %v1340 = vsub.f32 %v1308, %v1332
        %v1341 = vmul.f32 %v1333, 1.442695
        %v1342 = vpow.pop %v1341
        %v1343 = vmul.f32 %v1334, 1.442695
        %v1344 = vpow.pop %v1343
        %v1345 = vmul.f32 %v1335, 1.442695
        %v1346 = vpow.pop %v1345
        %v1347 = vmul.f32 %v1336, 1.442695
        %v1348 = vpow.pop %v1347
        %v1349 = vmul.f32 %v1337, 1.442695
        %v1350 = vpow.pop %v1349
        %v1351 = vmul.f32 %v1338, 1.442695
        %v1352 = vpow.pop %v1351
        %v1353 = vmul.f32 %v1339, 1.442695
        %v1354 = vpow.pop %v1353
        %v1355 = vmul.f32 %v1340, 1.442695
        %v1356 = vpow.pop %v1355
        %v1357 = vsel %vm779, %v1342, 0.0
        %1358 = vadd.xlane.f32.xlu0 %v1357
        %v1359 = vpop.xlane.xlu0 %1358
        %v1360 = vsel %vm779, %v1344, 0.0
        %1361 = vadd.xlane.f32.xlu0 %v1360
        %v1362 = vpop.xlane.xlu0 %1361
        %v1363 = vsel %vm779, %v1346, 0.0
        %1364 = vadd.xlane.f32.xlu0 %v1363
        %v1365 = vpop.xlane.xlu0 %1364
        %v1366 = vsel %vm779, %v1348, 0.0
        %1367 = vadd.xlane.f32.xlu0 %v1366
        %v1368 = vpop.xlane.xlu0 %1367
        %v1369 = vsel %vm779, %v1350, 0.0
        %1370 = vadd.xlane.f32.xlu0 %v1369
        %v1371 = vpop.xlane.xlu0 %1370
        %v1372 = vsel %vm779, %v1352, 0.0
        %1373 = vadd.xlane.f32.xlu0 %v1372
        %v1374 = vpop.xlane.xlu0 %1373
        %v1375 = vsel %vm779, %v1354, 0.0
        %1376 = vadd.xlane.f32.xlu0 %v1375
        %v1377 = vpop.xlane.xlu0 %1376
        %v1378 = vsel %vm779, %v1356, 0.0
        %1379 = vadd.xlane.f32.xlu0 %v1378
        %v1380 = vpop.xlane.xlu0 %1379
        %v1381 = vrcp.pop %v1359
        %v1382 = vrcp.pop %v1362
        %v1383 = vrcp.pop %v1365
        %v1384 = vrcp.pop %v1368
        %v1385 = vrcp.pop %v1371
        %v1386 = vrcp.pop %v1374
        %v1387 = vrcp.pop %v1377
        %v1388 = vrcp.pop %v1380
        %v1389 = vmul.f32 %v1342, %v1381
        %v1390 = vmul.f32 %v1344, %v1382
        %v1391 = vmul.f32 %v1346, %v1383
        %v1392 = vmul.f32 %v1348, %v1384
        %v1393 = vmul.f32 %v1350, %v1385
        %v1394 = vmul.f32 %v1352, %v1386
        %v1395 = vmul.f32 %v1354, %v1387
        %v1396 = vmul.f32 %v1356, %v1388
        %v1397 = vpack.c.bf16 %v1390, %v1389
        %v1398 = vpack.c.bf16 %v1392, %v1391
        %v1399 = vpack.c.bf16 %v1394, %v1393
        %v1400 = vpack.c.bf16 %v1396, %v1395
        %1402 = vrot.lane.b32.xlu0 %v574, 96
        %v1403 = vpop.permute.xlu0 %1402
        %v1406 = vsel %vm779, %v1397, 0
        %1408 = vmatprep.subr.bf16.mxu0 0
        %1409 = vmatpush1.bf16.msra.mxu0 0
        %1410 = vmatprep.subr.bf16.mxu0 0
        %1411 = vmatpush1.bf16.msra.mxu0 0
        %1412 = vmatprep.subr.bf16.mxu0 0
        %1413 = vmatpush1.bf16.msra.mxu0 0
        %1414 = vmatprep.subr.bf16.mxu0 0
        %1415 = vmatpush1.bf16.msra.mxu0 0
        %1416 = vmatprep.subr.bf16.mxu0 0
        %1417 = vmatpush1.bf16.msra.mxu0 0
        %1418 = vmatprep.subr.bf16.mxu0 0
        %1419 = vmatpush1.bf16.msra.mxu0 0
        %1420 = vmatprep.subr.bf16.mxu0 0
        %1421 = vmatpush1.bf16.msra.mxu0 0
        %1422 = vmatprep.subr.bf16.mxu0 0
        %1423 = vmatpush1.bf16.msra.mxu0 %v1403
        %1424 = vmatprep.subr.bf16.mxu0 0
        %1425 = vmatpush2.bf16.msra.mxu0 0
        %1426 = vmatprep.subr.bf16.mxu0 0
        %1427 = vmatpush2.bf16.msra.mxu0 0
        %1428 = vmatprep.subr.bf16.mxu0 0
        %1429 = vmatpush2.bf16.msra.mxu0 0
        %1430 = vmatprep.subr.bf16.mxu0 0
        %1431 = vmatpush2.bf16.msra.mxu0 0
        %1432 = vmatprep.subr.bf16.mxu0 0
        %1433 = vmatpush2.bf16.msra.mxu0 0
        %1434 = vmatprep.subr.bf16.mxu0 0
        %1435 = vmatpush2.bf16.msra.mxu0 0
        %1436 = vmatprep.subr.bf16.mxu0 0
        %1437 = vmatpush2.bf16.msra.mxu0 0
        %1438 = vmatprep.subr.bf16.mxu0 0
        %1439 = vmatpush2.bf16.msra.mxu0 0
        %1440 = vmatprep.mubr.bf16.mxu0 0
        %1441 = vmatmul.mubr.bf16.gmra.mxu0 %v1406
        %v1442 = vpop.f32.mrf.mxu0
        %v1443 = vadd.f32 0.0, %v1442
        %v1444 = vpop.f32.mrf.mxu0
        %v1445 = vpop.f32.mrf.mxu0
        %v1446 = vadd.f32 0.0, %v1445
        %v1447 = vpop.f32.mrf.mxu0
        %1448 = vdwg.mxu0
        %1450 = vrot.lane.b32.xlu0 %v575, 96
        %v1451 = vpop.permute.xlu0 %1450
        %v1454 = vsel %vm779, %v1398, 0
        %1456 = vmatprep.subr.bf16.mxu0 0
        %1457 = vmatpush1.bf16.msra.mxu0 0
        %1458 = vmatprep.subr.bf16.mxu0 0
        %1459 = vmatpush1.bf16.msra.mxu0 0
        %1460 = vmatprep.subr.bf16.mxu0 0
        %1461 = vmatpush1.bf16.msra.mxu0 0
        %1462 = vmatprep.subr.bf16.mxu0 0
        %1463 = vmatpush1.bf16.msra.mxu0 0
        %1464 = vmatprep.subr.bf16.mxu0 0
        %1465 = vmatpush1.bf16.msra.mxu0 0
        %1466 = vmatprep.subr.bf16.mxu0 0
        %1467 = vmatpush1.bf16.msra.mxu0 0
        %1468 = vmatprep.subr.bf16.mxu0 0
        %1469 = vmatpush1.bf16.msra.mxu0 0
        %1470 = vmatprep.subr.bf16.mxu0 0
        %1471 = vmatpush1.bf16.msra.mxu0 %v1451
        %1472 = vmatprep.subr.bf16.mxu0 0
        %1473 = vmatpush2.bf16.msra.mxu0 0
        %1474 = vmatprep.subr.bf16.mxu0 0
        %1475 = vmatpush2.bf16.msra.mxu0 0
        %1476 = vmatprep.subr.bf16.mxu0 0
        %1477 = vmatpush2.bf16.msra.mxu0 0
        %1478 = vmatprep.subr.bf16.mxu0 0
        %1479 = vmatpush2.bf16.msra.mxu0 0
        %1480 = vmatprep.subr.bf16.mxu0 0
        %1481 = vmatpush2.bf16.msra.mxu0 0
        %1482 = vmatprep.subr.bf16.mxu0 0
        %1483 = vmatpush2.bf16.msra.mxu0 0
        %1484 = vmatprep.subr.bf16.mxu0 0
        %1485 = vmatpush2.bf16.msra.mxu0 0
        %1486 = vmatprep.subr.bf16.mxu0 0
        %1487 = vmatpush2.bf16.msra.mxu0 0
        %1488 = vmatprep.mubr.bf16.mxu0 0
        %1489 = vmatmul.mubr.bf16.gmra.mxu0 %v1454
        %v1490 = vpop.f32.mrf.mxu0
        %v1491 = vadd.f32 0.0, %v1490
        %v1492 = vpop.f32.mrf.mxu0
        %v1493 = vpop.f32.mrf.mxu0
        %v1494 = vadd.f32 0.0, %v1493
        %v1495 = vpop.f32.mrf.mxu0
        %1496 = vdwg.mxu0
        %1498 = vrot.lane.b32.xlu0 %v576, 96
        %v1499 = vpop.permute.xlu0 %1498
        %v1502 = vsel %vm779, %v1399, 0
        %1504 = vmatprep.subr.bf16.mxu0 0
        %1505 = vmatpush1.bf16.msra.mxu0 0
        %1506 = vmatprep.subr.bf16.mxu0 0
        %1507 = vmatpush1.bf16.msra.mxu0 0
        %1508 = vmatprep.subr.bf16.mxu0 0
        %1509 = vmatpush1.bf16.msra.mxu0 0
        %1510 = vmatprep.subr.bf16.mxu0 0
        %1511 = vmatpush1.bf16.msra.mxu0 0
        %1512 = vmatprep.subr.bf16.mxu0 0
        %1513 = vmatpush1.bf16.msra.mxu0 0
        %1514 = vmatprep.subr.bf16.mxu0 0
        %1515 = vmatpush1.bf16.msra.mxu0 0
        %1516 = vmatprep.subr.bf16.mxu0 0
        %1517 = vmatpush1.bf16.msra.mxu0 0
        %1518 = vmatprep.subr.bf16.mxu0 0
        %1519 = vmatpush1.bf16.msra.mxu0 %v1499
        %1520 = vmatprep.subr.bf16.mxu0 0
        %1521 = vmatpush2.bf16.msra.mxu0 0
        %1522 = vmatprep.subr.bf16.mxu0 0
        %1523 = vmatpush2.bf16.msra.mxu0 0
        %1524 = vmatprep.subr.bf16.mxu0 0
        %1525 = vmatpush2.bf16.msra.mxu0 0
        %1526 = vmatprep.subr.bf16.mxu0 0
        %1527 = vmatpush2.bf16.msra.mxu0 0
        %1528 = vmatprep.subr.bf16.mxu0 0
        %1529 = vmatpush2.bf16.msra.mxu0 0
        %1530 = vmatprep.subr.bf16.mxu0 0
        %1531 = vmatpush2.bf16.msra.mxu0 0
        %1532 = vmatprep.subr.bf16.mxu0 0
        %1533 = vmatpush2.bf16.msra.mxu0 0
        %1534 = vmatprep.subr.bf16.mxu0 0
        %1535 = vmatpush2.bf16.msra.mxu0 0
        %1536 = vmatprep.mubr.bf16.mxu0 0
        %1537 = vmatmul.mubr.bf16.gmra.mxu0 %v1502
        %v1538 = vpop.f32.mrf.mxu0
        %v1539 = vadd.f32 0.0, %v1538
        %v1540 = vpop.f32.mrf.mxu0
        %v1541 = vpop.f32.mrf.mxu0
        %v1542 = vadd.f32 0.0, %v1541
        %v1543 = vpop.f32.mrf.mxu0
        %1544 = vdwg.mxu0
        %1546 = vrot.lane.b32.xlu0 %v577, 96
        %v1547 = vpop.permute.xlu0 %1546
        %v1550 = vsel %vm779, %v1400, 0
        %1552 = vmatprep.subr.bf16.mxu0 0
        %1553 = vmatpush1.bf16.msra.mxu0 0
        %1554 = vmatprep.subr.bf16.mxu0 0
        %1555 = vmatpush1.bf16.msra.mxu0 0
        %1556 = vmatprep.subr.bf16.mxu0 0
        %1557 = vmatpush1.bf16.msra.mxu0 0
        %1558 = vmatprep.subr.bf16.mxu0 0
        %1559 = vmatpush1.bf16.msra.mxu0 0
        %1560 = vmatprep.subr.bf16.mxu0 0
        %1561 = vmatpush1.bf16.msra.mxu0 0
        %1562 = vmatprep.subr.bf16.mxu0 0
        %1563 = vmatpush1.bf16.msra.mxu0 0
        %1564 = vmatprep.subr.bf16.mxu0 0
        %1565 = vmatpush1.bf16.msra.mxu0 0
        %1566 = vmatprep.subr.bf16.mxu0 0
        %1567 = vmatpush1.bf16.msra.mxu0 %v1547
        %1568 = vmatprep.subr.bf16.mxu0 0
        %1569 = vmatpush2.bf16.msra.mxu0 0
        %1570 = vmatprep.subr.bf16.mxu0 0
        %1571 = vmatpush2.bf16.msra.mxu0 0
        %1572 = vmatprep.subr.bf16.mxu0 0
        %1573 = vmatpush2.bf16.msra.mxu0 0
        %1574 = vmatprep.subr.bf16.mxu0 0
        %1575 = vmatpush2.bf16.msra.mxu0 0
        %1576 = vmatprep.subr.bf16.mxu0 0
        %1577 = vmatpush2.bf16.msra.mxu0 0
        %1578 = vmatprep.subr.bf16.mxu0 0
        %1579 = vmatpush2.bf16.msra.mxu0 0
        %1580 = vmatprep.subr.bf16.mxu0 0
        %1581 = vmatpush2.bf16.msra.mxu0 0
        %1582 = vmatprep.subr.bf16.mxu0 0
        %1583 = vmatpush2.bf16.msra.mxu0 0
        %1584 = vmatprep.mubr.bf16.mxu0 0
        %1585 = vmatmul.mubr.bf16.gmra.mxu0 %v1550
        %v1586 = vpop.f32.mrf.mxu0
        %v1587 = vadd.f32 0.0, %v1586
        %v1588 = vpop.f32.mrf.mxu0
        %v1589 = vpop.f32.mrf.mxu0
        %v1590 = vadd.f32 0.0, %v1589
        %v1591 = vpop.f32.mrf.mxu0
        %1592 = vdwg.mxu0
        %v1593 = vpack.c.bf16 %v1446, %v1443
        %v1594 = vpack.c.bf16 %v1494, %v1491
        %v1595 = vpack.c.bf16 %v1542, %v1539
        %v1596 = vpack.c.bf16 %v1590, %v1587
        %v1601 = vunpack.c.l.b16 %v1593
        %v1602 = vunpack.c.h.b16 %v1593
        %v1603 = vunpack.c.l.b16 %v1594
        %v1604 = vunpack.c.h.b16 %v1594
        %v1605 = vunpack.c.l.b16 %v1595
        %v1606 = vunpack.c.h.b16 %v1595
        %v1607 = vunpack.c.l.b16 %v1596
        %v1608 = vunpack.c.h.b16 %v1596
        %v1609 = vpack.c.b16 %v1601, %v1601
        %v1610 = vpack.c.b16 %v1602, %v1602
        %v1611 = vpack.c.b16 %v1603, %v1603
        %v1612 = vpack.c.b16 %v1604, %v1604
        %v1613 = vpack.c.b16 %v1605, %v1605
        %v1614 = vpack.c.b16 %v1606, %v1606
        %v1615 = vpack.c.b16 %v1607, %v1607
        %v1616 = vpack.c.b16 %v1608, %v1608
        %1617 = vrot.lane.b32.xlu0 %v1609, 32
        %v1618 = vpop.permute.xlu0 %1617
        %1619 = vrot.lane.b32.xlu0 %v1610, 32
        %v1620 = vpop.permute.xlu0 %1619
        %1621 = vrot.lane.b32.xlu0 %v1611, 32
        %v1622 = vpop.permute.xlu0 %1621
        %1623 = vrot.lane.b32.xlu0 %v1612, 32
        %v1624 = vpop.permute.xlu0 %1623
        %1625 = vrot.lane.b32.xlu0 %v1613, 32
        %v1626 = vpop.permute.xlu0 %1625
        %1627 = vrot.lane.b32.xlu0 %v1614, 32
        %v1628 = vpop.permute.xlu0 %1627
        %1629 = vrot.lane.b32.xlu0 %v1615, 32
        %v1630 = vpop.permute.xlu0 %1629
        %1631 = vrot.lane.b32.xlu0 %v1616, 32
        %v1632 = vpop.permute.xlu0 %1631
        %vm1641 = vcmask 519424
        %1642 = vst.msk [vmem:[#allocation2] sm:$0xf] %vm1641, %v1618
        %1643 = vst.msk [vmem:[#allocation2 + $0x4] sm:$0xf] %vm1641, %v1620
        %1644 = vst.msk [vmem:[#allocation2 + $0x8] sm:$0xf] %vm1641, %v1622
        %1645 = vst.msk [vmem:[#allocation2 + $0xc] sm:$0xf] %vm1641, %v1624
        %1646 = vst.msk [vmem:[#allocation2 + $0x10] sm:$0xf] %vm1641, %v1626
        %1647 = vst.msk [vmem:[#allocation2 + $0x14] sm:$0xf] %vm1641, %v1628
        %1648 = vst.msk [vmem:[#allocation2 + $0x18] sm:$0xf] %vm1641, %v1630
        %1649 = vst.msk [vmem:[#allocation2 + $0x1c] sm:$0xf] %vm1641, %v1632
        %1650 = vrot.lane.b32.xlu0 %v566, 64
        %v1651 = vpop.permute.xlu0 %1650
        %1652 = vrot.lane.b32.xlu0 %v570, 64
        %v1653 = vpop.permute.xlu0 %1652
        %v1655 = vsel %vm578, %v1651, 0
        %v1658 = vsel %vm578, %v1653, 0
        %1660 = vmatprep.subr.bf16.mxu0 0
        %1661 = vmatpush1.bf16.xpose.msra.mxu0 0
        %1662 = vmatprep.subr.bf16.mxu0 0
        %1663 = vmatpush1.bf16.xpose.msra.mxu0 0
        %1664 = vmatprep.subr.bf16.mxu0 0
        %1665 = vmatpush1.bf16.xpose.msra.mxu0 0
        %1666 = vmatprep.subr.bf16.mxu0 0
        %1667 = vmatpush1.bf16.xpose.msra.mxu0 0
        %1668 = vmatprep.subr.bf16.mxu0 0
        %1669 = vmatpush1.bf16.xpose.msra.mxu0 0
        %1670 = vmatprep.subr.bf16.mxu0 0
        %1671 = vmatpush1.bf16.xpose.msra.mxu0 0
        %1672 = vmatprep.subr.bf16.mxu0 0
        %1673 = vmatpush1.bf16.xpose.msra.mxu0 0
        %1674 = vmatprep.subr.bf16.mxu0 0
        %1675 = vmatpush1.bf16.xpose.msra.mxu0 %v1658
        %1676 = vmatprep.subr.bf16.mxu0 0
        %1677 = vmatpush2.bf16.xpose.msra.mxu0 0
        %1678 = vmatprep.subr.bf16.mxu0 0
        %1679 = vmatpush2.bf16.xpose.msra.mxu0 0
        %1680 = vmatprep.subr.bf16.mxu0 0
        %1681 = vmatpush2.bf16.xpose.msra.mxu0 0
        %1682 = vmatprep.subr.bf16.mxu0 0
        %1683 = vmatpush2.bf16.xpose.msra.mxu0 0
        %1684 = vmatprep.subr.bf16.mxu0 0
        %1685 = vmatpush2.bf16.xpose.msra.mxu0 0
        %1686 = vmatprep.subr.bf16.mxu0 0
        %1687 = vmatpush2.bf16.xpose.msra.mxu0 0
        %1688 = vmatprep.subr.bf16.mxu0 0
        %1689 = vmatpush2.bf16.xpose.msra.mxu0 0
        %1690 = vmatprep.subr.bf16.mxu0 0
        %1691 = vmatpush2.bf16.xpose.msra.mxu0 0
        %1692 = vmatprep.mubr.bf16.mxu0 0
        %1693 = vmatmul.mubr.bf16.gmra.mxu0 %v1655
        %v1694 = vpop.f32.mrf.mxu0
        %v1695 = vadd.f32 0.0, %v1694
        %v1696 = vpop.f32.mrf.mxu0
        %v1697 = vpop.f32.mrf.mxu0
        %v1698 = vadd.f32 0.0, %v1697
        %v1699 = vpop.f32.mrf.mxu0
        %1700 = vdwg.mxu0
        %1701 = vrot.lane.b32.xlu0 %v567, 64
        %v1702 = vpop.permute.xlu0 %1701
        %1703 = vrot.lane.b32.xlu0 %v571, 64
        %v1704 = vpop.permute.xlu0 %1703
        %v1706 = vsel %vm578, %v1702, 0
        %v1709 = vsel %vm578, %v1704, 0
        %1711 = vmatprep.subr.bf16.mxu0 0
        %1712 = vmatpush1.bf16.xpose.msra.mxu0 0
        %1713 = vmatprep.subr.bf16.mxu0 0
        %1714 = vmatpush1.bf16.xpose.msra.mxu0 0
        %1715 = vmatprep.subr.bf16.mxu0 0
        %1716 = vmatpush1.bf16.xpose.msra.mxu0 0
        %1717 = vmatprep.subr.bf16.mxu0 0
        %1718 = vmatpush1.bf16.xpose.msra.mxu0 0
        %1719 = vmatprep.subr.bf16.mxu0 0
        %1720 = vmatpush1.bf16.xpose.msra.mxu0 0
        %1721 = vmatprep.subr.bf16.mxu0 0
        %1722 = vmatpush1.bf16.xpose.msra.mxu0 0
        %1723 = vmatprep.subr.bf16.mxu0 0
        %1724 = vmatpush1.bf16.xpose.msra.mxu0 0
        %1725 = vmatprep.subr.bf16.mxu0 0
        %1726 = vmatpush1.bf16.xpose.msra.mxu0 %v1709
        %1727 = vmatprep.subr.bf16.mxu0 0
        %1728 = vmatpush2.bf16.xpose.msra.mxu0 0
        %1729 = vmatprep.subr.bf16.mxu0 0
        %1730 = vmatpush2.bf16.xpose.msra.mxu0 0
        %1731 = vmatprep.subr.bf16.mxu0 0
        %1732 = vmatpush2.bf16.xpose.msra.mxu0 0
        %1733 = vmatprep.subr.bf16.mxu0 0
        %1734 = vmatpush2.bf16.xpose.msra.mxu0 0
        %1735 = vmatprep.subr.bf16.mxu0 0
        %1736 = vmatpush2.bf16.xpose.msra.mxu0 0
        %1737 = vmatprep.subr.bf16.mxu0 0
        %1738 = vmatpush2.bf16.xpose.msra.mxu0 0
        %1739 = vmatprep.subr.bf16.mxu0 0
        %1740 = vmatpush2.bf16.xpose.msra.mxu0 0
        %1741 = vmatprep.subr.bf16.mxu0 0
        %1742 = vmatpush2.bf16.xpose.msra.mxu0 0
        %1743 = vmatprep.mubr.bf16.mxu0 0
        %1744 = vmatmul.mubr.bf16.gmra.mxu0 %v1706
        %v1745 = vpop.f32.mrf.mxu0
        %v1746 = vadd.f32 0.0, %v1745
        %v1747 = vpop.f32.mrf.mxu0
        %v1748 = vpop.f32.mrf.mxu0
        %v1749 = vadd.f32 0.0, %v1748
        %v1750 = vpop.f32.mrf.mxu0
        %1751 = vdwg.mxu0
        %1752 = vrot.lane.b32.xlu0 %v568, 64
        %v1753 = vpop.permute.xlu0 %1752
        %1754 = vrot.lane.b32.xlu0 %v572, 64
        %v1755 = vpop.permute.xlu0 %1754
        %v1757 = vsel %vm578, %v1753, 0
        %v1760 = vsel %vm578, %v1755, 0
        %1762 = vmatprep.subr.bf16.mxu0 0
        %1763 = vmatpush1.bf16.xpose.msra.mxu0 0
        %1764 = vmatprep.subr.bf16.mxu0 0
        %1765 = vmatpush1.bf16.xpose.msra.mxu0 0
        %1766 = vmatprep.subr.bf16.mxu0 0
        %1767 = vmatpush1.bf16.xpose.msra.mxu0 0
        %1768 = vmatprep.subr.bf16.mxu0 0
        %1769 = vmatpush1.bf16.xpose.msra.mxu0 0
        %1770 = vmatprep.subr.bf16.mxu0 0
        %1771 = vmatpush1.bf16.xpose.msra.mxu0 0
        %1772 = vmatprep.subr.bf16.mxu0 0
        %1773 = vmatpush1.bf16.xpose.msra.mxu0 0
        %1774 = vmatprep.subr.bf16.mxu0 0
        %1775 = vmatpush1.bf16.xpose.msra.mxu0 0
        %1776 = vmatprep.subr.bf16.mxu0 0
        %1777 = vmatpush1.bf16.xpose.msra.mxu0 %v1760
        %1778 = vmatprep.subr.bf16.mxu0 0
        %1779 = vmatpush2.bf16.xpose.msra.mxu0 0
        %1780 = vmatprep.subr.bf16.mxu0 0
        %1781 = vmatpush2.bf16.xpose.msra.mxu0 0
        %1782 = vmatprep.subr.bf16.mxu0 0
        %1783 = vmatpush2.bf16.xpose.msra.mxu0 0
        %1784 = vmatprep.subr.bf16.mxu0 0
        %1785 = vmatpush2.bf16.xpose.msra.mxu0 0
        %1786 = vmatprep.subr.bf16.mxu0 0
        %1787 = vmatpush2.bf16.xpose.msra.mxu0 0
        %1788 = vmatprep.subr.bf16.mxu0 0
        %1789 = vmatpush2.bf16.xpose.msra.mxu0 0
        %1790 = vmatprep.subr.bf16.mxu0 0
        %1791 = vmatpush2.bf16.xpose.msra.mxu0 0
        %1792 = vmatprep.subr.bf16.mxu0 0
        %1793 = vmatpush2.bf16.xpose.msra.mxu0 0
        %1794 = vmatprep.mubr.bf16.mxu0 0
        %1795 = vmatmul.mubr.bf16.gmra.mxu0 %v1757
        %v1796 = vpop.f32.mrf.mxu0
        %v1797 = vadd.f32 0.0, %v1796
        %v1798 = vpop.f32.mrf.mxu0
        %v1799 = vpop.f32.mrf.mxu0
        %v1800 = vadd.f32 0.0, %v1799
        %v1801 = vpop.f32.mrf.mxu0
        %1802 = vdwg.mxu0
        %1803 = vrot.lane.b32.xlu0 %v569, 64
        %v1804 = vpop.permute.xlu0 %1803
        %1805 = vrot.lane.b32.xlu0 %v573, 64
        %v1806 = vpop.permute.xlu0 %1805
        %v1808 = vsel %vm578, %v1804, 0
        %v1811 = vsel %vm578, %v1806, 0
        %1813 = vmatprep.subr.bf16.mxu0 0
        %1814 = vmatpush1.bf16.xpose.msra.mxu0 0
        %1815 = vmatprep.subr.bf16.mxu0 0
        %1816 = vmatpush1.bf16.xpose.msra.mxu0 0
        %1817 = vmatprep.subr.bf16.mxu0 0
        %1818 = vmatpush1.bf16.xpose.msra.mxu0 0
        %1819 = vmatprep.subr.bf16.mxu0 0
        %1820 = vmatpush1.bf16.xpose.msra.mxu0 0
        %1821 = vmatprep.subr.bf16.mxu0 0
        %1822 = vmatpush1.bf16.xpose.msra.mxu0 0
        %1823 = vmatprep.subr.bf16.mxu0 0
        %1824 = vmatpush1.bf16.xpose.msra.mxu0 0
        %1825 = vmatprep.subr.bf16.mxu0 0
        %1826 = vmatpush1.bf16.xpose.msra.mxu0 0
        %1827 = vmatprep.subr.bf16.mxu0 0
        %1828 = vmatpush1.bf16.xpose.msra.mxu0 %v1811
        %1829 = vmatprep.subr.bf16.mxu0 0
        %1830 = vmatpush2.bf16.xpose.msra.mxu0 0
        %1831 = vmatprep.subr.bf16.mxu0 0
        %1832 = vmatpush2.bf16.xpose.msra.mxu0 0
        %1833 = vmatprep.subr.bf16.mxu0 0
        %1834 = vmatpush2.bf16.xpose.msra.mxu0 0
        %1835 = vmatprep.subr.bf16.mxu0 0
        %1836 = vmatpush2.bf16.xpose.msra.mxu0 0
        %1837 = vmatprep.subr.bf16.mxu0 0
        %1838 = vmatpush2.bf16.xpose.msra.mxu0 0
        %1839 = vmatprep.subr.bf16.mxu0 0
        %1840 = vmatpush2.bf16.xpose.msra.mxu0 0
        %1841 = vmatprep.subr.bf16.mxu0 0
        %1842 = vmatpush2.bf16.xpose.msra.mxu0 0
        %1843 = vmatprep.subr.bf16.mxu0 0
        %1844 = vmatpush2.bf16.xpose.msra.mxu0 0
        %1845 = vmatprep.mubr.bf16.mxu0 0
        %1846 = vmatmul.mubr.bf16.gmra.mxu0 %v1808
        %v1847 = vpop.f32.mrf.mxu0
        %v1848 = vadd.f32 0.0, %v1847
        %v1849 = vpop.f32.mrf.mxu0
        %v1850 = vpop.f32.mrf.mxu0
        %v1851 = vadd.f32 0.0, %v1850
        %v1852 = vpop.f32.mrf.mxu0
        %1853 = vdwg.mxu0
        %v1854 = vsel %vm769, %v1695, -1e+30
        %v1855 = vsel %vm770, %v1698, -1e+30
        %v1856 = vsel %vm769, %v1746, -1e+30
        %v1857 = vsel %vm770, %v1749, -1e+30
        %v1858 = vsel %vm769, %v1797, -1e+30
        %v1859 = vsel %vm770, %v1800, -1e+30
        %v1860 = vsel %vm769, %v1848, -1e+30
        %v1861 = vsel %vm770, %v1851, -1e+30
        %v1862 = vsel %vm779, %v1854, -inf
        %1863 = vmax.xlane.f32.xlu0 %v1862
        %v1864 = vpop.xlane.xlu0 %1863
        %v1865 = vsel %vm779, %v1855, -inf
        %1866 = vmax.xlane.f32.xlu0 %v1865
        %v1867 = vpop.xlane.xlu0 %1866
        %v1868 = vsel %vm779, %v1856, -inf
        %1869 = vmax.xlane.f32.xlu0 %v1868
        %v1870 = vpop.xlane.xlu0 %1869
        %v1871 = vsel %vm779, %v1857, -inf
        %1872 = vmax.xlane.f32.xlu0 %v1871
        %v1873 = vpop.xlane.xlu0 %1872
        %v1874 = vsel %vm779, %v1858, -inf
        %1875 = vmax.xlane.f32.xlu0 %v1874
        %v1876 = vpop.xlane.xlu0 %1875
        %v1877 = vsel %vm779, %v1859, -inf
        %1878 = vmax.xlane.f32.xlu0 %v1877
        %v1879 = vpop.xlane.xlu0 %1878
        %v1880 = vsel %vm779, %v1860, -inf
        %1881 = vmax.xlane.f32.xlu0 %v1880
        %v1882 = vpop.xlane.xlu0 %1881
        %v1883 = vsel %vm779, %v1861, -inf
        %1884 = vmax.xlane.f32.xlu0 %v1883
        %v1885 = vpop.xlane.xlu0 %1884
        %v1886 = vsub.f32 %v1854, %v1864
        %v1887 = vsub.f32 %v1855, %v1867
        %v1888 = vsub.f32 %v1856, %v1870
        %v1889 = vsub.f32 %v1857, %v1873
        %v1890 = vsub.f32 %v1858, %v1876
        %v1891 = vsub.f32 %v1859, %v1879
        %v1892 = vsub.f32 %v1860, %v1882
        %v1893 = vsub.f32 %v1861, %v1885
        %v1894 = vmul.f32 %v1886, 1.442695
        %v1895 = vpow.pop %v1894
        %v1896 = vmul.f32 %v1887, 1.442695
        %v1897 = vpow.pop %v1896
        %v1898 = vmul.f32 %v1888, 1.442695
        %v1899 = vpow.pop %v1898
        %v1900 = vmul.f32 %v1889, 1.442695
        %v1901 = vpow.pop %v1900
        %v1902 = vmul.f32 %v1890, 1.442695
        %v1903 = vpow.pop %v1902
        %v1904 = vmul.f32 %v1891, 1.442695
        %v1905 = vpow.pop %v1904
        %v1906 = vmul.f32 %v1892, 1.442695
        %v1907 = vpow.pop %v1906
        %v1908 = vmul.f32 %v1893, 1.442695
        %v1909 = vpow.pop %v1908
        %v1910 = vsel %vm779, %v1895, 0.0
        %1911 = vadd.xlane.f32.xlu0 %v1910
        %v1912 = vpop.xlane.xlu0 %1911
        %v1913 = vsel %vm779, %v1897, 0.0
        %1914 = vadd.xlane.f32.xlu0 %v1913
        %v1915 = vpop.xlane.xlu0 %1914
        %v1916 = vsel %vm779, %v1899, 0.0
        %1917 = vadd.xlane.f32.xlu0 %v1916
        %v1918 = vpop.xlane.xlu0 %1917
        %v1919 = vsel %vm779, %v1901, 0.0
        %1920 = vadd.xlane.f32.xlu0 %v1919
        %v1921 = vpop.xlane.xlu0 %1920
        %v1922 = vsel %vm779, %v1903, 0.0
        %1923 = vadd.xlane.f32.xlu0 %v1922
        %v1924 = vpop.xlane.xlu0 %1923
        %v1925 = vsel %vm779, %v1905, 0.0
        %1926 = vadd.xlane.f32.xlu0 %v1925
        %v1927 = vpop.xlane.xlu0 %1926
        %v1928 = vsel %vm779, %v1907, 0.0
        %1929 = vadd.xlane.f32.xlu0 %v1928
        %v1930 = vpop.xlane.xlu0 %1929
        %v1931 = vsel %vm779, %v1909, 0.0
        %1932 = vadd.xlane.f32.xlu0 %v1931
        %v1933 = vpop.xlane.xlu0 %1932
        %v1934 = vrcp.pop %v1912
        %v1935 = vrcp.pop %v1915
        %v1936 = vrcp.pop %v1918
        %v1937 = vrcp.pop %v1921
        %v1938 = vrcp.pop %v1924
        %v1939 = vrcp.pop %v1927
        %v1940 = vrcp.pop %v1930
        %v1941 = vrcp.pop %v1933
        %v1942 = vmul.f32 %v1895, %v1934
        %v1943 = vmul.f32 %v1897, %v1935
        %v1944 = vmul.f32 %v1899, %v1936
        %v1945 = vmul.f32 %v1901, %v1937
        %v1946 = vmul.f32 %v1903, %v1938
        %v1947 = vmul.f32 %v1905, %v1939
        %v1948 = vmul.f32 %v1907, %v1940
        %v1949 = vmul.f32 %v1909, %v1941
        %v1950 = vpack.c.bf16 %v1943, %v1942
        %v1951 = vpack.c.bf16 %v1945, %v1944
        %v1952 = vpack.c.bf16 %v1947, %v1946
        %v1953 = vpack.c.bf16 %v1949, %v1948
        %1954 = vrot.lane.b32.xlu0 %v574, 64
        %v1955 = vpop.permute.xlu0 %1954
        %v1958 = vsel %vm779, %v1950, 0
        %1960 = vmatprep.subr.bf16.mxu0 0
        %1961 = vmatpush1.bf16.msra.mxu0 0
        %1962 = vmatprep.subr.bf16.mxu0 0
        %1963 = vmatpush1.bf16.msra.mxu0 0
        %1964 = vmatprep.subr.bf16.mxu0 0
        %1965 = vmatpush1.bf16.msra.mxu0 0
        %1966 = vmatprep.subr.bf16.mxu0 0
        %1967 = vmatpush1.bf16.msra.mxu0 0
        %1968 = vmatprep.subr.bf16.mxu0 0
        %1969 = vmatpush1.bf16.msra.mxu0 0
        %1970 = vmatprep.subr.bf16.mxu0 0
        %1971 = vmatpush1.bf16.msra.mxu0 0
        %1972 = vmatprep.subr.bf16.mxu0 0
        %1973 = vmatpush1.bf16.msra.mxu0 0
        %1974 = vmatprep.subr.bf16.mxu0 0
        %1975 = vmatpush1.bf16.msra.mxu0 %v1955
        %1976 = vmatprep.subr.bf16.mxu0 0
        %1977 = vmatpush2.bf16.msra.mxu0 0
        %1978 = vmatprep.subr.bf16.mxu0 0
        %1979 = vmatpush2.bf16.msra.mxu0 0
        %1980 = vmatprep.subr.bf16.mxu0 0
        %1981 = vmatpush2.bf16.msra.mxu0 0
        %1982 = vmatprep.subr.bf16.mxu0 0
        %1983 = vmatpush2.bf16.msra.mxu0 0
        %1984 = vmatprep.subr.bf16.mxu0 0
        %1985 = vmatpush2.bf16.msra.mxu0 0
        %1986 = vmatprep.subr.bf16.mxu0 0
        %1987 = vmatpush2.bf16.msra.mxu0 0
        %1988 = vmatprep.subr.bf16.mxu0 0
        %1989 = vmatpush2.bf16.msra.mxu0 0
        %1990 = vmatprep.subr.bf16.mxu0 0
        %1991 = vmatpush2.bf16.msra.mxu0 0
        %1992 = vmatprep.mubr.bf16.mxu0 0
        %1993 = vmatmul.mubr.bf16.gmra.mxu0 %v1958
        %v1994 = vpop.f32.mrf.mxu0
        %v1995 = vadd.f32 0.0, %v1994
        %v1996 = vpop.f32.mrf.mxu0
        %v1997 = vpop.f32.mrf.mxu0
        %v1998 = vadd.f32 0.0, %v1997
        %v1999 = vpop.f32.mrf.mxu0
        %2000 = vdwg.mxu0
        %2001 = vrot.lane.b32.xlu0 %v575, 64
        %v2002 = vpop.permute.xlu0 %2001
        %v2005 = vsel %vm779, %v1951, 0
        %2007 = vmatprep.subr.bf16.mxu0 0
        %2008 = vmatpush1.bf16.msra.mxu0 0
        %2009 = vmatprep.subr.bf16.mxu0 0
        %2010 = vmatpush1.bf16.msra.mxu0 0
        %2011 = vmatprep.subr.bf16.mxu0 0
        %2012 = vmatpush1.bf16.msra.mxu0 0
        %2013 = vmatprep.subr.bf16.mxu0 0
        %2014 = vmatpush1.bf16.msra.mxu0 0
        %2015 = vmatprep.subr.bf16.mxu0 0
        %2016 = vmatpush1.bf16.msra.mxu0 0
        %2017 = vmatprep.subr.bf16.mxu0 0
        %2018 = vmatpush1.bf16.msra.mxu0 0
        %2019 = vmatprep.subr.bf16.mxu0 0
        %2020 = vmatpush1.bf16.msra.mxu0 0
        %2021 = vmatprep.subr.bf16.mxu0 0
        %2022 = vmatpush1.bf16.msra.mxu0 %v2002
        %2023 = vmatprep.subr.bf16.mxu0 0
        %2024 = vmatpush2.bf16.msra.mxu0 0
        %2025 = vmatprep.subr.bf16.mxu0 0
        %2026 = vmatpush2.bf16.msra.mxu0 0
        %2027 = vmatprep.subr.bf16.mxu0 0
        %2028 = vmatpush2.bf16.msra.mxu0 0
        %2029 = vmatprep.subr.bf16.mxu0 0
        %2030 = vmatpush2.bf16.msra.mxu0 0
        %2031 = vmatprep.subr.bf16.mxu0 0
        %2032 = vmatpush2.bf16.msra.mxu0 0
        %2033 = vmatprep.subr.bf16.mxu0 0
        %2034 = vmatpush2.bf16.msra.mxu0 0
        %2035 = vmatprep.subr.bf16.mxu0 0
        %2036 = vmatpush2.bf16.msra.mxu0 0
        %2037 = vmatprep.subr.bf16.mxu0 0
        %2038 = vmatpush2.bf16.msra.mxu0 0
        %2039 = vmatprep.mubr.bf16.mxu0 0
        %2040 = vmatmul.mubr.bf16.gmra.mxu0 %v2005
        %v2041 = vpop.f32.mrf.mxu0
        %v2042 = vadd.f32 0.0, %v2041
        %v2043 = vpop.f32.mrf.mxu0
        %v2044 = vpop.f32.mrf.mxu0
        %v2045 = vadd.f32 0.0, %v2044
        %v2046 = vpop.f32.mrf.mxu0
        %2047 = vdwg.mxu0
        %2048 = vrot.lane.b32.xlu0 %v576, 64
        %v2049 = vpop.permute.xlu0 %2048
        %v2052 = vsel %vm779, %v1952, 0
        %2054 = vmatprep.subr.bf16.mxu0 0
        %2055 = vmatpush1.bf16.msra.mxu0 0
        %2056 = vmatprep.subr.bf16.mxu0 0
        %2057 = vmatpush1.bf16.msra.mxu0 0
        %2058 = vmatprep.subr.bf16.mxu0 0
        %2059 = vmatpush1.bf16.msra.mxu0 0
        %2060 = vmatprep.subr.bf16.mxu0 0
        %2061 = vmatpush1.bf16.msra.mxu0 0
        %2062 = vmatprep.subr.bf16.mxu0 0
        %2063 = vmatpush1.bf16.msra.mxu0 0
        %2064 = vmatprep.subr.bf16.mxu0 0
        %2065 = vmatpush1.bf16.msra.mxu0 0
        %2066 = vmatprep.subr.bf16.mxu0 0
        %2067 = vmatpush1.bf16.msra.mxu0 0
        %2068 = vmatprep.subr.bf16.mxu0 0
        %2069 = vmatpush1.bf16.msra.mxu0 %v2049
        %2070 = vmatprep.subr.bf16.mxu0 0
        %2071 = vmatpush2.bf16.msra.mxu0 0
        %2072 = vmatprep.subr.bf16.mxu0 0
        %2073 = vmatpush2.bf16.msra.mxu0 0
        %2074 = vmatprep.subr.bf16.mxu0 0
        %2075 = vmatpush2.bf16.msra.mxu0 0
        %2076 = vmatprep.subr.bf16.mxu0 0
        %2077 = vmatpush2.bf16.msra.mxu0 0
        %2078 = vmatprep.subr.bf16.mxu0 0
        %2079 = vmatpush2.bf16.msra.mxu0 0
        %2080 = vmatprep.subr.bf16.mxu0 0
        %2081 = vmatpush2.bf16.msra.mxu0 0
        %2082 = vmatprep.subr.bf16.mxu0 0
        %2083 = vmatpush2.bf16.msra.mxu0 0
        %2084 = vmatprep.subr.bf16.mxu0 0
        %2085 = vmatpush2.bf16.msra.mxu0 0
        %2086 = vmatprep.mubr.bf16.mxu0 0
        %2087 = vmatmul.mubr.bf16.gmra.mxu0 %v2052
        %v2088 = vpop.f32.mrf.mxu0
        %v2089 = vadd.f32 0.0, %v2088
        %v2090 = vpop.f32.mrf.mxu0
        %v2091 = vpop.f32.mrf.mxu0
        %v2092 = vadd.f32 0.0, %v2091
        %v2093 = vpop.f32.mrf.mxu0
        %2094 = vdwg.mxu0
        %2095 = vrot.lane.b32.xlu0 %v577, 64
        %v2096 = vpop.permute.xlu0 %2095
        %v2099 = vsel %vm779, %v1953, 0
        %2101 = vmatprep.subr.bf16.mxu0 0
        %2102 = vmatpush1.bf16.msra.mxu0 0
        %2103 = vmatprep.subr.bf16.mxu0 0
        %2104 = vmatpush1.bf16.msra.mxu0 0
        %2105 = vmatprep.subr.bf16.mxu0 0
        %2106 = vmatpush1.bf16.msra.mxu0 0
        %2107 = vmatprep.subr.bf16.mxu0 0
        %2108 = vmatpush1.bf16.msra.mxu0 0
        %2109 = vmatprep.subr.bf16.mxu0 0
        %2110 = vmatpush1.bf16.msra.mxu0 0
        %2111 = vmatprep.subr.bf16.mxu0 0
        %2112 = vmatpush1.bf16.msra.mxu0 0
        %2113 = vmatprep.subr.bf16.mxu0 0
        %2114 = vmatpush1.bf16.msra.mxu0 0
        %2115 = vmatprep.subr.bf16.mxu0 0
        %2116 = vmatpush1.bf16.msra.mxu0 %v2096
        %2117 = vmatprep.subr.bf16.mxu0 0
        %2118 = vmatpush2.bf16.msra.mxu0 0
        %2119 = vmatprep.subr.bf16.mxu0 0
        %2120 = vmatpush2.bf16.msra.mxu0 0
        %2121 = vmatprep.subr.bf16.mxu0 0
        %2122 = vmatpush2.bf16.msra.mxu0 0
        %2123 = vmatprep.subr.bf16.mxu0 0
        %2124 = vmatpush2.bf16.msra.mxu0 0
        %2125 = vmatprep.subr.bf16.mxu0 0
        %2126 = vmatpush2.bf16.msra.mxu0 0
        %2127 = vmatprep.subr.bf16.mxu0 0
        %2128 = vmatpush2.bf16.msra.mxu0 0
        %2129 = vmatprep.subr.bf16.mxu0 0
        %2130 = vmatpush2.bf16.msra.mxu0 0
        %2131 = vmatprep.subr.bf16.mxu0 0
        %2132 = vmatpush2.bf16.msra.mxu0 0
        %2133 = vmatprep.mubr.bf16.mxu0 0
        %2134 = vmatmul.mubr.bf16.gmra.mxu0 %v2099
        %v2135 = vpop.f32.mrf.mxu0
        %v2136 = vadd.f32 0.0, %v2135
        %v2137 = vpop.f32.mrf.mxu0
        %v2138 = vpop.f32.mrf.mxu0
        %v2139 = vadd.f32 0.0, %v2138
        %v2140 = vpop.f32.mrf.mxu0
        %2141 = vdwg.mxu0
        %v2142 = vpack.c.bf16 %v1998, %v1995
        %v2143 = vpack.c.bf16 %v2045, %v2042
        %v2144 = vpack.c.bf16 %v2092, %v2089
        %v2145 = vpack.c.bf16 %v2139, %v2136
        %v2150 = vunpack.c.l.b16 %v2142
        %v2151 = vunpack.c.h.b16 %v2142
        %v2152 = vunpack.c.l.b16 %v2143
        %v2153 = vunpack.c.h.b16 %v2143
        %v2154 = vunpack.c.l.b16 %v2144
        %v2155 = vunpack.c.h.b16 %v2144
        %v2156 = vunpack.c.l.b16 %v2145
        %v2157 = vunpack.c.h.b16 %v2145
        %v2158 = vpack.c.b16 %v2150, %v2150
        %v2159 = vpack.c.b16 %v2151, %v2151
        %v2160 = vpack.c.b16 %v2152, %v2152
        %v2161 = vpack.c.b16 %v2153, %v2153
        %v2162 = vpack.c.b16 %v2154, %v2154
        %v2163 = vpack.c.b16 %v2155, %v2155
        %v2164 = vpack.c.b16 %v2156, %v2156
        %v2165 = vpack.c.b16 %v2157, %v2157
        %2166 = vrot.lane.b32.xlu0 %v2158, 64
        %v2167 = vpop.permute.xlu0 %2166
        %2168 = vrot.lane.b32.xlu0 %v2159, 64
        %v2169 = vpop.permute.xlu0 %2168
        %2170 = vrot.lane.b32.xlu0 %v2160, 64
        %v2171 = vpop.permute.xlu0 %2170
        %2172 = vrot.lane.b32.xlu0 %v2161, 64
        %v2173 = vpop.permute.xlu0 %2172
        %2174 = vrot.lane.b32.xlu0 %v2162, 64
        %v2175 = vpop.permute.xlu0 %2174
        %2176 = vrot.lane.b32.xlu0 %v2163, 64
        %v2177 = vpop.permute.xlu0 %2176
        %2178 = vrot.lane.b32.xlu0 %v2164, 64
        %v2179 = vpop.permute.xlu0 %2178
        %2180 = vrot.lane.b32.xlu0 %v2165, 64
        %v2181 = vpop.permute.xlu0 %2180
        %vm2190 = vcmask 781824
        %2191 = vst.msk [vmem:[#allocation2] sm:$0xf] %vm2190, %v2167
        %2192 = vst.msk [vmem:[#allocation2 + $0x4] sm:$0xf] %vm2190, %v2169
        %2193 = vst.msk [vmem:[#allocation2 + $0x8] sm:$0xf] %vm2190, %v2171
        %2194 = vst.msk [vmem:[#allocation2 + $0xc] sm:$0xf] %vm2190, %v2173
        %2195 = vst.msk [vmem:[#allocation2 + $0x10] sm:$0xf] %vm2190, %v2175
        %2196 = vst.msk [vmem:[#allocation2 + $0x14] sm:$0xf] %vm2190, %v2177
        %2197 = vst.msk [vmem:[#allocation2 + $0x18] sm:$0xf] %vm2190, %v2179
        %2198 = vst.msk [vmem:[#allocation2 + $0x1c] sm:$0xf] %vm2190, %v2181
        %2199 = vrot.lane.b32.xlu0 %v566, 32
        %v2200 = vpop.permute.xlu0 %2199
        %2201 = vrot.lane.b32.xlu0 %v570, 32
        %v2202 = vpop.permute.xlu0 %2201
        %v2204 = vsel %vm578, %v2200, 0
        %v2207 = vsel %vm578, %v2202, 0
        %2209 = vmatprep.subr.bf16.mxu0 0
        %2210 = vmatpush1.bf16.xpose.msra.mxu0 0
        %2211 = vmatprep.subr.bf16.mxu0 0
        %2212 = vmatpush1.bf16.xpose.msra.mxu0 0
        %2213 = vmatprep.subr.bf16.mxu0 0
        %2214 = vmatpush1.bf16.xpose.msra.mxu0 0
        %2215 = vmatprep.subr.bf16.mxu0 0
        %2216 = vmatpush1.bf16.xpose.msra.mxu0 0
        %2217 = vmatprep.subr.bf16.mxu0 0
        %2218 = vmatpush1.bf16.xpose.msra.mxu0 0
        %2219 = vmatprep.subr.bf16.mxu0 0
        %2220 = vmatpush1.bf16.xpose.msra.mxu0 0
        %2221 = vmatprep.subr.bf16.mxu0 0
        %2222 = vmatpush1.bf16.xpose.msra.mxu0 0
        %2223 = vmatprep.subr.bf16.mxu0 0
        %2224 = vmatpush1.bf16.xpose.msra.mxu0 %v2207
        %2225 = vmatprep.subr.bf16.mxu0 0
        %2226 = vmatpush2.bf16.xpose.msra.mxu0 0
        %2227 = vmatprep.subr.bf16.mxu0 0
        %2228 = vmatpush2.bf16.xpose.msra.mxu0 0
        %2229 = vmatprep.subr.bf16.mxu0 0
        %2230 = vmatpush2.bf16.xpose.msra.mxu0 0
        %2231 = vmatprep.subr.bf16.mxu0 0
        %2232 = vmatpush2.bf16.xpose.msra.mxu0 0
        %2233 = vmatprep.subr.bf16.mxu0 0
        %2234 = vmatpush2.bf16.xpose.msra.mxu0 0
        %2235 = vmatprep.subr.bf16.mxu0 0
        %2236 = vmatpush2.bf16.xpose.msra.mxu0 0
        %2237 = vmatprep.subr.bf16.mxu0 0
        %2238 = vmatpush2.bf16.xpose.msra.mxu0 0
        %2239 = vmatprep.subr.bf16.mxu0 0
        %2240 = vmatpush2.bf16.xpose.msra.mxu0 0
        %2241 = vmatprep.mubr.bf16.mxu0 0
        %2242 = vmatmul.mubr.bf16.gmra.mxu0 %v2204
        %v2243 = vpop.f32.mrf.mxu0
        %v2244 = vadd.f32 0.0, %v2243
        %v2245 = vpop.f32.mrf.mxu0
        %v2246 = vpop.f32.mrf.mxu0
        %v2247 = vadd.f32 0.0, %v2246
        %v2248 = vpop.f32.mrf.mxu0
        %2249 = vdwg.mxu0
        %2250 = vrot.lane.b32.xlu0 %v567, 32
        %v2251 = vpop.permute.xlu0 %2250
        %2252 = vrot.lane.b32.xlu0 %v571, 32
        %v2253 = vpop.permute.xlu0 %2252
        %v2255 = vsel %vm578, %v2251, 0
        %v2258 = vsel %vm578, %v2253, 0
        %2260 = vmatprep.subr.bf16.mxu0 0
        %2261 = vmatpush1.bf16.xpose.msra.mxu0 0
        %2262 = vmatprep.subr.bf16.mxu0 0
        %2263 = vmatpush1.bf16.xpose.msra.mxu0 0
        %2264 = vmatprep.subr.bf16.mxu0 0
        %2265 = vmatpush1.bf16.xpose.msra.mxu0 0
        %2266 = vmatprep.subr.bf16.mxu0 0
        %2267 = vmatpush1.bf16.xpose.msra.mxu0 0
        %2268 = vmatprep.subr.bf16.mxu0 0
        %2269 = vmatpush1.bf16.xpose.msra.mxu0 0
        %2270 = vmatprep.subr.bf16.mxu0 0
        %2271 = vmatpush1.bf16.xpose.msra.mxu0 0
        %2272 = vmatprep.subr.bf16.mxu0 0
        %2273 = vmatpush1.bf16.xpose.msra.mxu0 0
        %2274 = vmatprep.subr.bf16.mxu0 0
        %2275 = vmatpush1.bf16.xpose.msra.mxu0 %v2258
        %2276 = vmatprep.subr.bf16.mxu0 0
        %2277 = vmatpush2.bf16.xpose.msra.mxu0 0
        %2278 = vmatprep.subr.bf16.mxu0 0
        %2279 = vmatpush2.bf16.xpose.msra.mxu0 0
        %2280 = vmatprep.subr.bf16.mxu0 0
        %2281 = vmatpush2.bf16.xpose.msra.mxu0 0
        %2282 = vmatprep.subr.bf16.mxu0 0
        %2283 = vmatpush2.bf16.xpose.msra.mxu0 0
        %2284 = vmatprep.subr.bf16.mxu0 0
        %2285 = vmatpush2.bf16.xpose.msra.mxu0 0
        %2286 = vmatprep.subr.bf16.mxu0 0
        %2287 = vmatpush2.bf16.xpose.msra.mxu0 0
        %2288 = vmatprep.subr.bf16.mxu0 0
        %2289 = vmatpush2.bf16.xpose.msra.mxu0 0
        %2290 = vmatprep.subr.bf16.mxu0 0
        %2291 = vmatpush2.bf16.xpose.msra.mxu0 0
        %2292 = vmatprep.mubr.bf16.mxu0 0
        %2293 = vmatmul.mubr.bf16.gmra.mxu0 %v2255
        %v2294 = vpop.f32.mrf.mxu0
        %v2295 = vadd.f32 0.0, %v2294
        %v2296 = vpop.f32.mrf.mxu0
        %v2297 = vpop.f32.mrf.mxu0
        %v2298 = vadd.f32 0.0, %v2297
        %v2299 = vpop.f32.mrf.mxu0
        %2300 = vdwg.mxu0
        %2301 = vrot.lane.b32.xlu0 %v568, 32
        %v2302 = vpop.permute.xlu0 %2301
        %2303 = vrot.lane.b32.xlu0 %v572, 32
        %v2304 = vpop.permute.xlu0 %2303
        %v2306 = vsel %vm578, %v2302, 0
        %v2309 = vsel %vm578, %v2304, 0
        %2311 = vmatprep.subr.bf16.mxu0 0
        %2312 = vmatpush1.bf16.xpose.msra.mxu0 0
        %2313 = vmatprep.subr.bf16.mxu0 0
        %2314 = vmatpush1.bf16.xpose.msra.mxu0 0
        %2315 = vmatprep.subr.bf16.mxu0 0
        %2316 = vmatpush1.bf16.xpose.msra.mxu0 0
        %2317 = vmatprep.subr.bf16.mxu0 0
        %2318 = vmatpush1.bf16.xpose.msra.mxu0 0
        %2319 = vmatprep.subr.bf16.mxu0 0
        %2320 = vmatpush1.bf16.xpose.msra.mxu0 0
        %2321 = vmatprep.subr.bf16.mxu0 0
        %2322 = vmatpush1.bf16.xpose.msra.mxu0 0
        %2323 = vmatprep.subr.bf16.mxu0 0
        %2324 = vmatpush1.bf16.xpose.msra.mxu0 0
        %2325 = vmatprep.subr.bf16.mxu0 0
        %2326 = vmatpush1.bf16.xpose.msra.mxu0 %v2309
        %2327 = vmatprep.subr.bf16.mxu0 0
        %2328 = vmatpush2.bf16.xpose.msra.mxu0 0
        %2329 = vmatprep.subr.bf16.mxu0 0
        %2330 = vmatpush2.bf16.xpose.msra.mxu0 0
        %2331 = vmatprep.subr.bf16.mxu0 0
        %2332 = vmatpush2.bf16.xpose.msra.mxu0 0
        %2333 = vmatprep.subr.bf16.mxu0 0
        %2334 = vmatpush2.bf16.xpose.msra.mxu0 0
        %2335 = vmatprep.subr.bf16.mxu0 0
        %2336 = vmatpush2.bf16.xpose.msra.mxu0 0
        %2337 = vmatprep.subr.bf16.mxu0 0
        %2338 = vmatpush2.bf16.xpose.msra.mxu0 0
        %2339 = vmatprep.subr.bf16.mxu0 0
        %2340 = vmatpush2.bf16.xpose.msra.mxu0 0
        %2341 = vmatprep.subr.bf16.mxu0 0
        %2342 = vmatpush2.bf16.xpose.msra.mxu0 0
        %2343 = vmatprep.mubr.bf16.mxu0 0
        %2344 = vmatmul.mubr.bf16.gmra.mxu0 %v2306
        %v2345 = vpop.f32.mrf.mxu0
        %v2346 = vadd.f32 0.0, %v2345
        %v2347 = vpop.f32.mrf.mxu0
        %v2348 = vpop.f32.mrf.mxu0
        %v2349 = vadd.f32 0.0, %v2348
        %v2350 = vpop.f32.mrf.mxu0
        %2351 = vdwg.mxu0
        %2352 = vrot.lane.b32.xlu0 %v569, 32
        %v2353 = vpop.permute.xlu0 %2352
        %2354 = vrot.lane.b32.xlu0 %v573, 32
        %v2355 = vpop.permute.xlu0 %2354
        %v2357 = vsel %vm578, %v2353, 0
        %v2360 = vsel %vm578, %v2355, 0
        %2362 = vmatprep.subr.bf16.mxu0 0
        %2363 = vmatpush1.bf16.xpose.msra.mxu0 0
        %2364 = vmatprep.subr.bf16.mxu0 0
        %2365 = vmatpush1.bf16.xpose.msra.mxu0 0
        %2366 = vmatprep.subr.bf16.mxu0 0
        %2367 = vmatpush1.bf16.xpose.msra.mxu0 0
        %2368 = vmatprep.subr.bf16.mxu0 0
        %2369 = vmatpush1.bf16.xpose.msra.mxu0 0
        %2370 = vmatprep.subr.bf16.mxu0 0
        %2371 = vmatpush1.bf16.xpose.msra.mxu0 0
        %2372 = vmatprep.subr.bf16.mxu0 0
        %2373 = vmatpush1.bf16.xpose.msra.mxu0 0
        %2374 = vmatprep.subr.bf16.mxu0 0
        %2375 = vmatpush1.bf16.xpose.msra.mxu0 0
        %2376 = vmatprep.subr.bf16.mxu0 0
        %2377 = vmatpush1.bf16.xpose.msra.mxu0 %v2360
        %2378 = vmatprep.subr.bf16.mxu0 0
        %2379 = vmatpush2.bf16.xpose.msra.mxu0 0
        %2380 = vmatprep.subr.bf16.mxu0 0
        %2381 = vmatpush2.bf16.xpose.msra.mxu0 0
        %2382 = vmatprep.subr.bf16.mxu0 0
        %2383 = vmatpush2.bf16.xpose.msra.mxu0 0
        %2384 = vmatprep.subr.bf16.mxu0 0
        %2385 = vmatpush2.bf16.xpose.msra.mxu0 0
        %2386 = vmatprep.subr.bf16.mxu0 0
        %2387 = vmatpush2.bf16.xpose.msra.mxu0 0
        %2388 = vmatprep.subr.bf16.mxu0 0
        %2389 = vmatpush2.bf16.xpose.msra.mxu0 0
        %2390 = vmatprep.subr.bf16.mxu0 0
        %2391 = vmatpush2.bf16.xpose.msra.mxu0 0
        %2392 = vmatprep.subr.bf16.mxu0 0
        %2393 = vmatpush2.bf16.xpose.msra.mxu0 0
        %2394 = vmatprep.mubr.bf16.mxu0 0
        %2395 = vmatmul.mubr.bf16.gmra.mxu0 %v2357
        %v2396 = vpop.f32.mrf.mxu0
        %v2397 = vadd.f32 0.0, %v2396
        %v2398 = vpop.f32.mrf.mxu0
        %v2399 = vpop.f32.mrf.mxu0
        %v2400 = vadd.f32 0.0, %v2399
        %v2401 = vpop.f32.mrf.mxu0
        %2402 = vdwg.mxu0
        %v2403 = vsel %vm769, %v2244, -1e+30
        %v2404 = vsel %vm770, %v2247, -1e+30
        %v2405 = vsel %vm769, %v2295, -1e+30
        %v2406 = vsel %vm770, %v2298, -1e+30
        %v2407 = vsel %vm769, %v2346, -1e+30
        %v2408 = vsel %vm770, %v2349, -1e+30
        %v2409 = vsel %vm769, %v2397, -1e+30
        %v2410 = vsel %vm770, %v2400, -1e+30
        %v2411 = vsel %vm779, %v2403, -inf
        %2412 = vmax.xlane.f32.xlu0 %v2411
        %v2413 = vpop.xlane.xlu0 %2412
        %v2414 = vsel %vm779, %v2404, -inf
        %2415 = vmax.xlane.f32.xlu0 %v2414
        %v2416 = vpop.xlane.xlu0 %2415
        %v2417 = vsel %vm779, %v2405, -inf
        %2418 = vmax.xlane.f32.xlu0 %v2417
        %v2419 = vpop.xlane.xlu0 %2418
        %v2420 = vsel %vm779, %v2406, -inf
        %2421 = vmax.xlane.f32.xlu0 %v2420
        %v2422 = vpop.xlane.xlu0 %2421
        %v2423 = vsel %vm779, %v2407, -inf
        %2424 = vmax.xlane.f32.xlu0 %v2423
        %v2425 = vpop.xlane.xlu0 %2424
        %v2426 = vsel %vm779, %v2408, -inf
        %2427 = vmax.xlane.f32.xlu0 %v2426
        %v2428 = vpop.xlane.xlu0 %2427
        %v2429 = vsel %vm779, %v2409, -inf
        %2430 = vmax.xlane.f32.xlu0 %v2429
        %v2431 = vpop.xlane.xlu0 %2430
        %v2432 = vsel %vm779, %v2410, -inf
        %2433 = vmax.xlane.f32.xlu0 %v2432
        %v2434 = vpop.xlane.xlu0 %2433
        %v2435 = vsub.f32 %v2403, %v2413
        %v2436 = vsub.f32 %v2404, %v2416
        %v2437 = vsub.f32 %v2405, %v2419
        %v2438 = vsub.f32 %v2406, %v2422
        %v2439 = vsub.f32 %v2407, %v2425
        %v2440 = vsub.f32 %v2408, %v2428
        %v2441 = vsub.f32 %v2409, %v2431
        %v2442 = vsub.f32 %v2410, %v2434
        %v2443 = vmul.f32 %v2435, 1.442695
        %v2444 = vpow.pop %v2443
        %v2445 = vmul.f32 %v2436, 1.442695
        %v2446 = vpow.pop %v2445
        %v2447 = vmul.f32 %v2437, 1.442695
        %v2448 = vpow.pop %v2447
        %v2449 = vmul.f32 %v2438, 1.442695
        %v2450 = vpow.pop %v2449
        %v2451 = vmul.f32 %v2439, 1.442695
        %v2452 = vpow.pop %v2451
        %v2453 = vmul.f32 %v2440, 1.442695
        %v2454 = vpow.pop %v2453
        %v2455 = vmul.f32 %v2441, 1.442695
        %v2456 = vpow.pop %v2455
        %v2457 = vmul.f32 %v2442, 1.442695
        %v2458 = vpow.pop %v2457
        %v2459 = vsel %vm779, %v2444, 0.0
        %2460 = vadd.xlane.f32.xlu0 %v2459
        %v2461 = vpop.xlane.xlu0 %2460
        %v2462 = vsel %vm779, %v2446, 0.0
        %2463 = vadd.xlane.f32.xlu0 %v2462
        %v2464 = vpop.xlane.xlu0 %2463
        %v2465 = vsel %vm779, %v2448, 0.0
        %2466 = vadd.xlane.f32.xlu0 %v2465
        %v2467 = vpop.xlane.xlu0 %2466
        %v2468 = vsel %vm779, %v2450, 0.0
        %2469 = vadd.xlane.f32.xlu0 %v2468
        %v2470 = vpop.xlane.xlu0 %2469
        %v2471 = vsel %vm779, %v2452, 0.0
        %2472 = vadd.xlane.f32.xlu0 %v2471
        %v2473 = vpop.xlane.xlu0 %2472
        %v2474 = vsel %vm779, %v2454, 0.0
        %2475 = vadd.xlane.f32.xlu0 %v2474
        %v2476 = vpop.xlane.xlu0 %2475
        %v2477 = vsel %vm779, %v2456, 0.0
        %2478 = vadd.xlane.f32.xlu0 %v2477
        %v2479 = vpop.xlane.xlu0 %2478
        %v2480 = vsel %vm779, %v2458, 0.0
        %2481 = vadd.xlane.f32.xlu0 %v2480
        %v2482 = vpop.xlane.xlu0 %2481
        %v2483 = vrcp.pop %v2461
        %v2484 = vrcp.pop %v2464
        %v2485 = vrcp.pop %v2467
        %v2486 = vrcp.pop %v2470
        %v2487 = vrcp.pop %v2473
        %v2488 = vrcp.pop %v2476
        %v2489 = vrcp.pop %v2479
        %v2490 = vrcp.pop %v2482
        %v2491 = vmul.f32 %v2444, %v2483
        %v2492 = vmul.f32 %v2446, %v2484
        %v2493 = vmul.f32 %v2448, %v2485
        %v2494 = vmul.f32 %v2450, %v2486
        %v2495 = vmul.f32 %v2452, %v2487
        %v2496 = vmul.f32 %v2454, %v2488
        %v2497 = vmul.f32 %v2456, %v2489
        %v2498 = vmul.f32 %v2458, %v2490
        %v2499 = vpack.c.bf16 %v2492, %v2491
        %v2500 = vpack.c.bf16 %v2494, %v2493
        %v2501 = vpack.c.bf16 %v2496, %v2495
        %v2502 = vpack.c.bf16 %v2498, %v2497
        %2503 = vrot.lane.b32.xlu0 %v574, 32
        %v2504 = vpop.permute.xlu0 %2503
        %v2507 = vsel %vm779, %v2499, 0
        %2509 = vmatprep.subr.bf16.mxu0 0
        %2510 = vmatpush1.bf16.msra.mxu0 0
        %2511 = vmatprep.subr.bf16.mxu0 0
        %2512 = vmatpush1.bf16.msra.mxu0 0
        %2513 = vmatprep.subr.bf16.mxu0 0
        %2514 = vmatpush1.bf16.msra.mxu0 0
        %2515 = vmatprep.subr.bf16.mxu0 0
        %2516 = vmatpush1.bf16.msra.mxu0 0
        %2517 = vmatprep.subr.bf16.mxu0 0
        %2518 = vmatpush1.bf16.msra.mxu0 0
        %2519 = vmatprep.subr.bf16.mxu0 0
        %2520 = vmatpush1.bf16.msra.mxu0 0
        %2521 = vmatprep.subr.bf16.mxu0 0
        %2522 = vmatpush1.bf16.msra.mxu0 0
        %2523 = vmatprep.subr.bf16.mxu0 0
        %2524 = vmatpush1.bf16.msra.mxu0 %v2504
        %2525 = vmatprep.subr.bf16.mxu0 0
        %2526 = vmatpush2.bf16.msra.mxu0 0
        %2527 = vmatprep.subr.bf16.mxu0 0
        %2528 = vmatpush2.bf16.msra.mxu0 0
        %2529 = vmatprep.subr.bf16.mxu0 0
        %2530 = vmatpush2.bf16.msra.mxu0 0
        %2531 = vmatprep.subr.bf16.mxu0 0
        %2532 = vmatpush2.bf16.msra.mxu0 0
        %2533 = vmatprep.subr.bf16.mxu0 0
        %2534 = vmatpush2.bf16.msra.mxu0 0
        %2535 = vmatprep.subr.bf16.mxu0 0
        %2536 = vmatpush2.bf16.msra.mxu0 0
        %2537 = vmatprep.subr.bf16.mxu0 0
        %2538 = vmatpush2.bf16.msra.mxu0 0
        %2539 = vmatprep.subr.bf16.mxu0 0
        %2540 = vmatpush2.bf16.msra.mxu0 0
        %2541 = vmatprep.mubr.bf16.mxu0 0
        %2542 = vmatmul.mubr.bf16.gmra.mxu0 %v2507
        %v2543 = vpop.f32.mrf.mxu0
        %v2544 = vadd.f32 0.0, %v2543
        %v2545 = vpop.f32.mrf.mxu0
        %v2546 = vpop.f32.mrf.mxu0
        %v2547 = vadd.f32 0.0, %v2546
        %v2548 = vpop.f32.mrf.mxu0
        %2549 = vdwg.mxu0
        %2550 = vrot.lane.b32.xlu0 %v575, 32
        %v2551 = vpop.permute.xlu0 %2550
        %v2554 = vsel %vm779, %v2500, 0
        %2556 = vmatprep.subr.bf16.mxu0 0
        %2557 = vmatpush1.bf16.msra.mxu0 0
        %2558 = vmatprep.subr.bf16.mxu0 0
        %2559 = vmatpush1.bf16.msra.mxu0 0
        %2560 = vmatprep.subr.bf16.mxu0 0
        %2561 = vmatpush1.bf16.msra.mxu0 0
        %2562 = vmatprep.subr.bf16.mxu0 0
        %2563 = vmatpush1.bf16.msra.mxu0 0
        %2564 = vmatprep.subr.bf16.mxu0 0
        %2565 = vmatpush1.bf16.msra.mxu0 0
        %2566 = vmatprep.subr.bf16.mxu0 0
        %2567 = vmatpush1.bf16.msra.mxu0 0
        %2568 = vmatprep.subr.bf16.mxu0 0
        %2569 = vmatpush1.bf16.msra.mxu0 0
        %2570 = vmatprep.subr.bf16.mxu0 0
        %2571 = vmatpush1.bf16.msra.mxu0 %v2551
        %2572 = vmatprep.subr.bf16.mxu0 0
        %2573 = vmatpush2.bf16.msra.mxu0 0
        %2574 = vmatprep.subr.bf16.mxu0 0
        %2575 = vmatpush2.bf16.msra.mxu0 0
        %2576 = vmatprep.subr.bf16.mxu0 0
        %2577 = vmatpush2.bf16.msra.mxu0 0
        %2578 = vmatprep.subr.bf16.mxu0 0
        %2579 = vmatpush2.bf16.msra.mxu0 0
        %2580 = vmatprep.subr.bf16.mxu0 0
        %2581 = vmatpush2.bf16.msra.mxu0 0
        %2582 = vmatprep.subr.bf16.mxu0 0
        %2583 = vmatpush2.bf16.msra.mxu0 0
        %2584 = vmatprep.subr.bf16.mxu0 0
        %2585 = vmatpush2.bf16.msra.mxu0 0
        %2586 = vmatprep.subr.bf16.mxu0 0
        %2587 = vmatpush2.bf16.msra.mxu0 0
        %2588 = vmatprep.mubr.bf16.mxu0 0
        %2589 = vmatmul.mubr.bf16.gmra.mxu0 %v2554
        %v2590 = vpop.f32.mrf.mxu0
        %v2591 = vadd.f32 0.0, %v2590
        %v2592 = vpop.f32.mrf.mxu0
        %v2593 = vpop.f32.mrf.mxu0
        %v2594 = vadd.f32 0.0, %v2593
        %v2595 = vpop.f32.mrf.mxu0
        %2596 = vdwg.mxu0
        %2597 = vrot.lane.b32.xlu0 %v576, 32
        %v2598 = vpop.permute.xlu0 %2597
        %v2601 = vsel %vm779, %v2501, 0
        %2603 = vmatprep.subr.bf16.mxu0 0
        %2604 = vmatpush1.bf16.msra.mxu0 0
        %2605 = vmatprep.subr.bf16.mxu0 0
        %2606 = vmatpush1.bf16.msra.mxu0 0
        %2607 = vmatprep.subr.bf16.mxu0 0
        %2608 = vmatpush1.bf16.msra.mxu0 0
        %2609 = vmatprep.subr.bf16.mxu0 0
        %2610 = vmatpush1.bf16.msra.mxu0 0
        %2611 = vmatprep.subr.bf16.mxu0 0
        %2612 = vmatpush1.bf16.msra.mxu0 0
        %2613 = vmatprep.subr.bf16.mxu0 0
        %2614 = vmatpush1.bf16.msra.mxu0 0
        %2615 = vmatprep.subr.bf16.mxu0 0
        %2616 = vmatpush1.bf16.msra.mxu0 0
        %2617 = vmatprep.subr.bf16.mxu0 0
        %2618 = vmatpush1.bf16.msra.mxu0 %v2598
        %2619 = vmatprep.subr.bf16.mxu0 0
        %2620 = vmatpush2.bf16.msra.mxu0 0
        %2621 = vmatprep.subr.bf16.mxu0 0
        %2622 = vmatpush2.bf16.msra.mxu0 0
        %2623 = vmatprep.subr.bf16.mxu0 0
        %2624 = vmatpush2.bf16.msra.mxu0 0
        %2625 = vmatprep.subr.bf16.mxu0 0
        %2626 = vmatpush2.bf16.msra.mxu0 0
        %2627 = vmatprep.subr.bf16.mxu0 0
        %2628 = vmatpush2.bf16.msra.mxu0 0
        %2629 = vmatprep.subr.bf16.mxu0 0
        %2630 = vmatpush2.bf16.msra.mxu0 0
        %2631 = vmatprep.subr.bf16.mxu0 0
        %2632 = vmatpush2.bf16.msra.mxu0 0
        %2633 = vmatprep.subr.bf16.mxu0 0
        %2634 = vmatpush2.bf16.msra.mxu0 0
        %2635 = vmatprep.mubr.bf16.mxu0 0
        %2636 = vmatmul.mubr.bf16.gmra.mxu0 %v2601
        %v2637 = vpop.f32.mrf.mxu0
        %v2638 = vadd.f32 0.0, %v2637
        %v2639 = vpop.f32.mrf.mxu0
        %v2640 = vpop.f32.mrf.mxu0
        %v2641 = vadd.f32 0.0, %v2640
        %v2642 = vpop.f32.mrf.mxu0
        %2643 = vdwg.mxu0
        %2644 = vrot.lane.b32.xlu0 %v577, 32
        %v2645 = vpop.permute.xlu0 %2644
        %v2648 = vsel %vm779, %v2502, 0
        %2650 = vmatprep.subr.bf16.mxu0 0
        %2651 = vmatpush1.bf16.msra.mxu0 0
        %2652 = vmatprep.subr.bf16.mxu0 0
        %2653 = vmatpush1.bf16.msra.mxu0 0
        %2654 = vmatprep.subr.bf16.mxu0 0
        %2655 = vmatpush1.bf16.msra.mxu0 0
        %2656 = vmatprep.subr.bf16.mxu0 0
        %2657 = vmatpush1.bf16.msra.mxu0 0
        %2658 = vmatprep.subr.bf16.mxu0 0
        %2659 = vmatpush1.bf16.msra.mxu0 0
        %2660 = vmatprep.subr.bf16.mxu0 0
        %2661 = vmatpush1.bf16.msra.mxu0 0
        %2662 = vmatprep.subr.bf16.mxu0 0
        %2663 = vmatpush1.bf16.msra.mxu0 0
        %2664 = vmatprep.subr.bf16.mxu0 0
        %2665 = vmatpush1.bf16.msra.mxu0 %v2645
        %2666 = vmatprep.subr.bf16.mxu0 0
        %2667 = vmatpush2.bf16.msra.mxu0 0
        %2668 = vmatprep.subr.bf16.mxu0 0
        %2669 = vmatpush2.bf16.msra.mxu0 0
        %2670 = vmatprep.subr.bf16.mxu0 0
        %2671 = vmatpush2.bf16.msra.mxu0 0
        %2672 = vmatprep.subr.bf16.mxu0 0
        %2673 = vmatpush2.bf16.msra.mxu0 0
        %2674 = vmatprep.subr.bf16.mxu0 0
        %2675 = vmatpush2.bf16.msra.mxu0 0
        %2676 = vmatprep.subr.bf16.mxu0 0
        %2677 = vmatpush2.bf16.msra.mxu0 0
        %2678 = vmatprep.subr.bf16.mxu0 0
        %2679 = vmatpush2.bf16.msra.mxu0 0
        %2680 = vmatprep.subr.bf16.mxu0 0
        %2681 = vmatpush2.bf16.msra.mxu0 0
        %2682 = vmatprep.mubr.bf16.mxu0 0
        %2683 = vmatmul.mubr.bf16.gmra.mxu0 %v2648
        %v2684 = vpop.f32.mrf.mxu0
        %v2685 = vadd.f32 0.0, %v2684
        %v2686 = vpop.f32.mrf.mxu0
        %v2687 = vpop.f32.mrf.mxu0
        %v2688 = vadd.f32 0.0, %v2687
        %v2689 = vpop.f32.mrf.mxu0
        %2690 = vdwg.mxu0
        %v2691 = vpack.c.bf16 %v2547, %v2544
        %v2692 = vpack.c.bf16 %v2594, %v2591
        %v2693 = vpack.c.bf16 %v2641, %v2638
        %v2694 = vpack.c.bf16 %v2688, %v2685
        %v2699 = vunpack.c.l.b16 %v2691
        %v2700 = vunpack.c.h.b16 %v2691
        %v2701 = vunpack.c.l.b16 %v2692
        %v2702 = vunpack.c.h.b16 %v2692
        %v2703 = vunpack.c.l.b16 %v2693
        %v2704 = vunpack.c.h.b16 %v2693
        %v2705 = vunpack.c.l.b16 %v2694
        %v2706 = vunpack.c.h.b16 %v2694
        %v2707 = vpack.c.b16 %v2699, %v2699
        %v2708 = vpack.c.b16 %v2700, %v2700
        %v2709 = vpack.c.b16 %v2701, %v2701
        %v2710 = vpack.c.b16 %v2702, %v2702
        %v2711 = vpack.c.b16 %v2703, %v2703
        %v2712 = vpack.c.b16 %v2704, %v2704
        %v2713 = vpack.c.b16 %v2705, %v2705
        %v2714 = vpack.c.b16 %v2706, %v2706
        %2715 = vrot.lane.b32.xlu0 %v2707, 96
        %v2716 = vpop.permute.xlu0 %2715
        %2717 = vrot.lane.b32.xlu0 %v2708, 96
        %v2718 = vpop.permute.xlu0 %2717
        %2719 = vrot.lane.b32.xlu0 %v2709, 96
        %v2720 = vpop.permute.xlu0 %2719
        %2721 = vrot.lane.b32.xlu0 %v2710, 96
        %v2722 = vpop.permute.xlu0 %2721
        %2723 = vrot.lane.b32.xlu0 %v2711, 96
        %v2724 = vpop.permute.xlu0 %2723
        %2725 = vrot.lane.b32.xlu0 %v2712, 96
        %v2726 = vpop.permute.xlu0 %2725
        %2727 = vrot.lane.b32.xlu0 %v2713, 96
        %v2728 = vpop.permute.xlu0 %2727
        %2729 = vrot.lane.b32.xlu0 %v2714, 96
        %v2730 = vpop.permute.xlu0 %2729
        %vm2739 = vcmask 1044224
        %2740 = vst.msk [vmem:[#allocation2] sm:$0xf] %vm2739, %v2716
        %2741 = vst.msk [vmem:[#allocation2 + $0x4] sm:$0xf] %vm2739, %v2718
        %2742 = vst.msk [vmem:[#allocation2 + $0x8] sm:$0xf] %vm2739, %v2720
        %2743 = vst.msk [vmem:[#allocation2 + $0xc] sm:$0xf] %vm2739, %v2722
        %2744 = vst.msk [vmem:[#allocation2 + $0x10] sm:$0xf] %vm2739, %v2724
        %2745 = vst.msk [vmem:[#allocation2 + $0x14] sm:$0xf] %vm2739, %v2726
        %2746 = vst.msk [vmem:[#allocation2 + $0x18] sm:$0xf] %vm2739, %v2728
        %2747 = vst.msk [vmem:[#allocation2 + $0x1c] sm:$0xf] %vm2739, %v2730
        %v2748 = vld [vmem:[#allocation2] sm:$0xf]
        %v2749 = vld [vmem:[#allocation2 + $0x4] sm:$0xf]
        %v2750 = vld [vmem:[#allocation2 + $0x8] sm:$0xf]
        %v2751 = vld [vmem:[#allocation2 + $0xc] sm:$0xf]
        %v2752 = vld [vmem:[#allocation2 + $0x10] sm:$0xf]
        %v2753 = vld [vmem:[#allocation2 + $0x14] sm:$0xf]
        %v2754 = vld [vmem:[#allocation2 + $0x18] sm:$0xf]
        %v2755 = vld [vmem:[#allocation2 + $0x1c] sm:$0xf]
        %v2756 = vld [vmem:[#allocation8] sm:$0xf]
        %v2757 = vld [vmem:[#allocation8 + $0x4] sm:$0xf]
        %v2758 = vld [vmem:[#allocation8 + $0x8] sm:$0xf]
        %v2759 = vld [vmem:[#allocation8 + $0xc] sm:$0xf]
        %v2760 = vld [vmem:[#allocation8 + $0x10] sm:$0xf]
        %v2761 = vld [vmem:[#allocation8 + $0x14] sm:$0xf]
        %v2762 = vld [vmem:[#allocation8 + $0x18] sm:$0xf]
        %v2763 = vld [vmem:[#allocation8 + $0x1c] sm:$0xf]
        %v2764 = vld [vmem:[#allocation8 + $0x20] sm:$0xf]
        %v2765 = vld [vmem:[#allocation8 + $0x24] sm:$0xf]
        %v2766 = vld [vmem:[#allocation8 + $0x28] sm:$0xf]
        %v2767 = vld [vmem:[#allocation8 + $0x2c] sm:$0xf]
        %v2768 = vld [vmem:[#allocation8 + $0x30] sm:$0xf]
        %v2769 = vld [vmem:[#allocation8 + $0x34] sm:$0xf]
        %v2770 = vld [vmem:[#allocation8 + $0x38] sm:$0xf]
        %v2771 = vld [vmem:[#allocation8 + $0x3c] sm:$0xf]
        %v2772 = vld [vmem:[%s3] sm:$0x1]
        %v2774 = vlaneseq
        %v2775 = vshrl.u32 %v2774, 7
        %v2776 = vsub.s32 0, %v2775
        %v2777 = vrot.slane %v2772, %v2776
        %v2787 = vunpack.c.l.b16 %v2748
        %v2788 = vunpack.c.l.b16 %v2749
        %v2789 = vunpack.c.l.b16 %v2750
        %v2790 = vunpack.c.l.b16 %v2751
        %v2791 = vunpack.c.l.b16 %v2752
        %v2792 = vunpack.c.l.b16 %v2753
        %v2793 = vunpack.c.l.b16 %v2754
        %v2794 = vunpack.c.l.b16 %v2755
        %v2795 = vpack.c.b16 %v2788, %v2787
        %v2796 = vpack.c.b16 %v2790, %v2789
        %v2797 = vpack.c.b16 %v2792, %v2791
        %v2798 = vpack.c.b16 %v2794, %v2793
        %v2819 = vunpack.c.l.b16 %v2756
        %v2820 = vunpack.c.l.b16 %v2757
        %v2821 = vunpack.c.l.b16 %v2758
        %v2822 = vunpack.c.l.b16 %v2759
        %v2823 = vunpack.c.l.b16 %v2760
        %v2824 = vunpack.c.l.b16 %v2761
        %v2825 = vunpack.c.l.b16 %v2762
        %v2826 = vunpack.c.l.b16 %v2763
        %v2827 = vunpack.c.l.b16 %v2764
        %v2828 = vunpack.c.l.b16 %v2765
        %v2829 = vunpack.c.l.b16 %v2766
        %v2830 = vunpack.c.l.b16 %v2767
        %v2831 = vunpack.c.l.b16 %v2768
        %v2832 = vunpack.c.l.b16 %v2769
        %v2833 = vunpack.c.l.b16 %v2770
        %v2834 = vunpack.c.l.b16 %v2771
        %v2835 = vpack.c.b16 %v2820, %v2819
        %v2836 = vpack.c.b16 %v2822, %v2821
        %v2837 = vpack.c.b16 %v2824, %v2823
        %v2838 = vpack.c.b16 %v2826, %v2825
        %v2839 = vpack.c.b16 %v2828, %v2827
        %v2840 = vpack.c.b16 %v2830, %v2829
        %v2841 = vpack.c.b16 %v2832, %v2831
        %v2842 = vpack.c.b16 %v2834, %v2833
        %2851 = vmatprep.subr.bf16.mxu0 0
        %2852 = vmatpush1.bf16.msra.mxu0 %v2842
        %2853 = vmatprep.subr.bf16.mxu0 0
        %2854 = vmatpush1.bf16.msra.mxu0 %v2841
        %2855 = vmatprep.subr.bf16.mxu0 0
        %2856 = vmatpush1.bf16.msra.mxu0 %v2840
        %2857 = vmatprep.subr.bf16.mxu0 0
        %2858 = vmatpush1.bf16.msra.mxu0 %v2839
        %2859 = vmatprep.subr.bf16.mxu0 0
        %2860 = vmatpush1.bf16.msra.mxu0 %v2838
        %2861 = vmatprep.subr.bf16.mxu0 0
        %2862 = vmatpush1.bf16.msra.mxu0 %v2837
        %2863 = vmatprep.subr.bf16.mxu0 0
        %2864 = vmatpush1.bf16.msra.mxu0 %v2836
        %2865 = vmatprep.subr.bf16.mxu0 0
        %2866 = vmatpush1.bf16.msra.mxu0 %v2835
        %2867 = vmatprep.subr.bf16.mxu0 0
        %2868 = vmatpush2.bf16.msra.mxu0 0
        %2869 = vmatprep.subr.bf16.mxu0 0
        %2870 = vmatpush2.bf16.msra.mxu0 0
        %2871 = vmatprep.subr.bf16.mxu0 0
        %2872 = vmatpush2.bf16.msra.mxu0 0
        %2873 = vmatprep.subr.bf16.mxu0 0
        %2874 = vmatpush2.bf16.msra.mxu0 0
        %2875 = vmatprep.subr.bf16.mxu0 0
        %2876 = vmatpush2.bf16.msra.mxu0 0
        %2877 = vmatprep.subr.bf16.mxu0 0
        %2878 = vmatpush2.bf16.msra.mxu0 0
        %2879 = vmatprep.subr.bf16.mxu0 0
        %2880 = vmatpush2.bf16.msra.mxu0 0
        %2881 = vmatprep.subr.bf16.mxu0 0
        %2882 = vmatpush2.bf16.msra.mxu0 0
        %2883 = vmatprep.mubr.bf16.mxu0 0
        %2884 = vmatmul.mubr.bf16.gmra.mxu0 %v2795
        %v2885 = vpop.f32.mrf.mxu0
        %v2886 = vadd.f32 %v2777, %v2885
        %v2887 = vpop.f32.mrf.mxu0
        %v2888 = vpop.f32.mrf.mxu0
        %v2889 = vadd.f32 %v2777, %v2888
        %v2890 = vpop.f32.mrf.mxu0
        %2891 = vmatprep.mubr.bf16.mxu0 0
        %2892 = vmatmul.mubr.bf16.gmra.mxu0 %v2796
        %v2893 = vpop.f32.mrf.mxu0
        %v2894 = vadd.f32 %v2777, %v2893
        %v2895 = vpop.f32.mrf.mxu0
        %v2896 = vpop.f32.mrf.mxu0
        %v2897 = vadd.f32 %v2777, %v2896
        %v2898 = vpop.f32.mrf.mxu0
        %2899 = vmatprep.mubr.bf16.mxu0 0
        %2900 = vmatmul.mubr.bf16.gmra.mxu0 %v2797
        %v2901 = vpop.f32.mrf.mxu0
        %v2902 = vadd.f32 %v2777, %v2901
        %v2903 = vpop.f32.mrf.mxu0
        %v2904 = vpop.f32.mrf.mxu0
        %v2905 = vadd.f32 %v2777, %v2904
        %v2906 = vpop.f32.mrf.mxu0
        %2907 = vmatprep.mubr.bf16.mxu0 0
        %2908 = vmatmul.mubr.bf16.gmra.mxu0 %v2798
        %v2909 = vpop.f32.mrf.mxu0
        %v2910 = vadd.f32 %v2777, %v2909
        %v2911 = vpop.f32.mrf.mxu0
        %v2912 = vpop.f32.mrf.mxu0
        %v2913 = vadd.f32 %v2777, %v2912
        %v2914 = vpop.f32.mrf.mxu0
        %2915 = vdwg.mxu0
        %v2916 = vpack.c.bf16 %v2889, %v2886
        %v2917 = vpack.c.bf16 %v2897, %v2894
        %v2918 = vpack.c.bf16 %v2905, %v2902
        %v2919 = vpack.c.bf16 %v2913, %v2910
        %v2924 = vunpack.c.l.b16 %v2916
        %v2925 = vunpack.c.h.b16 %v2916
        %v2926 = vunpack.c.l.b16 %v2917
        %v2927 = vunpack.c.h.b16 %v2917
        %v2928 = vunpack.c.l.b16 %v2918
        %v2929 = vunpack.c.h.b16 %v2918
        %v2930 = vunpack.c.l.b16 %v2919
        %v2931 = vunpack.c.h.b16 %v2919
        %v2932 = vpack.c.b16 %v2924, %v2924
        %v2933 = vpack.c.b16 %v2925, %v2925
        %v2934 = vpack.c.b16 %v2926, %v2926
        %v2935 = vpack.c.b16 %v2927, %v2927
        %v2936 = vpack.c.b16 %v2928, %v2928
        %v2937 = vpack.c.b16 %v2929, %v2929
        %v2938 = vpack.c.b16 %v2930, %v2930
        %v2939 = vpack.c.b16 %v2931, %v2931
        %2948 = vst [vmem:[%s245] sm:$0xf] %v2932
        %2949 = vst [vmem:[%s245 + $0x4] sm:$0xf] %v2933
        %2950 = vst [vmem:[%s245 + $0x8] sm:$0xf] %v2934
        %2951 = vst [vmem:[%s245 + $0xc] sm:$0xf] %v2935
        %2952 = vst [vmem:[%s245 + $0x10] sm:$0xf] %v2936
        %2953 = vst [vmem:[%s245 + $0x14] sm:$0xf] %v2937
        %2954 = vst [vmem:[%s245 + $0x18] sm:$0xf] %v2938
        %2955 = vst [vmem:[%s245 + $0x1c] sm:$0xf] %v2939
        %s2956 = sand.u32 %s119, 1
        %s2957 = scalar_lea.sflag [#allocation5], %s2956
        %s2958 = sand.u32 %s119, 1
        %s2959 = smul.addr %s2958, 32
        %s2960 = scalar_lea.vmem [#allocation9], %s2959
        // Predicated region
        $region49: #{tpu_custom_call.1} parent=35 // pred_check
          %p2961 = pneg %p129
        $region50: #{tpu_custom_call.1} parent=35 // pred_check_branch
          %2963 = sbr.rel (%p2961) target = $region52
        $region51: #{tpu_custom_call.1} parent=35 // pred_region
          %s2964 = smul.u32 4, %s22
          %s2966 = ssub.s32 512, 512
          %2967 = vsyncadd %s2957, %s2966
          %s2968 = smul.addr %s2964, 2
          %s2969 = smul.addr %s2968, 64
          %s2970 = scalar_lea.hbm %s4, %s2969
          %s2971 = sshll.u32 %s2960, 4
          %s2972 = int_to_ptr.vmem [resolvable:$true] %s2971
          %2977 = dma.vmem_to_hbm [thread:$0]  %s2972, 512, %s2970, %s2957, 64, 64, 4
        $region52: #{tpu_custom_call.1} parent=35 // pred_fallthru
          _
      $region36: #{tpu_custom_call.1} parent=5 // pred_fallthru
        _
      %p2978 = scmp.le.s32.totalorder 2, %s17
      // Predicated region
      $region53: #{tpu_custom_call.1} parent=5 // pred_check
        %p2979 = pneg %p2978
      $region54: #{tpu_custom_call.1} parent=5 // pred_check_branch
        %2981 = sbr.rel (%p2979) target = $region56
      $region55: #{tpu_custom_call.1} parent=5 // pred_region
        %s2982 = ssub.s32 %s17, 2
        // Predicated region
        $region57: #{tpu_custom_call.1} parent=55 // pred_check
          %p2983 = pneg %p135
        $region58: #{tpu_custom_call.1} parent=55 // pred_check_branch
          %2985 = sbr.rel (%p2983) target = $region60
        $region59: #{tpu_custom_call.1} parent=55 // pred_region
          %s2986 = sand.u32 %s120, 1
          %s2987 = scalar_lea.sflag [#allocation5], %s2986
          %s2988 = sand.u32 %s120, 1
          %s2989 = smul.addr %s2988, 32
          %s2990 = scalar_lea.vmem [#allocation9], %s2989
          %2991 = dma.done %s2987, 512
        $region60: #{tpu_custom_call.1} parent=55 // pred_fallthru
          _
      $region56: #{tpu_custom_call.1} parent=5 // pred_fallthru
        _
    $region6: #{tpu_custom_call.1} parent=1 // loop_footer
      %s21 = sadd.s32 1, %s17
    $region7: #{tpu_custom_call.1} parent=1 // loop_footer_branch
      %16 = sbr.rel target = $region3
    $region8: #{tpu_custom_call.1} parent=1 // loop_exit
      _
    %2992 = vsyncpa [#allocation4], 1
    %s2993 = scalar_lea.sflag [#allocation4], 1
    %2994 = vsyncpa %s2993, 1
    %2995 = vsyncpa [#allocation7], 1
    %2996 = vsyncpa [#allocation5], 1
    %s2997 = scalar_lea.sflag [#allocation5], 1
    %2998 = vsyncpa %s2997, 1

</llo_original>
